<compile_context>
chip_gen: v7x
topology: tpu7x:2x2x1
jax: 0.10.0
libtpu: 0.0.40
codegen_flags: <defaults>
</compile_context>

<pallas_src>
import numpy as np
import jax
import jax.numpy as jnp
from jax import lax
from jax.experimental import pallas as pl
from jax.experimental.pallas import tpu as pltpu

# ---------------- configuration (small, consistent with MaskTransformer) ------
N_CLS = 5
PATCH = 4
D_ENC = 16
N_LAYERS = 2
N_HEADS = 2
D_MODEL = 32
D_FF = 64
H_IMG, W_IMG = 16, 16
GS_H, GS_W = H_IMG // PATCH, W_IMG // PATCH       # 4 x 4 patch grid
N_PATCH = GS_H * GS_W                             # 16 patch tokens
N_TOT = N_PATCH + N_CLS                           # 21 real tokens
N_PAD = 24                                        # tokens padded per batch (sublane multiple)
HEAD_DIM = D_MODEL // N_HEADS
ATTN_SCALE = HEAD_DIM ** -0.5
MODEL_SCALE = D_MODEL ** -0.5
LN_EPS = 1e-5
BATCH = 2
NEG_INF = -1e30
TOK = BATCH * N_PAD                               # 48 token rows (batch folded on sublanes)
S_ATT = N_HEADS * TOK                             # 96 rows once heads are stacked

# ---------------- packed parameter slab layout (rows x 256 lanes) -------------
SLAB_LANES = H_IMG * W_IMG                        # 256 (>= 3*D_MODEL, multiple of 128)
ROW_KRON = 0                                      # (N_PATCH, H*W)
ROW_DECW = ROW_KRON + N_PATCH                     # (D_ENC, D)
ROW_PPPC = ROW_DECW + D_ENC                       # (D, 2D): proj_patch | proj_classes
ROW_BASE = ROW_PPPC + D_MODEL                     # (B*N_PAD, D): proj_dec_b / cls_emb / 0
ROW_LN = ROW_BASE + TOK                           # 4 rows per layer: ln1_w, ln1_b, ln2_w, ln2_b
ROW_BIAS = ROW_LN + 4 * N_LAYERS                  # 4 rows per layer: qkv_b, fc1_b, proj_b, fc2_b
ROW_DNW = ROW_BIAS + 4 * N_LAYERS                 # decoder_norm weight
ROW_DNB = ROW_DNW + 1                             # decoder_norm bias
ROW_MN = ROW_DNB + 1                              # (N_CLS, 2): mask_norm w | b  (column form)
SLAB_ROWS = ((ROW_MN + N_CLS + 7) // 8) * 8       # 136


# ---------------- shared numerics ----------------------------------------------
def _ln_rows(x, w, b):
    """LayerNorm over the last axis (PyTorch semantics, eps=1e-5)."""
    mu = jnp.mean(x, axis=-1, keepdims=True)
    var = jnp.mean((x - mu) ** 2, axis=-1, keepdims=True)
    return (x - mu) * lax.rsqrt(var + LN_EPS) * w + b


def _gelu_tanh(x):
    # tanh-approx GELU (EUP tanh); |err| vs exact erf GELU < ~1e-3, well under tolerance.
    c = 0.7978845608028654  # sqrt(2/pi)
    return 0.5 * x * (1.0 + jnp.tanh(c * (x + 0.044715 * x * x * x)))


# ---------------- the single fused kernel --------------------------------------
def mask_transformer_kernel(xp_ref, qkv_w_ref, proj_w_ref, fc1_w_ref, fc2_w_ref,
                            slab_ref, out_ref):
    f32 = jnp.float32
    D, F, HD = D_MODEL, D_FF, HEAD_DIM
    HW = H_IMG * W_IMG

    # ----- token assembly: proj_dec on zero-padded patch rows + additive base ------
    dec_w = slab_ref[ROW_DECW:ROW_DECW + D_ENC, 0:D]                 # (16, 32)
    base = slab_ref[ROW_BASE:ROW_BASE + TOK, 0:D]                    # (48, 32)
    x = jnp.dot(xp_ref[...], dec_w, preferred_element_type=f32) + base   # (48, 32)

    # ----- block-diagonal additive attention bias over (head, batch) groups --------
    # Built once in-kernel (no DMA of a 36 KB constant).  Rows/cols are ordered
    # head-major then batch-major: group = index // N_PAD identifies (head, batch).
    row = lax.broadcasted_iota(jnp.int32, (S_ATT, S_ATT), 0)
    col = lax.broadcasted_iota(jnp.int32, (S_ATT, S_ATT), 1)
    ngrp = N_HEADS * BATCH
    rg = jnp.zeros((S_ATT, S_ATT), jnp.int32)
    cg = jnp.zeros((S_ATT, S_ATT), jnp.int32)
    for g in range(1, ngrp):
        rg = rg + (row >= g * N_PAD).astype(jnp.int32)
        cg = cg + (col >= g * N_PAD).astype(jnp.int32)
    valid_key = (col - cg * N_PAD) < N_TOT
    neg = jnp.where((rg == cg) & valid_key, 0.0, NEG_INF)            # (96, 96) f32

    # ----- transformer layers (statically unrolled) --------------------------------
    for l in range(N_LAYERS):
        lnp = slab_ref[ROW_LN + 4 * l:ROW_LN + 4 * l + 4, 0:D]       # (4, D)
        bsl = slab_ref[ROW_BIAS + 4 * l:ROW_BIAS + 4 * l + 4, 0:3 * D]  # (4, 3D)
        qkv_b = bsl[0:1, 0:3 * D]
        fc1_b = bsl[1:2, 0:F]
        proj_b = bsl[2:3, 0:D]
        fc2_b = bsl[3:4, 0:D]

        # --- multi-head self attention, heads fused on the sublane axis ---
        h = _ln_rows(x, lnp[0:1, :], lnp[1:2, :])
        qkv = jnp.dot(h, qkv_w_ref[l], preferred_element_type=f32) + qkv_b   # (48, 96)
        q = jnp.concatenate([qkv[:, 0 * D + hi * HD:0 * D + (hi + 1) * HD]
                             for hi in range(N_HEADS)], axis=0)              # (96, 16)
        k = jnp.concatenate([qkv[:, 1 * D + hi * HD:1 * D + (hi + 1) * HD]
                             for hi in range(N_HEADS)], axis=0)              # (96, 16)
        v = jnp.concatenate([qkv[:, 2 * D + hi * HD:2 * D + (hi + 1) * HD]
                             for hi in range(N_HEADS)], axis=0)              # (96, 16)
        s = lax.dot_general(q, k, (((1,), (1,)), ((), ())),
                            preferred_element_type=f32) * ATTN_SCALE + neg   # (96, 96)
        m = jnp.max(s, axis=-1, keepdims=True)
        e = jnp.exp(s - m)
        att = e * pl.reciprocal(jnp.sum(e, axis=-1, keepdims=True), approx=True)
        o = jnp.dot(att, v, preferred_element_type=f32)                      # (96, 16)
        # unstack heads back to lanes -> (48, 32), single fused output projection
        o_cat = jnp.concatenate([o[hi * TOK:(hi + 1) * TOK, :]
                                 for hi in range(N_HEADS)], axis=1)          # (48, 32)
        x = x + jnp.dot(o_cat, proj_w_ref[l], preferred_element_type=f32) + proj_b

        # --- MLP ---
        h = _ln_rows(x, lnp[2:3, :], lnp[3:4, :])
        h = jnp.dot(h, fc1_w_ref[l], preferred_element_type=f32) + fc1_b
        h = _gelu_tanh(h)
        x = x + jnp.dot(h, fc2_w_ref[l], preferred_element_type=f32) + fc2_b

    # ----- mask head -----------------------------------------------------------------
    dn = slab_ref[ROW_DNW:ROW_DNW + 2, 0:D]
    xn = _ln_rows(x, dn[0:1, :], dn[1:2, :])                         # (48, 32)

    # fused patch|class projection: one (48,32)@(32,64) dot
    pp_pc = slab_ref[ROW_PPPC:ROW_PPPC + D, 0:2 * D]                 # (32, 64)
    feat = jnp.dot(xn, pp_pc, preferred_element_type=f32)            # (48, 64)

    mn = slab_ref[ROW_MN:ROW_MN + N_CLS, 0:2]                        # (5, 2)
    mn_w = mn[:, 0:1]
    mn_b = mn[:, 1:2]
    kron = slab_ref[ROW_KRON:ROW_KRON + N_PATCH, 0:HW]               # (16, 256)

    m_rows = []
    for b in range(BATCH):
        r0 = b * N_PAD
        patches = feat[r0:r0 + N_PATCH, 0:D]                         # (16, 32)
        cls_f = feat[r0 + N_PATCH:r0 + N_TOT, D:2 * D]               # (5, 32)
        patches = patches * lax.rsqrt(jnp.sum(patches * patches, axis=-1, keepdims=True))
        cls_f = cls_f * lax.rsqrt(jnp.sum(cls_f * cls_f, axis=-1, keepdims=True))
        # masks^T: (N_CLS, N_PATCH) -- classes on sublanes, patches on lanes
        mT = lax.dot_general(cls_f, patches, (((1,), (1,)), ((), ())),
                             preferred_element_type=f32)
        # mask_norm: LayerNorm over the class axis (= rows here)
        mu = jnp.mean(mT, axis=0, keepdims=True)
        var = jnp.mean((mT - mu) ** 2, axis=0, keepdims=True)
        m_rows.append((mT - mu) * lax.rsqrt(var + LN_EPS) * mn_w + mn_b)

    # both batches stacked -> ONE kron upsample matmul + ONE full lane-dense store
    mT_all = jnp.concatenate(m_rows, axis=0)                         # (10, 16)
    out_ref[...] = jnp.dot(mT_all, kron, preferred_element_type=f32)  # (10, 256)


# ---------------- bilinear interpolation matrix (align_corners=False) ----------
def _interp_matrix(out_size, in_size):
    A = np.zeros((out_size, in_size), dtype=np.float32)
    scale = in_size / out_size
    for i in range(out_size):
        src = max((i + 0.5) * scale - 0.5, 0.0)
        i0 = min(int(np.floor(src)), in_size - 1)
        i1 = min(i0 + 1, in_size - 1)
        frac = src - i0
        A[i, i0] += 1.0 - frac
        A[i, i1] += frac
    return jnp.asarray(A)


# ---------------- parameters ---------------------------------------------------
def _trunc_normal(key, shape, std=0.02):
    return std * jax.random.truncated_normal(key, -2.0, 2.0, shape, jnp.float32)


def init_params(key):
    keys = iter(jax.random.split(key, 8 + 4 * N_LAYERS))
    p = {}
    p["proj_dec_w"] = _trunc_normal(next(keys), (D_ENC, D_MODEL))
    p["proj_dec_b"] = jnp.zeros((D_MODEL,), jnp.float32)
    p["cls_emb"] = _trunc_normal(next(keys), (1, N_CLS, D_MODEL))
    p["proj_patch"] = MODEL_SCALE * jax.random.normal(next(keys), (D_MODEL, D_MODEL), jnp.float32)
    p["proj_classes"] = MODEL_SCALE * jax.random.normal(next(keys), (D_MODEL, D_MODEL), jnp.float32)
    p["dec_norm_w"] = jnp.ones((D_MODEL,), jnp.float32)
    p["dec_norm_b"] = jnp.zeros((D_MODEL,), jnp.float32)
    p["mask_norm_w"] = jnp.ones((N_CLS,), jnp.float32)
    p["mask_norm_b"] = jnp.zeros((N_CLS,), jnp.float32)

    qkv_w, proj_w, fc1_w, fc2_w = [], [], [], []
    for _ in range(N_LAYERS):
        qkv_w.append(_trunc_normal(next(keys), (D_MODEL, 3 * D_MODEL)))
        proj_w.append(_trunc_normal(next(keys), (D_MODEL, D_MODEL)))
        fc1_w.append(_trunc_normal(next(keys), (D_MODEL, D_FF)))
        fc2_w.append(_trunc_normal(next(keys), (D_FF, D_MODEL)))
    p["qkv_w"] = jnp.stack(qkv_w)                       # (L, D, 3D)
    p["qkv_b"] = jnp.zeros((N_LAYERS, 3 * D_MODEL), jnp.float32)
    p["proj_w"] = jnp.stack(proj_w)                     # (L, D, D)
    p["proj_b"] = jnp.zeros((N_LAYERS, D_MODEL), jnp.float32)
    p["fc1_w"] = jnp.stack(fc1_w)                       # (L, D, F)
    p["fc1_b"] = jnp.zeros((N_LAYERS, D_FF), jnp.float32)
    p["fc2_w"] = jnp.stack(fc2_w)                       # (L, F, D)
    p["fc2_b"] = jnp.zeros((N_LAYERS, D_MODEL), jnp.float32)
    p["ln1_w"] = jnp.ones((N_LAYERS, D_MODEL), jnp.float32)
    p["ln1_b"] = jnp.zeros((N_LAYERS, D_MODEL), jnp.float32)
    p["ln2_w"] = jnp.ones((N_LAYERS, D_MODEL), jnp.float32)
    p["ln2_b"] = jnp.zeros((N_LAYERS, D_MODEL), jnp.float32)
    return p


# ---------------- wrapper -------------------------------------------------------
def mask_transformer_forward(x, p, im_size):
    B = x.shape[0]
    H, W = im_size
    gs_h, gs_w = H // PATCH, W // PATCH
    assert B == BATCH and gs_h * gs_w == N_PATCH and (H, W) == (H_IMG, W_IMG)

    L, D, F = N_LAYERS, D_MODEL, D_FF
    HW = H * W

    # ---- layout plumbing (tiny constant tensors; no model compute hoisted) ----
    # zero-pad each batch's patch tokens to N_PAD rows; fold batch onto sublanes.
    x_pad = jnp.zeros((B, N_PAD, D_ENC), jnp.float32).at[:, :N_PATCH, :].set(x)
    x_pad = x_pad.reshape(B * N_PAD, D_ENC)
    # additive base: proj_dec bias on patch rows, cls_emb on cls rows, 0 on pad rows.
    base = jnp.zeros((B, N_PAD, D), jnp.float32)
    base = base.at[:, :N_PATCH, :].set(p["proj_dec_b"])
    base = base.at[:, N_PATCH:N_TOT, :].set(jnp.broadcast_to(p["cls_emb"], (B, N_CLS, D)))
    base = base.reshape(B * N_PAD, D)

    # bilinear upsample (align_corners=False) folded into one Kronecker matrix
    a_h = _interp_matrix(H, gs_h)            # (H, gs_h)
    a_w = _interp_matrix(W, gs_w)            # (W, gs_w)
    kron = jnp.einsum("ih,jw->hwij", a_h, a_w).reshape(gs_h * gs_w, HW)

    # ---- one packed parameter slab (cuts DMA descriptor count) ----
    slab = jnp.zeros((SLAB_ROWS, SLAB_LANES), jnp.float32)
    slab = slab.at[ROW_KRON:ROW_KRON + N_PATCH, 0:HW].set(kron)
    slab = slab.at[ROW_DECW:ROW_DECW + D_ENC, 0:D].set(p["proj_dec_w"])
    slab = slab.at[ROW_PPPC:ROW_PPPC + D, 0:D].set(p["proj_patch"])
    slab = slab.at[ROW_PPPC:ROW_PPPC + D, D:2 * D].set(p["proj_classes"])
    slab = slab.at[ROW_BASE:ROW_BASE + B * N_PAD, 0:D].set(base)
    ln_rows = jnp.stack([p["ln1_w"], p["ln1_b"], p["ln2_w"], p["ln2_b"]],
                        axis=1).reshape(4 * L, D)
    slab = slab.at[ROW_LN:ROW_LN + 4 * L, 0:D].set(ln_rows)
    for l in range(L):
        slab = slab.at[ROW_BIAS + 4 * l + 0, 0:3 * D].set(p["qkv_b"][l])
        slab = slab.at[ROW_BIAS + 4 * l + 1, 0:F].set(p["fc1_b"][l])
        slab = slab.at[ROW_BIAS + 4 * l + 2, 0:D].set(p["proj_b"][l])
        slab = slab.at[ROW_BIAS + 4 * l + 3, 0:D].set(p["fc2_b"][l])
    slab = slab.at[ROW_DNW, 0:D].set(p["dec_norm_w"])
    slab = slab.at[ROW_DNB, 0:D].set(p["dec_norm_b"])
    slab = slab.at[ROW_MN:ROW_MN + N_CLS, 0].set(p["mask_norm_w"])
    slab = slab.at[ROW_MN:ROW_MN + N_CLS, 1].set(p["mask_norm_b"])

    def full_spec(shape):
        return pl.BlockSpec(shape, lambda i, _n=len(shape): (0,) * _n)

    out = pl.pallas_call(
        mask_transformer_kernel,
        out_shape=jax.ShapeDtypeStruct((B * N_CLS, HW), jnp.float32),
        grid=(1,),
        in_specs=[
            full_spec((B * N_PAD, D_ENC)),          # x_pad
            full_spec((L, D, 3 * D)),               # qkv_w
            full_spec((L, D, D)),                   # proj_w
            full_spec((L, D, F)),                   # fc1_w
            full_spec((L, F, D)),                   # fc2_w
            full_spec((SLAB_ROWS, SLAB_LANES)),     # packed parameter slab
        ],
        out_specs=full_spec((B * N_CLS, HW)),
        compiler_params=pltpu.CompilerParams(dimension_semantics=("arbitrary",)),
    )(x_pad, p["qkv_w"], p["proj_w"], p["fc1_w"], p["fc2_w"], slab)

    # rows are (b, cls), columns are (H, W) -> plain reshape, no transpose needed
    return out.reshape(B, N_CLS, H, W)


# ---------------- pure-JAX reference (PyTorch semantics, exact erf GELU) -------
def reference_forward(x, p, im_size):
    B = x.shape[0]
    H, W = im_size
    x = x @ p["proj_dec_w"] + p["proj_dec_b"]
    x = jnp.concatenate([x, jnp.broadcast_to(p["cls_emb"], (B, N_CLS, D_MODEL))], axis=1)
    for l in range(N_LAYERS):
        h = _ln_rows(x, p["ln1_w"][l], p["ln1_b"][l])
        qkv = h @ p["qkv_w"][l] + p["qkv_b"][l]
        qkv = qkv.reshape(B, N_TOT, 3, N_HEADS, HEAD_DIM).transpose(2, 0, 3, 1, 4)
        q, k, v = qkv[0], qkv[1], qkv[2]
        att = jax.nn.softmax(jnp.einsum("bhnd,bhmd->bhnm", q, k) * ATTN_SCALE, axis=-1)
        o = jnp.einsum("bhnm,bhmd->bhnd", att, v).transpose(0, 2, 1, 3).reshape(B, N_TOT, D_MODEL)
        x = x + (o @ p["proj_w"][l] + p["proj_b"][l])
        h = _ln_rows(x, p["ln2_w"][l], p["ln2_b"][l])
        h = jax.nn.gelu(h @ p["fc1_w"][l] + p["fc1_b"][l], approximate=False)
        x = x + (h @ p["fc2_w"][l] + p["fc2_b"][l])
    x = _ln_rows(x, p["dec_norm_w"], p["dec_norm_b"])
    patches, cls_feat = x[:, :N_PATCH], x[:, N_PATCH:]
    patches = patches @ p["proj_patch"]
    cls_feat = cls_feat @ p["proj_classes"]
    patches = patches / jnp.linalg.norm(patches, axis=-1, keepdims=True)
    cls_feat = cls_feat / jnp.linalg.norm(cls_feat, axis=-1, keepdims=True)
    masks = jnp.einsum("bnd,bcd->bnc", patches, cls_feat)
    masks = _ln_rows(masks, p["mask_norm_w"], p["mask_norm_b"])
    m = masks.reshape(B, H // PATCH, W // PATCH, N_CLS).transpose(0, 3, 1, 2)
    a_h = _interp_matrix(H, H // PATCH)
    a_w = _interp_matrix(W, W // PATCH)
    return jnp.einsum("Hh,bchw,Ww->bcHW", a_h, m, a_w)


if __name__ == "__main__":
    key = jax.random.PRNGKey(0)
    pkey, xkey = jax.random.split(key)
    params = init_params(pkey)
    x = jax.random.normal(xkey, (BATCH, N_PATCH, D_ENC), jnp.float32)

    out = mask_transformer_forward(x, params, (H_IMG, W_IMG))
    out = jax.block_until_ready(out)
    assert out.shape == (BATCH, N_CLS, H_IMG, W_IMG), out.shape

    ref = reference_forward(x, params, (H_IMG, W_IMG))
    np.testing.assert_allclose(np.asarray(out), np.asarray(ref), rtol=2e-2, atol=2e-2)

    print("KERNEL_OK")
</pallas_src>

<mosaic_0001>
module attributes {stable_mosaic.version = 11 : i64} {
  func.func @mask_transformer_kernel(%arg0: i32, %arg1: memref<48x16xf32, #tpu.memory_space<vmem>>, %arg2: memref<2x32x96xf32, #tpu.memory_space<vmem>>, %arg3: memref<2x32x32xf32, #tpu.memory_space<vmem>>, %arg4: memref<2x32x64xf32, #tpu.memory_space<vmem>>, %arg5: memref<2x64x32xf32, #tpu.memory_space<vmem>>, %arg6: memref<136x256xf32, #tpu.memory_space<vmem>>, %arg7: memref<10x256xf32, #tpu.memory_space<vmem>>) attributes {dimension_semantics = [#tpu.dimension_semantics<arbitrary>], iteration_bounds = array<i64: 1>, scalar_prefetch = 0 : i64, scratch_operands = 0 : i64, tpu.core_type = #tpu.core_type<tc>, window_params = [{pipeline_mode = #tpu.pipeline_mode<synchronous>, transform_indices = @transform_0, window_bounds = array<i64: 48, 16>}, {pipeline_mode = #tpu.pipeline_mode<synchronous>, transform_indices = @transform_1, window_bounds = array<i64: 2, 32, 96>}, {pipeline_mode = #tpu.pipeline_mode<synchronous>, transform_indices = @transform_2, window_bounds = array<i64: 2, 32, 32>}, {pipeline_mode = #tpu.pipeline_mode<synchronous>, transform_indices = @transform_3, window_bounds = array<i64: 2, 32, 64>}, {pipeline_mode = #tpu.pipeline_mode<synchronous>, transform_indices = @transform_4, window_bounds = array<i64: 2, 64, 32>}, {pipeline_mode = #tpu.pipeline_mode<synchronous>, transform_indices = @transform_5, window_bounds = array<i64: 136, 256>}, {pipeline_mode = #tpu.pipeline_mode<synchronous>, transform_indices = @transform_6, window_bounds = array<i64: 10, 256>}]} {
    %c16 = arith.constant 16 : index
    %c0 = arith.constant 0 : index
    %0 = vector.load %arg6[%c16, %c0] : memref<136x256xf32, #tpu.memory_space<vmem>>, vector<16x32xf32>
    %c64 = arith.constant 64 : index
    %c0_0 = arith.constant 0 : index
    %1 = vector.load %arg6[%c64, %c0_0] : memref<136x256xf32, #tpu.memory_space<vmem>>, vector<48x32xf32>
    %c0_1 = arith.constant 0 : index
    %c0_2 = arith.constant 0 : index
    %2 = vector.load %arg1[%c0_1, %c0_2] : memref<48x16xf32, #tpu.memory_space<vmem>>, vector<48x16xf32>
    %cst = arith.constant dense<0.000000e+00> : vector<48x32xf32>
    %3 = tpu.matmul %2, %0, %cst {dimension_numbers = #tpu.dot_dimension_numbers<[1], [0], [0], [1], [0, 0, 1, 1], [], []>} : vector<48x16xf32>, vector<16x32xf32>, vector<48x32xf32> -> vector<48x32xf32>
    %4 = arith.addf %3, %1 : vector<48x32xf32>
    %5 = tpu.iota {dimensions = array<i32: 0>} : vector<96x96xi32>
    %6 = tpu.iota {dimensions = array<i32: 1>} : vector<96x96xi32>
    %c0_i32 = arith.constant 0 : i32
    %7 = vector.broadcast %c0_i32 : i32 to vector<96x96xi32>
    %c0_i32_3 = arith.constant 0 : i32
    %8 = vector.broadcast %c0_i32_3 : i32 to vector<96x96xi32>
    %c24_i32 = arith.constant 24 : i32
    %9 = vector.broadcast %c24_i32 : i32 to vector<96x96xi32>
    %10 = arith.cmpi sge, %5, %9 : vector<96x96xi32>
    %11 = arith.extui %10 : vector<96x96xi1> to vector<96x96xi32>
    %12 = arith.addi %7, %11 : vector<96x96xi32>
    %c24_i32_4 = arith.constant 24 : i32
    %13 = vector.broadcast %c24_i32_4 : i32 to vector<96x96xi32>
    %14 = arith.cmpi sge, %6, %13 : vector<96x96xi32>
    %15 = arith.extui %14 : vector<96x96xi1> to vector<96x96xi32>
    %16 = arith.addi %8, %15 : vector<96x96xi32>
    %c48_i32 = arith.constant 48 : i32
    %17 = vector.broadcast %c48_i32 : i32 to vector<96x96xi32>
    %18 = arith.cmpi sge, %5, %17 : vector<96x96xi32>
    %19 = arith.extui %18 : vector<96x96xi1> to vector<96x96xi32>
    %20 = arith.addi %12, %19 : vector<96x96xi32>
    %c48_i32_5 = arith.constant 48 : i32
    %21 = vector.broadcast %c48_i32_5 : i32 to vector<96x96xi32>
    %22 = arith.cmpi sge, %6, %21 : vector<96x96xi32>
    %23 = arith.extui %22 : vector<96x96xi1> to vector<96x96xi32>
    %24 = arith.addi %16, %23 : vector<96x96xi32>
    %c72_i32 = arith.constant 72 : i32
    %25 = vector.broadcast %c72_i32 : i32 to vector<96x96xi32>
    %26 = arith.cmpi sge, %5, %25 : vector<96x96xi32>
    %27 = arith.extui %26 : vector<96x96xi1> to vector<96x96xi32>
    %28 = arith.addi %20, %27 : vector<96x96xi32>
    %c72_i32_6 = arith.constant 72 : i32
    %29 = vector.broadcast %c72_i32_6 : i32 to vector<96x96xi32>
    %30 = arith.cmpi sge, %6, %29 : vector<96x96xi32>
    %31 = arith.extui %30 : vector<96x96xi1> to vector<96x96xi32>
    %32 = arith.addi %24, %31 : vector<96x96xi32>
    %c24_i32_7 = arith.constant 24 : i32
    %33 = vector.broadcast %c24_i32_7 : i32 to vector<96x96xi32>
    %34 = arith.muli %32, %33 : vector<96x96xi32>
    %35 = arith.subi %6, %34 : vector<96x96xi32>
    %c21_i32 = arith.constant 21 : i32
    %36 = vector.broadcast %c21_i32 : i32 to vector<96x96xi32>
    %37 = arith.cmpi slt, %35, %36 : vector<96x96xi32>
    %38 = arith.cmpi eq, %28, %32 : vector<96x96xi32>
    %39 = arith.andi %38, %37 : vector<96x96xi1>
    %cst_8 = arith.constant 0.000000e+00 : f32
    %cst_9 = arith.constant -1.000000e+30 : f32
    %40 = vector.broadcast %cst_8 : f32 to vector<96x96xf32>
    %41 = vector.broadcast %cst_9 : f32 to vector<96x96xf32>
    %42 = arith.select %39, %40, %41 : vector<96x96xi1>, vector<96x96xf32>
    %c112 = arith.constant 112 : index
    %c0_10 = arith.constant 0 : index
    %43 = vector.load %arg6[%c112, %c0_10] : memref<136x256xf32, #tpu.memory_space<vmem>>, vector<4x32xf32>
    %c120 = arith.constant 120 : index
    %c0_11 = arith.constant 0 : index
    %44 = vector.load %arg6[%c120, %c0_11] : memref<136x256xf32, #tpu.memory_space<vmem>>, vector<4x96xf32>
    %45 = vector.extract_strided_slice %44 {offsets = [0, 0], sizes = [1, 96], strides = [1, 1]} : vector<4x96xf32> to vector<1x96xf32>
    %46 = vector.extract_strided_slice %44 {offsets = [1, 0], sizes = [1, 64], strides = [1, 1]} : vector<4x96xf32> to vector<1x64xf32>
    %47 = vector.extract_strided_slice %44 {offsets = [2, 0], sizes = [1, 32], strides = [1, 1]} : vector<4x96xf32> to vector<1x32xf32>
    %48 = vector.extract_strided_slice %44 {offsets = [3, 0], sizes = [1, 32], strides = [1, 1]} : vector<4x96xf32> to vector<1x32xf32>
    %49 = vector.extract_strided_slice %43 {offsets = [0, 0], sizes = [1, 32], strides = [1, 1]} : vector<4x32xf32> to vector<1x32xf32>
    %50 = vector.extract_strided_slice %43 {offsets = [1, 0], sizes = [1, 32], strides = [1, 1]} : vector<4x32xf32> to vector<1x32xf32>
    %cst_12 = arith.constant dense<0.000000e+00> : vector<48xf32>
    %51 = vector.multi_reduction <add>, %4, %cst_12 [1] : vector<48x32xf32> to vector<48xf32>
    %52 = vector.shape_cast %51 : vector<48xf32> to vector<48x1xf32>
    %cst_13 = arith.constant 3.200000e+01 : f32
    %53 = vector.broadcast %cst_13 : f32 to vector<48x1xf32>
    %54 = arith.divf %52, %53 : vector<48x1xf32>
    %55 = vector.broadcast %54 : vector<48x1xf32> to vector<48x32xf32>
    %56 = arith.subf %4, %55 : vector<48x32xf32>
    %57 = arith.mulf %56, %56 : vector<48x32xf32>
    %cst_14 = arith.constant dense<0.000000e+00> : vector<48xf32>
    %58 = vector.multi_reduction <add>, %57, %cst_14 [1] : vector<48x32xf32> to vector<48xf32>
    %59 = vector.shape_cast %58 : vector<48xf32> to vector<48x1xf32>
    %cst_15 = arith.constant 3.200000e+01 : f32
    %60 = vector.broadcast %cst_15 : f32 to vector<48x1xf32>
    %61 = arith.divf %59, %60 : vector<48x1xf32>
    %62 = vector.broadcast %54 : vector<48x1xf32> to vector<48x32xf32>
    %63 = arith.subf %4, %62 : vector<48x32xf32>
    %cst_16 = arith.constant 9.99999974E-6 : f32
    %64 = vector.broadcast %cst_16 : f32 to vector<48x1xf32>
    %65 = arith.addf %61, %64 : vector<48x1xf32>
    %66 = math.rsqrt %65 : vector<48x1xf32>
    %67 = vector.broadcast %66 : vector<48x1xf32> to vector<48x32xf32>
    %68 = arith.mulf %63, %67 : vector<48x32xf32>
    %69 = vector.broadcast %49 : vector<1x32xf32> to vector<48x32xf32>
    %70 = arith.mulf %68, %69 : vector<48x32xf32>
    %71 = vector.broadcast %50 : vector<1x32xf32> to vector<48x32xf32>
    %72 = arith.addf %70, %71 : vector<48x32xf32>
    %c0_17 = arith.constant 0 : index
    %c0_18 = arith.constant 0 : index
    %c0_19 = arith.constant 0 : index
    %73 = vector.load %arg2[%c0_17, %c0_18, %c0_19] : memref<2x32x96xf32, #tpu.memory_space<vmem>>, vector<1x32x96xf32>
    %74 = vector.shape_cast %73 : vector<1x32x96xf32> to vector<32x96xf32>
    %cst_20 = arith.constant dense<0.000000e+00> : vector<48x96xf32>
    %75 = tpu.matmul %72, %74, %cst_20 {dimension_numbers = #tpu.dot_dimension_numbers<[1], [0], [0], [1], [0, 0, 1, 1], [], []>} : vector<48x32xf32>, vector<32x96xf32>, vector<48x96xf32> -> vector<48x96xf32>
    %76 = vector.broadcast %45 : vector<1x96xf32> to vector<48x96xf32>
    %77 = arith.addf %75, %76 : vector<48x96xf32>
    %78 = vector.extract_strided_slice %77 {offsets = [0, 0], sizes = [48, 16], strides = [1, 1]} : vector<48x96xf32> to vector<48x16xf32>
    %79 = vector.extract_strided_slice %77 {offsets = [0, 16], sizes = [48, 16], strides = [1, 1]} : vector<48x96xf32> to vector<48x16xf32>
    %80 = tpu.concatenate %78, %79 in 0 : vector<48x16xf32>, vector<48x16xf32> -> vector<96x16xf32>
    %81 = vector.extract_strided_slice %77 {offsets = [0, 32], sizes = [48, 16], strides = [1, 1]} : vector<48x96xf32> to vector<48x16xf32>
    %82 = vector.extract_strided_slice %77 {offsets = [0, 48], sizes = [48, 16], strides = [1, 1]} : vector<48x96xf32> to vector<48x16xf32>
    %83 = tpu.concatenate %81, %82 in 0 : vector<48x16xf32>, vector<48x16xf32> -> vector<96x16xf32>
    %84 = vector.extract_strided_slice %77 {offsets = [0, 64], sizes = [48, 16], strides = [1, 1]} : vector<48x96xf32> to vector<48x16xf32>
    %85 = vector.extract_strided_slice %77 {offsets = [0, 80], sizes = [48, 16], strides = [1, 1]} : vector<48x96xf32> to vector<48x16xf32>
    %86 = tpu.concatenate %84, %85 in 0 : vector<48x16xf32>, vector<48x16xf32> -> vector<96x16xf32>
    %cst_21 = arith.constant dense<0.000000e+00> : vector<96x96xf32>
    %87 = tpu.matmul %80, %83, %cst_21 {dimension_numbers = #tpu.dot_dimension_numbers<[1], [1], [0], [0], [0, 0, 1, 0], [], []>} : vector<96x16xf32>, vector<96x16xf32>, vector<96x96xf32> -> vector<96x96xf32>
    %cst_22 = arith.constant 2.500000e-01 : f32
    %88 = vector.broadcast %cst_22 : f32 to vector<96x96xf32>
    %89 = arith.mulf %87, %88 : vector<96x96xf32>
    %90 = arith.addf %89, %42 : vector<96x96xf32>
    %cst_23 = arith.constant dense<0xFF800000> : vector<96xf32>
    %91 = vector.multi_reduction <maximumf>, %90, %cst_23 [1] : vector<96x96xf32> to vector<96xf32>
    %92 = vector.shape_cast %91 : vector<96xf32> to vector<96x1xf32>
    %93 = vector.broadcast %92 : vector<96x1xf32> to vector<96x96xf32>
    %94 = arith.subf %90, %93 : vector<96x96xf32>
    %95 = math.exp %94 : vector<96x96xf32>
    %cst_24 = arith.constant dense<0.000000e+00> : vector<96xf32>
    %96 = vector.multi_reduction <add>, %95, %cst_24 [1] : vector<96x96xf32> to vector<96xf32>
    %97 = vector.shape_cast %96 : vector<96xf32> to vector<96x1xf32>
    %98 = tpu.reciprocal %97 {approx = true} : vector<96x1xf32> -> vector<96x1xf32>
    %99 = vector.broadcast %98 : vector<96x1xf32> to vector<96x96xf32>
    %100 = arith.mulf %95, %99 : vector<96x96xf32>
    %cst_25 = arith.constant dense<0.000000e+00> : vector<96x16xf32>
    %101 = tpu.matmul %100, %86, %cst_25 {dimension_numbers = #tpu.dot_dimension_numbers<[1], [0], [0], [1], [0, 0, 1, 1], [], []>} : vector<96x96xf32>, vector<96x16xf32>, vector<96x16xf32> -> vector<96x16xf32>
    %102 = vector.extract_strided_slice %101 {offsets = [0, 0], sizes = [48, 16], strides = [1, 1]} : vector<96x16xf32> to vector<48x16xf32>
    %103 = vector.extract_strided_slice %101 {offsets = [48, 0], sizes = [48, 16], strides = [1, 1]} : vector<96x16xf32> to vector<48x16xf32>
    %104 = tpu.concatenate %102, %103 in 1 : vector<48x16xf32>, vector<48x16xf32> -> vector<48x32xf32>
    %c0_26 = arith.constant 0 : index
    %c0_27 = arith.constant 0 : index
    %c0_28 = arith.constant 0 : index
    %105 = vector.load %arg3[%c0_26, %c0_27, %c0_28] : memref<2x32x32xf32, #tpu.memory_space<vmem>>, vector<1x32x32xf32>
    %106 = vector.shape_cast %105 : vector<1x32x32xf32> to vector<32x32xf32>
    %cst_29 = arith.constant dense<0.000000e+00> : vector<48x32xf32>
    %107 = tpu.matmul %104, %106, %cst_29 {dimension_numbers = #tpu.dot_dimension_numbers<[1], [0], [0], [1], [0, 0, 1, 1], [], []>} : vector<48x32xf32>, vector<32x32xf32>, vector<48x32xf32> -> vector<48x32xf32>
    %108 = arith.addf %4, %107 : vector<48x32xf32>
    %109 = vector.broadcast %47 : vector<1x32xf32> to vector<48x32xf32>
    %110 = arith.addf %108, %109 : vector<48x32xf32>
    %111 = vector.extract_strided_slice %43 {offsets = [2, 0], sizes = [1, 32], strides = [1, 1]} : vector<4x32xf32> to vector<1x32xf32>
    %112 = vector.extract_strided_slice %43 {offsets = [3, 0], sizes = [1, 32], strides = [1, 1]} : vector<4x32xf32> to vector<1x32xf32>
    %cst_30 = arith.constant dense<0.000000e+00> : vector<48xf32>
    %113 = vector.multi_reduction <add>, %110, %cst_30 [1] : vector<48x32xf32> to vector<48xf32>
    %114 = vector.shape_cast %113 : vector<48xf32> to vector<48x1xf32>
    %cst_31 = arith.constant 3.200000e+01 : f32
    %115 = vector.broadcast %cst_31 : f32 to vector<48x1xf32>
    %116 = arith.divf %114, %115 : vector<48x1xf32>
    %117 = vector.broadcast %116 : vector<48x1xf32> to vector<48x32xf32>
    %118 = arith.subf %110, %117 : vector<48x32xf32>
    %119 = arith.mulf %118, %118 : vector<48x32xf32>
    %cst_32 = arith.constant dense<0.000000e+00> : vector<48xf32>
    %120 = vector.multi_reduction <add>, %119, %cst_32 [1] : vector<48x32xf32> to vector<48xf32>
    %121 = vector.shape_cast %120 : vector<48xf32> to vector<48x1xf32>
    %cst_33 = arith.constant 3.200000e+01 : f32
    %122 = vector.broadcast %cst_33 : f32 to vector<48x1xf32>
    %123 = arith.divf %121, %122 : vector<48x1xf32>
    %124 = vector.broadcast %116 : vector<48x1xf32> to vector<48x32xf32>
    %125 = arith.subf %110, %124 : vector<48x32xf32>
    %cst_34 = arith.constant 9.99999974E-6 : f32
    %126 = vector.broadcast %cst_34 : f32 to vector<48x1xf32>
    %127 = arith.addf %123, %126 : vector<48x1xf32>
    %128 = math.rsqrt %127 : vector<48x1xf32>
    %129 = vector.broadcast %128 : vector<48x1xf32> to vector<48x32xf32>
    %130 = arith.mulf %125, %129 : vector<48x32xf32>
    %131 = vector.broadcast %111 : vector<1x32xf32> to vector<48x32xf32>
    %132 = arith.mulf %130, %131 : vector<48x32xf32>
    %133 = vector.broadcast %112 : vector<1x32xf32> to vector<48x32xf32>
    %134 = arith.addf %132, %133 : vector<48x32xf32>
    %c0_35 = arith.constant 0 : index
    %c0_36 = arith.constant 0 : index
    %c0_37 = arith.constant 0 : index
    %135 = vector.load %arg4[%c0_35, %c0_36, %c0_37] : memref<2x32x64xf32, #tpu.memory_space<vmem>>, vector<1x32x64xf32>
    %136 = vector.shape_cast %135 : vector<1x32x64xf32> to vector<32x64xf32>
    %cst_38 = arith.constant dense<0.000000e+00> : vector<48x64xf32>
    %137 = tpu.matmul %134, %136, %cst_38 {dimension_numbers = #tpu.dot_dimension_numbers<[1], [0], [0], [1], [0, 0, 1, 1], [], []>} : vector<48x32xf32>, vector<32x64xf32>, vector<48x64xf32> -> vector<48x64xf32>
    %138 = vector.broadcast %46 : vector<1x64xf32> to vector<48x64xf32>
    %139 = arith.addf %137, %138 : vector<48x64xf32>
    %cst_39 = arith.constant 5.000000e-01 : f32
    %140 = vector.broadcast %cst_39 : f32 to vector<48x64xf32>
    %141 = arith.mulf %140, %139 : vector<48x64xf32>
    %cst_40 = arith.constant 4.471500e-02 : f32
    %142 = vector.broadcast %cst_40 : f32 to vector<48x64xf32>
    %143 = arith.mulf %142, %139 : vector<48x64xf32>
    %144 = arith.mulf %143, %139 : vector<48x64xf32>
    %145 = arith.mulf %144, %139 : vector<48x64xf32>
    %146 = arith.addf %139, %145 : vector<48x64xf32>
    %cst_41 = arith.constant 0.797884583 : f32
    %147 = vector.broadcast %cst_41 : f32 to vector<48x64xf32>
    %148 = arith.mulf %147, %146 : vector<48x64xf32>
    %149 = math.tanh %148 : vector<48x64xf32>
    %cst_42 = arith.constant 1.000000e+00 : f32
    %150 = vector.broadcast %cst_42 : f32 to vector<48x64xf32>
    %151 = arith.addf %150, %149 : vector<48x64xf32>
    %152 = arith.mulf %141, %151 : vector<48x64xf32>
    %c0_43 = arith.constant 0 : index
    %c0_44 = arith.constant 0 : index
    %c0_45 = arith.constant 0 : index
    %153 = vector.load %arg5[%c0_43, %c0_44, %c0_45] : memref<2x64x32xf32, #tpu.memory_space<vmem>>, vector<1x64x32xf32>
    %154 = vector.shape_cast %153 : vector<1x64x32xf32> to vector<64x32xf32>
    %cst_46 = arith.constant dense<0.000000e+00> : vector<48x32xf32>
    %155 = tpu.matmul %152, %154, %cst_46 {dimension_numbers = #tpu.dot_dimension_numbers<[1], [0], [0], [1], [0, 0, 1, 1], [], []>} : vector<48x64xf32>, vector<64x32xf32>, vector<48x32xf32> -> vector<48x32xf32>
    %156 = arith.addf %110, %155 : vector<48x32xf32>
    %157 = vector.broadcast %48 : vector<1x32xf32> to vector<48x32xf32>
    %158 = arith.addf %156, %157 : vector<48x32xf32>
    %c116 = arith.constant 116 : index
    %c0_47 = arith.constant 0 : index
    %159 = vector.load %arg6[%c116, %c0_47] : memref<136x256xf32, #tpu.memory_space<vmem>>, vector<4x32xf32>
    %c124 = arith.constant 124 : index
    %c0_48 = arith.constant 0 : index
    %160 = vector.load %arg6[%c124, %c0_48] : memref<136x256xf32, #tpu.memory_space<vmem>>, vector<4x96xf32>
    %161 = vector.extract_strided_slice %160 {offsets = [0, 0], sizes = [1, 96], strides = [1, 1]} : vector<4x96xf32> to vector<1x96xf32>
    %162 = vector.extract_strided_slice %160 {offsets = [1, 0], sizes = [1, 64], strides = [1, 1]} : vector<4x96xf32> to vector<1x64xf32>
    %163 = vector.extract_strided_slice %160 {offsets = [2, 0], sizes = [1, 32], strides = [1, 1]} : vector<4x96xf32> to vector<1x32xf32>
    %164 = vector.extract_strided_slice %160 {offsets = [3, 0], sizes = [1, 32], strides = [1, 1]} : vector<4x96xf32> to vector<1x32xf32>
    %165 = vector.extract_strided_slice %159 {offsets = [0, 0], sizes = [1, 32], strides = [1, 1]} : vector<4x32xf32> to vector<1x32xf32>
    %166 = vector.extract_strided_slice %159 {offsets = [1, 0], sizes = [1, 32], strides = [1, 1]} : vector<4x32xf32> to vector<1x32xf32>
    %cst_49 = arith.constant dense<0.000000e+00> : vector<48xf32>
    %167 = vector.multi_reduction <add>, %158, %cst_49 [1] : vector<48x32xf32> to vector<48xf32>
    %168 = vector.shape_cast %167 : vector<48xf32> to vector<48x1xf32>
    %cst_50 = arith.constant 3.200000e+01 : f32
    %169 = vector.broadcast %cst_50 : f32 to vector<48x1xf32>
    %170 = arith.divf %168, %169 : vector<48x1xf32>
    %171 = vector.broadcast %170 : vector<48x1xf32> to vector<48x32xf32>
    %172 = arith.subf %158, %171 : vector<48x32xf32>
    %173 = arith.mulf %172, %172 : vector<48x32xf32>
    %cst_51 = arith.constant dense<0.000000e+00> : vector<48xf32>
    %174 = vector.multi_reduction <add>, %173, %cst_51 [1] : vector<48x32xf32> to vector<48xf32>
    %175 = vector.shape_cast %174 : vector<48xf32> to vector<48x1xf32>
    %cst_52 = arith.constant 3.200000e+01 : f32
    %176 = vector.broadcast %cst_52 : f32 to vector<48x1xf32>
    %177 = arith.divf %175, %176 : vector<48x1xf32>
    %178 = vector.broadcast %170 : vector<48x1xf32> to vector<48x32xf32>
    %179 = arith.subf %158, %178 : vector<48x32xf32>
    %cst_53 = arith.constant 9.99999974E-6 : f32
    %180 = vector.broadcast %cst_53 : f32 to vector<48x1xf32>
    %181 = arith.addf %177, %180 : vector<48x1xf32>
    %182 = math.rsqrt %181 : vector<48x1xf32>
    %183 = vector.broadcast %182 : vector<48x1xf32> to vector<48x32xf32>
    %184 = arith.mulf %179, %183 : vector<48x32xf32>
    %185 = vector.broadcast %165 : vector<1x32xf32> to vector<48x32xf32>
    %186 = arith.mulf %184, %185 : vector<48x32xf32>
    %187 = vector.broadcast %166 : vector<1x32xf32> to vector<48x32xf32>
    %188 = arith.addf %186, %187 : vector<48x32xf32>
    %c1 = arith.constant 1 : index
    %c0_54 = arith.constant 0 : index
    %c0_55 = arith.constant 0 : index
    %189 = vector.load %arg2[%c1, %c0_54, %c0_55] : memref<2x32x96xf32, #tpu.memory_space<vmem>>, vector<1x32x96xf32>
    %190 = vector.shape_cast %189 : vector<1x32x96xf32> to vector<32x96xf32>
    %cst_56 = arith.constant dense<0.000000e+00> : vector<48x96xf32>
    %191 = tpu.matmul %188, %190, %cst_56 {dimension_numbers = #tpu.dot_dimension_numbers<[1], [0], [0], [1], [0, 0, 1, 1], [], []>} : vector<48x32xf32>, vector<32x96xf32>, vector<48x96xf32> -> vector<48x96xf32>
    %192 = vector.broadcast %161 : vector<1x96xf32> to vector<48x96xf32>
    %193 = arith.addf %191, %192 : vector<48x96xf32>
    %194 = vector.extract_strided_slice %193 {offsets = [0, 0], sizes = [48, 16], strides = [1, 1]} : vector<48x96xf32> to vector<48x16xf32>
    %195 = vector.extract_strided_slice %193 {offsets = [0, 16], sizes = [48, 16], strides = [1, 1]} : vector<48x96xf32> to vector<48x16xf32>
    %196 = tpu.concatenate %194, %195 in 0 : vector<48x16xf32>, vector<48x16xf32> -> vector<96x16xf32>
    %197 = vector.extract_strided_slice %193 {offsets = [0, 32], sizes = [48, 16], strides = [1, 1]} : vector<48x96xf32> to vector<48x16xf32>
    %198 = vector.extract_strided_slice %193 {offsets = [0, 48], sizes = [48, 16], strides = [1, 1]} : vector<48x96xf32> to vector<48x16xf32>
    %199 = tpu.concatenate %197, %198 in 0 : vector<48x16xf32>, vector<48x16xf32> -> vector<96x16xf32>
    %200 = vector.extract_strided_slice %193 {offsets = [0, 64], sizes = [48, 16], strides = [1, 1]} : vector<48x96xf32> to vector<48x16xf32>
    %201 = vector.extract_strided_slice %193 {offsets = [0, 80], sizes = [48, 16], strides = [1, 1]} : vector<48x96xf32> to vector<48x16xf32>
    %202 = tpu.concatenate %200, %201 in 0 : vector<48x16xf32>, vector<48x16xf32> -> vector<96x16xf32>
    %cst_57 = arith.constant dense<0.000000e+00> : vector<96x96xf32>
    %203 = tpu.matmul %196, %199, %cst_57 {dimension_numbers = #tpu.dot_dimension_numbers<[1], [1], [0], [0], [0, 0, 1, 0], [], []>} : vector<96x16xf32>, vector<96x16xf32>, vector<96x96xf32> -> vector<96x96xf32>
    %cst_58 = arith.constant 2.500000e-01 : f32
    %204 = vector.broadcast %cst_58 : f32 to vector<96x96xf32>
    %205 = arith.mulf %203, %204 : vector<96x96xf32>
    %206 = arith.addf %205, %42 : vector<96x96xf32>
    %cst_59 = arith.constant dense<0xFF800000> : vector<96xf32>
    %207 = vector.multi_reduction <maximumf>, %206, %cst_59 [1] : vector<96x96xf32> to vector<96xf32>
    %208 = vector.shape_cast %207 : vector<96xf32> to vector<96x1xf32>
    %209 = vector.broadcast %208 : vector<96x1xf32> to vector<96x96xf32>
    %210 = arith.subf %206, %209 : vector<96x96xf32>
    %211 = math.exp %210 : vector<96x96xf32>
    %cst_60 = arith.constant dense<0.000000e+00> : vector<96xf32>
    %212 = vector.multi_reduction <add>, %211, %cst_60 [1] : vector<96x96xf32> to vector<96xf32>
    %213 = vector.shape_cast %212 : vector<96xf32> to vector<96x1xf32>
    %214 = tpu.reciprocal %213 {approx = true} : vector<96x1xf32> -> vector<96x1xf32>
    %215 = vector.broadcast %214 : vector<96x1xf32> to vector<96x96xf32>
    %216 = arith.mulf %211, %215 : vector<96x96xf32>
    %cst_61 = arith.constant dense<0.000000e+00> : vector<96x16xf32>
    %217 = tpu.matmul %216, %202, %cst_61 {dimension_numbers = #tpu.dot_dimension_numbers<[1], [0], [0], [1], [0, 0, 1, 1], [], []>} : vector<96x96xf32>, vector<96x16xf32>, vector<96x16xf32> -> vector<96x16xf32>
    %218 = vector.extract_strided_slice %217 {offsets = [0, 0], sizes = [48, 16], strides = [1, 1]} : vector<96x16xf32> to vector<48x16xf32>
    %219 = vector.extract_strided_slice %217 {offsets = [48, 0], sizes = [48, 16], strides = [1, 1]} : vector<96x16xf32> to vector<48x16xf32>
    %220 = tpu.concatenate %218, %219 in 1 : vector<48x16xf32>, vector<48x16xf32> -> vector<48x32xf32>
    %c1_62 = arith.constant 1 : index
    %c0_63 = arith.constant 0 : index
    %c0_64 = arith.constant 0 : index
    %221 = vector.load %arg3[%c1_62, %c0_63, %c0_64] : memref<2x32x32xf32, #tpu.memory_space<vmem>>, vector<1x32x32xf32>
    %222 = vector.shape_cast %221 : vector<1x32x32xf32> to vector<32x32xf32>
    %cst_65 = arith.constant dense<0.000000e+00> : vector<48x32xf32>
    %223 = tpu.matmul %220, %222, %cst_65 {dimension_numbers = #tpu.dot_dimension_numbers<[1], [0], [0], [1], [0, 0, 1, 1], [], []>} : vector<48x32xf32>, vector<32x32xf32>, vector<48x32xf32> -> vector<48x32xf32>
    %224 = arith.addf %158, %223 : vector<48x32xf32>
    %225 = vector.broadcast %163 : vector<1x32xf32> to vector<48x32xf32>
    %226 = arith.addf %224, %225 : vector<48x32xf32>
    %227 = vector.extract_strided_slice %159 {offsets = [2, 0], sizes = [1, 32], strides = [1, 1]} : vector<4x32xf32> to vector<1x32xf32>
    %228 = vector.extract_strided_slice %159 {offsets = [3, 0], sizes = [1, 32], strides = [1, 1]} : vector<4x32xf32> to vector<1x32xf32>
    %cst_66 = arith.constant dense<0.000000e+00> : vector<48xf32>
    %229 = vector.multi_reduction <add>, %226, %cst_66 [1] : vector<48x32xf32> to vector<48xf32>
    %230 = vector.shape_cast %229 : vector<48xf32> to vector<48x1xf32>
    %cst_67 = arith.constant 3.200000e+01 : f32
    %231 = vector.broadcast %cst_67 : f32 to vector<48x1xf32>
    %232 = arith.divf %230, %231 : vector<48x1xf32>
    %233 = vector.broadcast %232 : vector<48x1xf32> to vector<48x32xf32>
    %234 = arith.subf %226, %233 : vector<48x32xf32>
    %235 = arith.mulf %234, %234 : vector<48x32xf32>
    %cst_68 = arith.constant dense<0.000000e+00> : vector<48xf32>
    %236 = vector.multi_reduction <add>, %235, %cst_68 [1] : vector<48x32xf32> to vector<48xf32>
    %237 = vector.shape_cast %236 : vector<48xf32> to vector<48x1xf32>
    %cst_69 = arith.constant 3.200000e+01 : f32
    %238 = vector.broadcast %cst_69 : f32 to vector<48x1xf32>
    %239 = arith.divf %237, %238 : vector<48x1xf32>
    %240 = vector.broadcast %232 : vector<48x1xf32> to vector<48x32xf32>
    %241 = arith.subf %226, %240 : vector<48x32xf32>
    %cst_70 = arith.constant 9.99999974E-6 : f32
    %242 = vector.broadcast %cst_70 : f32 to vector<48x1xf32>
    %243 = arith.addf %239, %242 : vector<48x1xf32>
    %244 = math.rsqrt %243 : vector<48x1xf32>
    %245 = vector.broadcast %244 : vector<48x1xf32> to vector<48x32xf32>
    %246 = arith.mulf %241, %245 : vector<48x32xf32>
    %247 = vector.broadcast %227 : vector<1x32xf32> to vector<48x32xf32>
    %248 = arith.mulf %246, %247 : vector<48x32xf32>
    %249 = vector.broadcast %228 : vector<1x32xf32> to vector<48x32xf32>
    %250 = arith.addf %248, %249 : vector<48x32xf32>
    %c1_71 = arith.constant 1 : index
    %c0_72 = arith.constant 0 : index
    %c0_73 = arith.constant 0 : index
    %251 = vector.load %arg4[%c1_71, %c0_72, %c0_73] : memref<2x32x64xf32, #tpu.memory_space<vmem>>, vector<1x32x64xf32>
    %252 = vector.shape_cast %251 : vector<1x32x64xf32> to vector<32x64xf32>
    %cst_74 = arith.constant dense<0.000000e+00> : vector<48x64xf32>
    %253 = tpu.matmul %250, %252, %cst_74 {dimension_numbers = #tpu.dot_dimension_numbers<[1], [0], [0], [1], [0, 0, 1, 1], [], []>} : vector<48x32xf32>, vector<32x64xf32>, vector<48x64xf32> -> vector<48x64xf32>
    %254 = vector.broadcast %162 : vector<1x64xf32> to vector<48x64xf32>
    %255 = arith.addf %253, %254 : vector<48x64xf32>
    %cst_75 = arith.constant 5.000000e-01 : f32
    %256 = vector.broadcast %cst_75 : f32 to vector<48x64xf32>
    %257 = arith.mulf %256, %255 : vector<48x64xf32>
    %cst_76 = arith.constant 4.471500e-02 : f32
    %258 = vector.broadcast %cst_76 : f32 to vector<48x64xf32>
    %259 = arith.mulf %258, %255 : vector<48x64xf32>
    %260 = arith.mulf %259, %255 : vector<48x64xf32>
    %261 = arith.mulf %260, %255 : vector<48x64xf32>
    %262 = arith.addf %255, %261 : vector<48x64xf32>
    %cst_77 = arith.constant 0.797884583 : f32
    %263 = vector.broadcast %cst_77 : f32 to vector<48x64xf32>
    %264 = arith.mulf %263, %262 : vector<48x64xf32>
    %265 = math.tanh %264 : vector<48x64xf32>
    %cst_78 = arith.constant 1.000000e+00 : f32
    %266 = vector.broadcast %cst_78 : f32 to vector<48x64xf32>
    %267 = arith.addf %266, %265 : vector<48x64xf32>
    %268 = arith.mulf %257, %267 : vector<48x64xf32>
    %c1_79 = arith.constant 1 : index
    %c0_80 = arith.constant 0 : index
    %c0_81 = arith.constant 0 : index
    %269 = vector.load %arg5[%c1_79, %c0_80, %c0_81] : memref<2x64x32xf32, #tpu.memory_space<vmem>>, vector<1x64x32xf32>
    %270 = vector.shape_cast %269 : vector<1x64x32xf32> to vector<64x32xf32>
    %cst_82 = arith.constant dense<0.000000e+00> : vector<48x32xf32>
    %271 = tpu.matmul %268, %270, %cst_82 {dimension_numbers = #tpu.dot_dimension_numbers<[1], [0], [0], [1], [0, 0, 1, 1], [], []>} : vector<48x64xf32>, vector<64x32xf32>, vector<48x32xf32> -> vector<48x32xf32>
    %272 = arith.addf %226, %271 : vector<48x32xf32>
    %273 = vector.broadcast %164 : vector<1x32xf32> to vector<48x32xf32>
    %274 = arith.addf %272, %273 : vector<48x32xf32>
    %c128 = arith.constant 128 : index
    %c0_83 = arith.constant 0 : index
    %275 = vector.load %arg6[%c128, %c0_83] : memref<136x256xf32, #tpu.memory_space<vmem>>, vector<2x32xf32>
    %276 = vector.extract_strided_slice %275 {offsets = [0, 0], sizes = [1, 32], strides = [1, 1]} : vector<2x32xf32> to vector<1x32xf32>
    %277 = vector.extract_strided_slice %275 {offsets = [1, 0], sizes = [1, 32], strides = [1, 1]} : vector<2x32xf32> to vector<1x32xf32>
    %cst_84 = arith.constant dense<0.000000e+00> : vector<48xf32>
    %278 = vector.multi_reduction <add>, %274, %cst_84 [1] : vector<48x32xf32> to vector<48xf32>
    %279 = vector.shape_cast %278 : vector<48xf32> to vector<48x1xf32>
    %cst_85 = arith.constant 3.200000e+01 : f32
    %280 = vector.broadcast %cst_85 : f32 to vector<48x1xf32>
    %281 = arith.divf %279, %280 : vector<48x1xf32>
    %282 = vector.broadcast %281 : vector<48x1xf32> to vector<48x32xf32>
    %283 = arith.subf %274, %282 : vector<48x32xf32>
    %284 = arith.mulf %283, %283 : vector<48x32xf32>
    %cst_86 = arith.constant dense<0.000000e+00> : vector<48xf32>
    %285 = vector.multi_reduction <add>, %284, %cst_86 [1] : vector<48x32xf32> to vector<48xf32>
    %286 = vector.shape_cast %285 : vector<48xf32> to vector<48x1xf32>
    %cst_87 = arith.constant 3.200000e+01 : f32
    %287 = vector.broadcast %cst_87 : f32 to vector<48x1xf32>
    %288 = arith.divf %286, %287 : vector<48x1xf32>
    %289 = vector.broadcast %281 : vector<48x1xf32> to vector<48x32xf32>
    %290 = arith.subf %274, %289 : vector<48x32xf32>
    %cst_88 = arith.constant 9.99999974E-6 : f32
    %291 = vector.broadcast %cst_88 : f32 to vector<48x1xf32>
    %292 = arith.addf %288, %291 : vector<48x1xf32>
    %293 = math.rsqrt %292 : vector<48x1xf32>
    %294 = vector.broadcast %293 : vector<48x1xf32> to vector<48x32xf32>
    %295 = arith.mulf %290, %294 : vector<48x32xf32>
    %296 = vector.broadcast %276 : vector<1x32xf32> to vector<48x32xf32>
    %297 = arith.mulf %295, %296 : vector<48x32xf32>
    %298 = vector.broadcast %277 : vector<1x32xf32> to vector<48x32xf32>
    %299 = arith.addf %297, %298 : vector<48x32xf32>
    %c32 = arith.constant 32 : index
    %c0_89 = arith.constant 0 : index
    %300 = vector.load %arg6[%c32, %c0_89] : memref<136x256xf32, #tpu.memory_space<vmem>>, vector<32x64xf32>
    %cst_90 = arith.constant dense<0.000000e+00> : vector<48x64xf32>
    %301 = tpu.matmul %299, %300, %cst_90 {dimension_numbers = #tpu.dot_dimension_numbers<[1], [0], [0], [1], [0, 0, 1, 1], [], []>} : vector<48x32xf32>, vector<32x64xf32>, vector<48x64xf32> -> vector<48x64xf32>
    %c130 = arith.constant 130 : index
    %c0_91 = arith.constant 0 : index
    %302 = vector.load %arg6[%c130, %c0_91] : memref<136x256xf32, #tpu.memory_space<vmem>>, vector<5x2xf32>
    %303 = vector.extract_strided_slice %302 {offsets = [0, 0], sizes = [5, 1], strides = [1, 1]} : vector<5x2xf32> to vector<5x1xf32>
    %304 = vector.extract_strided_slice %302 {offsets = [0, 1], sizes = [5, 1], strides = [1, 1]} : vector<5x2xf32> to vector<5x1xf32>
    %c0_92 = arith.constant 0 : index
    %c0_93 = arith.constant 0 : index
    %305 = vector.load %arg6[%c0_92, %c0_93] : memref<136x256xf32, #tpu.memory_space<vmem>>, vector<16x256xf32>
    %306 = vector.extract_strided_slice %301 {offsets = [0, 0], sizes = [16, 32], strides = [1, 1]} : vector<48x64xf32> to vector<16x32xf32>
    %307 = vector.extract_strided_slice %301 {offsets = [16, 32], sizes = [5, 32], strides = [1, 1]} : vector<48x64xf32> to vector<5x32xf32>
    %308 = arith.mulf %306, %306 : vector<16x32xf32>
    %cst_94 = arith.constant dense<0.000000e+00> : vector<16xf32>
    %309 = vector.multi_reduction <add>, %308, %cst_94 [1] : vector<16x32xf32> to vector<16xf32>
    %310 = vector.shape_cast %309 : vector<16xf32> to vector<16x1xf32>
    %311 = math.rsqrt %310 : vector<16x1xf32>
    %312 = vector.broadcast %311 : vector<16x1xf32> to vector<16x32xf32>
    %313 = arith.mulf %306, %312 : vector<16x32xf32>
    %314 = arith.mulf %307, %307 : vector<5x32xf32>
    %cst_95 = arith.constant dense<0.000000e+00> : vector<5xf32>
    %315 = vector.multi_reduction <add>, %314, %cst_95 [1] : vector<5x32xf32> to vector<5xf32>
    %316 = vector.shape_cast %315 : vector<5xf32> to vector<5x1xf32>
    %317 = math.rsqrt %316 : vector<5x1xf32>
    %318 = vector.broadcast %317 : vector<5x1xf32> to vector<5x32xf32>
    %319 = arith.mulf %307, %318 : vector<5x32xf32>
    %cst_96 = arith.constant dense<0.000000e+00> : vector<5x16xf32>
    %320 = tpu.matmul %319, %313, %cst_96 {dimension_numbers = #tpu.dot_dimension_numbers<[1], [1], [0], [0], [0, 0, 1, 0], [], []>} : vector<5x32xf32>, vector<16x32xf32>, vector<5x16xf32> -> vector<5x16xf32>
    %cst_97 = arith.constant dense<0.000000e+00> : vector<16xf32>
    %321 = vector.multi_reduction <add>, %320, %cst_97 [0] : vector<5x16xf32> to vector<16xf32>
    %322 = vector.shape_cast %321 : vector<16xf32> to vector<1x16xf32>
    %cst_98 = arith.constant 5.000000e+00 : f32
    %323 = vector.broadcast %cst_98 : f32 to vector<1x16xf32>
    %324 = arith.divf %322, %323 : vector<1x16xf32>
    %325 = vector.broadcast %324 : vector<1x16xf32> to vector<5x16xf32>
    %326 = arith.subf %320, %325 : vector<5x16xf32>
    %327 = arith.mulf %326, %326 : vector<5x16xf32>
    %cst_99 = arith.constant dense<0.000000e+00> : vector<16xf32>
    %328 = vector.multi_reduction <add>, %327, %cst_99 [0] : vector<5x16xf32> to vector<16xf32>
    %329 = vector.shape_cast %328 : vector<16xf32> to vector<1x16xf32>
    %cst_100 = arith.constant 5.000000e+00 : f32
    %330 = vector.broadcast %cst_100 : f32 to vector<1x16xf32>
    %331 = arith.divf %329, %330 : vector<1x16xf32>
    %332 = vector.broadcast %324 : vector<1x16xf32> to vector<5x16xf32>
    %333 = arith.subf %320, %332 : vector<5x16xf32>
    %cst_101 = arith.constant 9.99999974E-6 : f32
    %334 = vector.broadcast %cst_101 : f32 to vector<1x16xf32>
    %335 = arith.addf %331, %334 : vector<1x16xf32>
    %336 = math.rsqrt %335 : vector<1x16xf32>
    %337 = vector.broadcast %336 : vector<1x16xf32> to vector<5x16xf32>
    %338 = arith.mulf %333, %337 : vector<5x16xf32>
    %339 = vector.broadcast %303 : vector<5x1xf32> to vector<5x16xf32>
    %340 = arith.mulf %338, %339 : vector<5x16xf32>
    %341 = vector.broadcast %304 : vector<5x1xf32> to vector<5x16xf32>
    %342 = arith.addf %340, %341 : vector<5x16xf32>
    %343 = vector.extract_strided_slice %301 {offsets = [24, 0], sizes = [16, 32], strides = [1, 1]} : vector<48x64xf32> to vector<16x32xf32>
    %344 = vector.extract_strided_slice %301 {offsets = [40, 32], sizes = [5, 32], strides = [1, 1]} : vector<48x64xf32> to vector<5x32xf32>
    %345 = arith.mulf %343, %343 : vector<16x32xf32>
    %cst_102 = arith.constant dense<0.000000e+00> : vector<16xf32>
    %346 = vector.multi_reduction <add>, %345, %cst_102 [1] : vector<16x32xf32> to vector<16xf32>
    %347 = vector.shape_cast %346 : vector<16xf32> to vector<16x1xf32>
    %348 = math.rsqrt %347 : vector<16x1xf32>
    %349 = vector.broadcast %348 : vector<16x1xf32> to vector<16x32xf32>
    %350 = arith.mulf %343, %349 : vector<16x32xf32>
    %351 = arith.mulf %344, %344 : vector<5x32xf32>
    %cst_103 = arith.constant dense<0.000000e+00> : vector<5xf32>
    %352 = vector.multi_reduction <add>, %351, %cst_103 [1] : vector<5x32xf32> to vector<5xf32>
    %353 = vector.shape_cast %352 : vector<5xf32> to vector<5x1xf32>
    %354 = math.rsqrt %353 : vector<5x1xf32>
    %355 = vector.broadcast %354 : vector<5x1xf32> to vector<5x32xf32>
    %356 = arith.mulf %344, %355 : vector<5x32xf32>
    %cst_104 = arith.constant dense<0.000000e+00> : vector<5x16xf32>
    %357 = tpu.matmul %356, %350, %cst_104 {dimension_numbers = #tpu.dot_dimension_numbers<[1], [1], [0], [0], [0, 0, 1, 0], [], []>} : vector<5x32xf32>, vector<16x32xf32>, vector<5x16xf32> -> vector<5x16xf32>
    %cst_105 = arith.constant dense<0.000000e+00> : vector<16xf32>
    %358 = vector.multi_reduction <add>, %357, %cst_105 [0] : vector<5x16xf32> to vector<16xf32>
    %359 = vector.shape_cast %358 : vector<16xf32> to vector<1x16xf32>
    %cst_106 = arith.constant 5.000000e+00 : f32
    %360 = vector.broadcast %cst_106 : f32 to vector<1x16xf32>
    %361 = arith.divf %359, %360 : vector<1x16xf32>
    %362 = vector.broadcast %361 : vector<1x16xf32> to vector<5x16xf32>
    %363 = arith.subf %357, %362 : vector<5x16xf32>
    %364 = arith.mulf %363, %363 : vector<5x16xf32>
    %cst_107 = arith.constant dense<0.000000e+00> : vector<16xf32>
    %365 = vector.multi_reduction <add>, %364, %cst_107 [0] : vector<5x16xf32> to vector<16xf32>
    %366 = vector.shape_cast %365 : vector<16xf32> to vector<1x16xf32>
    %cst_108 = arith.constant 5.000000e+00 : f32
    %367 = vector.broadcast %cst_108 : f32 to vector<1x16xf32>
    %368 = arith.divf %366, %367 : vector<1x16xf32>
    %369 = vector.broadcast %361 : vector<1x16xf32> to vector<5x16xf32>
    %370 = arith.subf %357, %369 : vector<5x16xf32>
    %cst_109 = arith.constant 9.99999974E-6 : f32
    %371 = vector.broadcast %cst_109 : f32 to vector<1x16xf32>
    %372 = arith.addf %368, %371 : vector<1x16xf32>
    %373 = math.rsqrt %372 : vector<1x16xf32>
    %374 = vector.broadcast %373 : vector<1x16xf32> to vector<5x16xf32>
    %375 = arith.mulf %370, %374 : vector<5x16xf32>
    %376 = vector.broadcast %303 : vector<5x1xf32> to vector<5x16xf32>
    %377 = arith.mulf %375, %376 : vector<5x16xf32>
    %378 = vector.broadcast %304 : vector<5x1xf32> to vector<5x16xf32>
    %379 = arith.addf %377, %378 : vector<5x16xf32>
    %380 = tpu.concatenate %342, %379 in 0 : vector<5x16xf32>, vector<5x16xf32> -> vector<10x16xf32>
    %cst_110 = arith.constant dense<0.000000e+00> : vector<10x256xf32>
    %381 = tpu.matmul %380, %305, %cst_110 {dimension_numbers = #tpu.dot_dimension_numbers<[1], [0], [0], [1], [0, 0, 1, 1], [], []>} : vector<10x16xf32>, vector<16x256xf32>, vector<10x256xf32> -> vector<10x256xf32>
    %c0_111 = arith.constant 0 : index
    %c0_112 = arith.constant 0 : index
    %382 = vector.load %arg7[%c0_111, %c0_112] : memref<10x256xf32, #tpu.memory_space<vmem>>, vector<10x256xf32>
    tpu.vector_store %arg7[%c0_111, %c0_112], %381 {strides = array<i32>} : memref<10x256xf32, #tpu.memory_space<vmem>>, vector<10x256xf32>,
    return
  }
  func.func @transform_0(%arg0: i32) -> (i32, i32) {
    %c0_i32 = arith.constant 0 : i32
    %c0_i32_0 = arith.constant 0 : i32
    %c0_i32_1 = arith.constant 0 : i32
    return %c0_i32, %c0_i32_0 : i32, i32
  }
  func.func @transform_1(%arg0: i32) -> (i32, i32, i32) {
    %c0_i32 = arith.constant 0 : i32
    %c0_i32_0 = arith.constant 0 : i32
    %c0_i32_1 = arith.constant 0 : i32
    %c0_i32_2 = arith.constant 0 : i32
    return %c0_i32, %c0_i32_0, %c0_i32_1 : i32, i32, i32
  }
  func.func @transform_2(%arg0: i32) -> (i32, i32, i32) {
    %c0_i32 = arith.constant 0 : i32
    %c0_i32_0 = arith.constant 0 : i32
    %c0_i32_1 = arith.constant 0 : i32
    %c0_i32_2 = arith.constant 0 : i32
    return %c0_i32, %c0_i32_0, %c0_i32_1 : i32, i32, i32
  }
  func.func @transform_3(%arg0: i32) -> (i32, i32, i32) {
    %c0_i32 = arith.constant 0 : i32
    %c0_i32_0 = arith.constant 0 : i32
    %c0_i32_1 = arith.constant 0 : i32
    %c0_i32_2 = arith.constant 0 : i32
    return %c0_i32, %c0_i32_0, %c0_i32_1 : i32, i32, i32
  }
  func.func @transform_4(%arg0: i32) -> (i32, i32, i32) {
    %c0_i32 = arith.constant 0 : i32
    %c0_i32_0 = arith.constant 0 : i32
    %c0_i32_1 = arith.constant 0 : i32
    %c0_i32_2 = arith.constant 0 : i32
    return %c0_i32, %c0_i32_0, %c0_i32_1 : i32, i32, i32
  }
  func.func @transform_5(%arg0: i32) -> (i32, i32) {
    %c0_i32 = arith.constant 0 : i32
    %c0_i32_0 = arith.constant 0 : i32
    %c0_i32_1 = arith.constant 0 : i32
    return %c0_i32, %c0_i32_0 : i32, i32
  }
  func.func @transform_6(%arg0: i32) -> (i32, i32) {
    %c0_i32 = arith.constant 0 : i32
    %c0_i32_0 = arith.constant 0 : i32
    %c0_i32_1 = arith.constant 0 : i32
    return %c0_i32, %c0_i32_0 : i32, i32
  }
}

</mosaic_0001>

<llo_original>
// kernel: tpu_custom_call.1
$region0: #{tpu_custom_call.1}
  #allocation0 [shape = 'u32[]', space=smem, size = 0x4, offset = 0x4, fixed_abs, tag = 'smem constant byte address 0x4 - core index']
  #allocation1 [shape = 'u32[144,128]{1,0:T(1,128)}', space=vmem, size = 0x12000, scoped, tag = 'internal scratch']
  %s0 = inlined_call_operand.vmem [shape: f32[48,16], index: 0, kind: input, shape index: {}]
  %s1 = inlined_call_operand.hbm [shape: f32[2,32,96], index: 1, kind: input, shape index: {}]
  %s2 = inlined_call_operand.hbm [shape: f32[2,32,32], index: 2, kind: input, shape index: {}]
  %s3 = inlined_call_operand.hbm [shape: f32[2,32,64], index: 3, kind: input, shape index: {}]
  %s4 = inlined_call_operand.vmem [shape: f32[2,64,32], index: 4, kind: input, shape index: {}]
  %s5 = inlined_call_operand.vmem [shape: f32[136,256], index: 5, kind: input, shape index: {}]
  %s6 = inlined_call_operand.hbm [shape: f32[10,256], index: 6, kind: output, shape index: {}]
  %s7 = sld [smem:[#allocation0]]
  $region46: #{tpu_custom_call.1} parent=0
    _
  %s9 = ssub.s32 1, %s7
  %s10 = scalar_select 0, %s9, %s7
  $region1: #{tpu_custom_call.1} parent=0
    #allocation2 [shape = 'u8[32768]{0}', space=vmem, size = 0x8000, scoped, tag = 'input window, operand 1, single buffered']
    #allocation3 [shape = 's32[1]{0}', space=sflag, size = 0x4, scoped, tag = 'scoped memory for tpu_custom_call.1']
    #allocation4 [shape = 's32[1]{0}', space=sflag, size = 0x4, scoped, tag = 'scoped memory for tpu_custom_call.1']
    #allocation5 [shape = 'u8[32768]{0}', space=vmem, size = 0x8000, scoped, tag = 'input window, operand 2, single buffered']
    #allocation6 [shape = 's32[1]{0}', space=sflag, size = 0x4, scoped, tag = 'scoped memory for tpu_custom_call.1']
    #allocation7 [shape = 'u8[32768]{0}', space=vmem, size = 0x8000, scoped, tag = 'input window, operand 3, single buffered']
    #allocation8 [shape = 'u8[16384]{0}', space=vmem, size = 0x4000, scoped, tag = 'output window, operand 0, single buffered']
    %11 = vsyncpa [#allocation3], 0
    %12 = vsyncpa [#allocation6], 0
    %13 = vsyncpa [#allocation4], 0
    // Predicated region
    $region2: #{tpu_custom_call.1} parent=1 // pred_check
      _
    $region3: #{tpu_custom_call.1} parent=1 // pred_check_branch
      %15 = sbr.rel (0) target = $region5
    $region4: #{tpu_custom_call.1} parent=1 // pred_region
      _
    $region5: #{tpu_custom_call.1} parent=1 // pred_fallthru
      _
    // Predicated region
    $region6: #{tpu_custom_call.1} parent=1 // pred_check
      _
    $region7: #{tpu_custom_call.1} parent=1 // pred_check_branch
      %17 = sbr.rel (0) target = $region9
    $region8: #{tpu_custom_call.1} parent=1 // pred_region
      %s19 = ssub.s32 1024, 1024
      %20 = vsyncadd [#allocation3], %s19
      %s21 = sshll.u32 [#allocation2], 4
      %s22 = int_to_ptr.vmem [resolvable:$true] %s21
      %27 = dma.hbm_to_vmem [thread:$0]  %s1, 1024, %s22, [#allocation3], 128, 128, 8
    $region9: #{tpu_custom_call.1} parent=1 // pred_fallthru
      _
    // Predicated region
    $region10: #{tpu_custom_call.1} parent=1 // pred_check
      _
    $region11: #{tpu_custom_call.1} parent=1 // pred_check_branch
      %29 = sbr.rel (0) target = $region13
    $region12: #{tpu_custom_call.1} parent=1 // pred_region
      %s31 = ssub.s32 1024, 1024
      %32 = vsyncadd [#allocation6], %s31
      %s33 = sshll.u32 [#allocation5], 4
      %s34 = int_to_ptr.vmem [resolvable:$true] %s33
      %39 = dma.hbm_to_vmem [thread:$0]  %s2, 1024, %s34, [#allocation6], 128, 128, 8
    $region13: #{tpu_custom_call.1} parent=1 // pred_fallthru
      _
    // Predicated region
    $region14: #{tpu_custom_call.1} parent=1 // pred_check
      _
    $region15: #{tpu_custom_call.1} parent=1 // pred_check_branch
      %41 = sbr.rel (0) target = $region17
    $region16: #{tpu_custom_call.1} parent=1 // pred_region
      %s43 = ssub.s32 1024, 1024
      %44 = vsyncadd [#allocation6], %s43
      %s45 = sshll.u32 [#allocation7], 4
      %s46 = int_to_ptr.vmem [resolvable:$true] %s45
      %51 = dma.hbm_to_vmem [thread:$0]  %s3, 1024, %s46, [#allocation6], 128, 128, 8
    $region17: #{tpu_custom_call.1} parent=1 // pred_fallthru
      _
    // Predicated region
    $region18: #{tpu_custom_call.1} parent=1 // pred_check
      _
    $region19: #{tpu_custom_call.1} parent=1 // pred_check_branch
      %53 = sbr.rel (0) target = $region21
    $region20: #{tpu_custom_call.1} parent=1 // pred_region
      _
    $region21: #{tpu_custom_call.1} parent=1 // pred_fallthru
      _
    // Predicated region
    $region22: #{tpu_custom_call.1} parent=1 // pred_check
      _
    $region23: #{tpu_custom_call.1} parent=1 // pred_check_branch
      %55 = sbr.rel (0) target = $region25
    $region24: #{tpu_custom_call.1} parent=1 // pred_region
      _
    $region25: #{tpu_custom_call.1} parent=1 // pred_fallthru
      _
    // Predicated region
    $region26: #{tpu_custom_call.1} parent=1 // pred_check
      _
    $region27: #{tpu_custom_call.1} parent=1 // pred_check_branch
      %57 = sbr.rel (0) target = $region29
    $region28: #{tpu_custom_call.1} parent=1 // pred_region
      %58 = dma.done [#allocation3], 1024
    $region29: #{tpu_custom_call.1} parent=1 // pred_fallthru
      _
    // Predicated region
    $region30: #{tpu_custom_call.1} parent=1 // pred_check
      _
    $region31: #{tpu_custom_call.1} parent=1 // pred_check_branch
      %60 = sbr.rel (0) target = $region33
    $region32: #{tpu_custom_call.1} parent=1 // pred_region
      %61 = dma.done [#allocation6], 1024
    $region33: #{tpu_custom_call.1} parent=1 // pred_fallthru
      _
    // Predicated region
    $region34: #{tpu_custom_call.1} parent=1 // pred_check
      _
    $region35: #{tpu_custom_call.1} parent=1 // pred_check_branch
      %63 = sbr.rel (0) target = $region37
    $region36: #{tpu_custom_call.1} parent=1 // pred_region
      %64 = dma.done [#allocation6], 1024
    $region37: #{tpu_custom_call.1} parent=1 // pred_fallthru
      _
    %v65 = vld [vmem:[%s5 + $0x20] sm:$0xff]
    %v66 = vld [vmem:[%s5 + $0x30] sm:$0xff]
    %v67 = vld [vmem:[%s5 + $0x80] sm:$0xff]
    %v68 = vld [vmem:[%s5 + $0x90] sm:$0xff]
    %v69 = vld [vmem:[%s5 + $0xa0] sm:$0xff]
    %v70 = vld [vmem:[%s5 + $0xb0] sm:$0xff]
    %v71 = vld [vmem:[%s5 + $0xc0] sm:$0xff]
    %v72 = vld [vmem:[%s5 + $0xd0] sm:$0xff]
    %v73 = vld [vmem:[%s0] sm:$0xff]
    %v74 = vld [vmem:[%s0 + $0x8] sm:$0xff]
    %v75 = vld [vmem:[%s0 + $0x10] sm:$0xff]
    %v76 = vld [vmem:[%s0 + $0x18] sm:$0xff]
    %v77 = vld [vmem:[%s0 + $0x20] sm:$0xff]
    %v78 = vld [vmem:[%s0 + $0x28] sm:$0xff]
    %vm79 = vcmask 130048
    %v81 = vsel %vm79, %v73, 0
    %v84 = vsel %vm79, %v74, 0
    %v87 = vsel %vm79, %v75, 0
    %v90 = vsel %vm79, %v76, 0
    %v93 = vsel %vm79, %v77, 0
    %v96 = vsel %vm79, %v78, 0
    %98 = vmatprep.subr.mxu0 0.0
    %99 = vmatpush1.msra.mxu0 %v65
    %100 = vmatprep.subr.mxu0 0.0
    %101 = vmatpush1.msra.mxu0 %v66
    %102 = vmatprep.subr.mxu0 0.0
    %103 = vmatpush1.msra.mxu0 0.0
    %104 = vmatprep.subr.mxu0 0.0
    %105 = vmatpush1.msra.mxu0 0.0
    %106 = vmatprep.subr.mxu0 0.0
    %107 = vmatpush1.msra.mxu0 0.0
    %108 = vmatprep.subr.mxu0 0.0
    %109 = vmatpush1.msra.mxu0 0.0
    %110 = vmatprep.subr.mxu0 0.0
    %111 = vmatpush1.msra.mxu0 0.0
    %112 = vmatprep.subr.mxu0 0.0
    %113 = vmatpush1.msra.mxu0 0.0
    %114 = vmatprep.subr.mxu0 0.0
    %115 = vmatpush1.msra.mxu0 0.0
    %116 = vmatprep.subr.mxu0 0.0
    %117 = vmatpush1.msra.mxu0 0.0
    %118 = vmatprep.subr.mxu0 0.0
    %119 = vmatpush1.msra.mxu0 0.0
    %120 = vmatprep.subr.mxu0 0.0
    %121 = vmatpush1.msra.mxu0 0.0
    %122 = vmatprep.subr.mxu0 0.0
    %123 = vmatpush1.msra.mxu0 0.0
    %124 = vmatprep.subr.mxu0 0.0
    %125 = vmatpush1.msra.mxu0 0.0
    %126 = vmatprep.subr.mxu0 0.0
    %127 = vmatpush1.msra.mxu0 0.0
    %128 = vmatprep.subr.mxu0 0.0
    %129 = vmatpush1.msra.mxu0 0.0
    %130 = vmatprep.subr.mxu0 0.0
    %131 = vmatpush1.msra.mxu0 0.0
    %132 = vmatprep.subr.mxu0 0.0
    %133 = vmatpush1.msra.mxu0 0.0
    %134 = vmatprep.subr.mxu0 0.0
    %135 = vmatpush1.msra.mxu0 0.0
    %136 = vmatprep.subr.mxu0 0.0
    %137 = vmatpush1.msra.mxu0 0.0
    %138 = vmatprep.subr.mxu0 0.0
    %139 = vmatpush1.msra.mxu0 0.0
    %140 = vmatprep.subr.mxu0 0.0
    %141 = vmatpush1.msra.mxu0 0.0
    %142 = vmatprep.subr.mxu0 0.0
    %143 = vmatpush1.msra.mxu0 0.0
    %144 = vmatprep.subr.mxu0 0.0
    %145 = vmatpush1.msra.mxu0 0.0
    %146 = vmatprep.subr.mxu0 0.0
    %147 = vmatpush1.msra.mxu0 0.0
    %148 = vmatprep.subr.mxu0 0.0
    %149 = vmatpush1.msra.mxu0 0.0
    %150 = vmatprep.subr.mxu0 0.0
    %151 = vmatpush1.msra.mxu0 0.0
    %152 = vmatprep.subr.mxu0 0.0
    %153 = vmatpush1.msra.mxu0 0.0
    %154 = vmatprep.subr.mxu0 0.0
    %155 = vmatpush1.msra.mxu0 0.0
    %156 = vmatprep.subr.mxu0 0.0
    %157 = vmatpush1.msra.mxu0 0.0
    %158 = vmatprep.subr.mxu0 0.0
    %159 = vmatpush1.msra.mxu0 0.0
    %160 = vmatprep.subr.mxu0 0.0
    %161 = vmatpush1.msra.mxu0 0.0
    %162 = vmatprep.mubr.f32.mxu0 0.0
    %163 = vmatmul.mubr.f32.gmra.mrb[0].mxu0 %v81
    %v164 = vpop.f32.mrb[0].mxu0
    %v165 = vadd.f32 %v67, %v164
    %v166 = vpop.f32.mrb[0].mxu0
    %167 = vmatprep.mubr.f32.mxu0 0.0
    %168 = vmatmul.mubr.f32.gmra.mrb[0].mxu0 %v84
    %v169 = vpop.f32.mrb[0].mxu0
    %v170 = vadd.f32 %v68, %v169
    %v171 = vpop.f32.mrb[0].mxu0
    %172 = vmatprep.mubr.f32.mxu0 0.0
    %173 = vmatmul.mubr.f32.gmra.mrb[0].mxu0 %v87
    %v174 = vpop.f32.mrb[0].mxu0
    %v175 = vadd.f32 %v69, %v174
    %v176 = vpop.f32.mrb[0].mxu0
    %177 = vmatprep.mubr.f32.mxu0 0.0
    %178 = vmatmul.mubr.f32.gmra.mrb[0].mxu0 %v90
    %v179 = vpop.f32.mrb[0].mxu0
    %v180 = vadd.f32 %v70, %v179
    %v181 = vpop.f32.mrb[0].mxu0
    %182 = vmatprep.mubr.f32.mxu0 0.0
    %183 = vmatmul.mubr.f32.gmra.mrb[0].mxu0 %v93
    %v184 = vpop.f32.mrb[0].mxu0
    %v185 = vadd.f32 %v71, %v184
    %v186 = vpop.f32.mrb[0].mxu0
    %187 = vmatprep.mubr.f32.mxu0 0.0
    %188 = vmatmul.mubr.f32.gmra.mrb[0].mxu0 %v96
    %v189 = vpop.f32.mrb[0].mxu0
    %v190 = vadd.f32 %v72, %v189
    %v191 = vpop.f32.mrb[0].mxu0
    %192 = vdwg.mxu0
    %v193 = vlaneseq
    %v194 = vshrl.u32 %v193, 7
    %v195 = vadd.s32 %v194, 8
    %v196 = vadd.s32 %v194, 16
    %v197 = vadd.s32 %v194, 24
    %v198 = vadd.s32 %v194, 32
    %v199 = vadd.s32 %v194, 40
    %v200 = vadd.s32 %v194, 48
    %v201 = vadd.s32 %v194, 56
    %v202 = vadd.s32 %v194, 64
    %v203 = vadd.s32 %v194, 72
    %v204 = vadd.s32 %v194, 80
    %v205 = vadd.s32 %v194, 88
    %v206 = vlaneseq
    %v207 = vand.u32 %v206, 127
    %vm208 = vcmp.ge.s32.totalorder %v194, 24
    %vm209 = vcmp.ge.s32.totalorder %v195, 24
    %vm210 = vcmp.ge.s32.totalorder %v196, 24
    %vm211 = vcmp.ge.s32.totalorder %v197, 24
    %vm212 = vcmp.ge.s32.totalorder %v198, 24
    %vm213 = vcmp.ge.s32.totalorder %v199, 24
    %vm214 = vcmp.ge.s32.totalorder %v200, 24
    %vm215 = vcmp.ge.s32.totalorder %v201, 24
    %vm216 = vcmp.ge.s32.totalorder %v202, 24
    %vm217 = vcmp.ge.s32.totalorder %v203, 24
    %vm218 = vcmp.ge.s32.totalorder %v204, 24
    %vm219 = vcmp.ge.s32.totalorder %v205, 24
    %v220 = vsel %vm208, 1, 0
    %v221 = vsel %vm209, 1, 0
    %v222 = vsel %vm210, 1, 0
    %v223 = vsel %vm211, 1, 0
    %v224 = vsel %vm212, 1, 0
    %v225 = vsel %vm213, 1, 0
    %v226 = vsel %vm214, 1, 0
    %v227 = vsel %vm215, 1, 0
    %v228 = vsel %vm216, 1, 0
    %v229 = vsel %vm217, 1, 0
    %v230 = vsel %vm218, 1, 0
    %v231 = vsel %vm219, 1, 0
    %vm232 = vcmp.ge.s32.totalorder %v207, 24
    %v233 = vsel %vm232, 1, 0
    %vm234 = vcmp.ge.s32.totalorder %v194, 48
    %vm235 = vcmp.ge.s32.totalorder %v195, 48
    %vm236 = vcmp.ge.s32.totalorder %v196, 48
    %vm237 = vcmp.ge.s32.totalorder %v197, 48
    %vm238 = vcmp.ge.s32.totalorder %v198, 48
    %vm239 = vcmp.ge.s32.totalorder %v199, 48
    %vm240 = vcmp.ge.s32.totalorder %v200, 48
    %vm241 = vcmp.ge.s32.totalorder %v201, 48
    %vm242 = vcmp.ge.s32.totalorder %v202, 48
    %vm243 = vcmp.ge.s32.totalorder %v203, 48
    %vm244 = vcmp.ge.s32.totalorder %v204, 48
    %vm245 = vcmp.ge.s32.totalorder %v205, 48
    %v246 = vsel %vm234, 1, 0
    %v247 = vsel %vm235, 1, 0
    %v248 = vsel %vm236, 1, 0
    %v249 = vsel %vm237, 1, 0
    %v250 = vsel %vm238, 1, 0
    %v251 = vsel %vm239, 1, 0
    %v252 = vsel %vm240, 1, 0
    %v253 = vsel %vm241, 1, 0
    %v254 = vsel %vm242, 1, 0
    %v255 = vsel %vm243, 1, 0
    %v256 = vsel %vm244, 1, 0
    %v257 = vsel %vm245, 1, 0
    %v258 = vadd.s32 %v220, %v246
    %v259 = vadd.s32 %v221, %v247
    %v260 = vadd.s32 %v222, %v248
    %v261 = vadd.s32 %v223, %v249
    %v262 = vadd.s32 %v224, %v250
    %v263 = vadd.s32 %v225, %v251
    %v264 = vadd.s32 %v226, %v252
    %v265 = vadd.s32 %v227, %v253
    %v266 = vadd.s32 %v228, %v254
    %v267 = vadd.s32 %v229, %v255
    %v268 = vadd.s32 %v230, %v256
    %v269 = vadd.s32 %v231, %v257
    %vm270 = vcmp.ge.s32.totalorder %v207, 48
    %v271 = vsel %vm270, 1, 0
    %v272 = vadd.s32 %v233, %v271
    %vm273 = vcmp.ge.s32.totalorder %v194, 72
    %vm274 = vcmp.ge.s32.totalorder %v195, 72
    %vm275 = vcmp.ge.s32.totalorder %v196, 72
    %vm276 = vcmp.ge.s32.totalorder %v197, 72
    %vm277 = vcmp.ge.s32.totalorder %v198, 72
    %vm278 = vcmp.ge.s32.totalorder %v199, 72
    %vm279 = vcmp.ge.s32.totalorder %v200, 72
    %vm280 = vcmp.ge.s32.totalorder %v201, 72
    %vm281 = vcmp.ge.s32.totalorder %v202, 72
    %vm282 = vcmp.ge.s32.totalorder %v203, 72
    %vm283 = vcmp.ge.s32.totalorder %v204, 72
    %vm284 = vcmp.ge.s32.totalorder %v205, 72
    %v285 = vsel %vm273, 1, 0
    %v286 = vsel %vm274, 1, 0
    %v287 = vsel %vm275, 1, 0
    %v288 = vsel %vm276, 1, 0
    %v289 = vsel %vm277, 1, 0
    %v290 = vsel %vm278, 1, 0
    %v291 = vsel %vm279, 1, 0
    %v292 = vsel %vm280, 1, 0
    %v293 = vsel %vm281, 1, 0
    %v294 = vsel %vm282, 1, 0
    %v295 = vsel %vm283, 1, 0
    %v296 = vsel %vm284, 1, 0
    %v297 = vadd.s32 %v258, %v285
    %v298 = vadd.s32 %v259, %v286
    %v299 = vadd.s32 %v260, %v287
    %v300 = vadd.s32 %v261, %v288
    %v301 = vadd.s32 %v262, %v289
    %v302 = vadd.s32 %v263, %v290
    %v303 = vadd.s32 %v264, %v291
    %v304 = vadd.s32 %v265, %v292
    %v305 = vadd.s32 %v266, %v293
    %v306 = vadd.s32 %v267, %v294
    %v307 = vadd.s32 %v268, %v295
    %v308 = vadd.s32 %v269, %v296
    %vm309 = vcmp.ge.s32.totalorder %v207, 72
    %v310 = vsel %vm309, 1, 0
    %v311 = vadd.s32 %v272, %v310
    %v312 = vmul.u32 %v311, 24
    %v313 = vsub.s32 %v207, %v312
    %vm314 = vcmp.lt.s32.totalorder %v313, 21
    %vm315 = vcmp.eq.s32.totalorder %v297, %v311
    %vm316 = vcmp.eq.s32.totalorder %v298, %v311
    %vm317 = vcmp.eq.s32.totalorder %v299, %v311
    %vm318 = vcmp.eq.s32.totalorder %v300, %v311
    %vm319 = vcmp.eq.s32.totalorder %v301, %v311
    %vm320 = vcmp.eq.s32.totalorder %v302, %v311
    %vm321 = vcmp.eq.s32.totalorder %v303, %v311
    %vm322 = vcmp.eq.s32.totalorder %v304, %v311
    %vm323 = vcmp.eq.s32.totalorder %v305, %v311
    %vm324 = vcmp.eq.s32.totalorder %v306, %v311
    %vm325 = vcmp.eq.s32.totalorder %v307, %v311
    %vm326 = vcmp.eq.s32.totalorder %v308, %v311
    %vm327 = vmand %vm315, %vm314
    %vm328 = vmand %vm316, %vm314
    %vm329 = vmand %vm317, %vm314
    %vm330 = vmand %vm318, %vm314
    %vm331 = vmand %vm319, %vm314
    %vm332 = vmand %vm320, %vm314
    %vm333 = vmand %vm321, %vm314
    %vm334 = vmand %vm322, %vm314
    %vm335 = vmand %vm323, %vm314
    %vm336 = vmand %vm324, %vm314
    %vm337 = vmand %vm325, %vm314
    %vm338 = vmand %vm326, %vm314
    %v339 = vsel %vm327, 0.0, -1e+30
    %v340 = vsel %vm328, 0.0, -1e+30
    %v341 = vsel %vm329, 0.0, -1e+30
    %v342 = vsel %vm330, 0.0, -1e+30
    %v343 = vsel %vm331, 0.0, -1e+30
    %v344 = vsel %vm332, 0.0, -1e+30
    %v345 = vsel %vm333, 0.0, -1e+30
    %v346 = vsel %vm334, 0.0, -1e+30
    %v347 = vsel %vm335, 0.0, -1e+30
    %v348 = vsel %vm336, 0.0, -1e+30
    %v349 = vsel %vm337, 0.0, -1e+30
    %v350 = vsel %vm338, 0.0, -1e+30
    %v351 = vld [vmem:[%s5 + $0xe0] sm:$0xf]
    %v352 = vld [vmem:[%s5 + $0xf0] sm:$0xf]
    %vm353 = vcmask 261120
    %v354 = vsel %vm353, %v165, 0.0
    %355 = vadd.xlane.f32.xlu0 %v354
    %v356 = vpop.xlane.xlu0 %355
    %v357 = vsel %vm353, %v170, 0.0
    %358 = vadd.xlane.f32.xlu0 %v357
    %v359 = vpop.xlane.xlu0 %358
    %v360 = vsel %vm353, %v175, 0.0
    %361 = vadd.xlane.f32.xlu0 %v360
    %v362 = vpop.xlane.xlu0 %361
    %v363 = vsel %vm353, %v180, 0.0
    %364 = vadd.xlane.f32.xlu0 %v363
    %v365 = vpop.xlane.xlu0 %364
    %v366 = vsel %vm353, %v185, 0.0
    %367 = vadd.xlane.f32.xlu0 %v366
    %v368 = vpop.xlane.xlu0 %367
    %v369 = vsel %vm353, %v190, 0.0
    %370 = vadd.xlane.f32.xlu0 %v369
    %v371 = vpop.xlane.xlu0 %370
    %v372 = vrcp.pop 32.0
    %v373 = vmul.f32 %v356, %v372
    %v374 = vmul.f32 %v359, %v372
    %v375 = vmul.f32 %v362, %v372
    %v376 = vmul.f32 %v365, %v372
    %v377 = vmul.f32 %v368, %v372
    %v378 = vmul.f32 %v371, %v372
    %v379 = vsub.f32 %v165, %v373
    %v380 = vsub.f32 %v170, %v374
    %v381 = vsub.f32 %v175, %v375
    %v382 = vsub.f32 %v180, %v376
    %v383 = vsub.f32 %v185, %v377
    %v384 = vsub.f32 %v190, %v378
    %v385 = vmul.f32 %v379, %v379
    %v386 = vmul.f32 %v380, %v380
    %v387 = vmul.f32 %v381, %v381
    %v388 = vmul.f32 %v382, %v382
    %v389 = vmul.f32 %v383, %v383
    %v390 = vmul.f32 %v384, %v384
    %v391 = vsel %vm353, %v385, 0.0
    %392 = vadd.xlane.f32.xlu0 %v391
    %v393 = vpop.xlane.xlu0 %392
    %v394 = vsel %vm353, %v386, 0.0
    %395 = vadd.xlane.f32.xlu0 %v394
    %v396 = vpop.xlane.xlu0 %395
    %v397 = vsel %vm353, %v387, 0.0
    %398 = vadd.xlane.f32.xlu0 %v397
    %v399 = vpop.xlane.xlu0 %398
    %v400 = vsel %vm353, %v388, 0.0
    %401 = vadd.xlane.f32.xlu0 %v400
    %v402 = vpop.xlane.xlu0 %401
    %v403 = vsel %vm353, %v389, 0.0
    %404 = vadd.xlane.f32.xlu0 %v403
    %v405 = vpop.xlane.xlu0 %404
    %v406 = vsel %vm353, %v390, 0.0
    %407 = vadd.xlane.f32.xlu0 %v406
    %v408 = vpop.xlane.xlu0 %407
    %v409 = vmul.f32 %v393, %v372
    %v410 = vmul.f32 %v396, %v372
    %v411 = vmul.f32 %v399, %v372
    %v412 = vmul.f32 %v402, %v372
    %v413 = vmul.f32 %v405, %v372
    %v414 = vmul.f32 %v408, %v372
    %v415 = vadd.f32 %v409, 1e-05
    %v416 = vadd.f32 %v410, 1e-05
    %v417 = vadd.f32 %v411, 1e-05
    %v418 = vadd.f32 %v412, 1e-05
    %v419 = vadd.f32 %v413, 1e-05
    %v420 = vadd.f32 %v414, 1e-05
    %v421 = vrsqrt.pop %v415
    %v422 = vrsqrt.pop %v416
    %v423 = vrsqrt.pop %v417
    %v424 = vrsqrt.pop %v418
    %v425 = vrsqrt.pop %v419
    %v426 = vrsqrt.pop %v420
    %v427 = vmul.f32 %v379, %v421
    %v428 = vmul.f32 %v380, %v422
    %v429 = vmul.f32 %v381, %v423
    %v430 = vmul.f32 %v382, %v424
    %v431 = vmul.f32 %v383, %v425
    %v432 = vmul.f32 %v384, %v426
    %v433 = vlaneseq
    %v434 = vshrl.u32 %v433, 7
    %v435 = vsub.s32 0, %v434
    %v436 = vrot.slane %v351, %v435
    %v437 = vmul.f32 %v427, %v436
    %v438 = vmul.f32 %v428, %v436
    %v439 = vmul.f32 %v429, %v436
    %v440 = vmul.f32 %v430, %v436
    %v441 = vmul.f32 %v431, %v436
    %v442 = vmul.f32 %v432, %v436
    %v443 = vlaneseq
    %v444 = vshrl.u32 %v443, 7
    %v445 = vsub.s32 1, %v444
    %v446 = vrot.slane %v351, %v445
    %v447 = vadd.f32 %v437, %v446
    %v448 = vadd.f32 %v438, %v446
    %v449 = vadd.f32 %v439, %v446
    %v450 = vadd.f32 %v440, %v446
    %v451 = vadd.f32 %v441, %v446
    %v452 = vadd.f32 %v442, %v446
    %v453 = vld [vmem:[#allocation2] sm:$0xff]
    %v454 = vld [vmem:[#allocation2 + $0x8] sm:$0xff]
    %v455 = vld [vmem:[#allocation2 + $0x10] sm:$0xff]
    %v456 = vld [vmem:[#allocation2 + $0x18] sm:$0xff]
    %v457 = vlaneseq
    %v458 = vshrl.u32 %v457, 7
    %v459 = vsub.s32 0, %v458
    %v460 = vrot.slane %v352, %v459
    %v462 = vsel %vm353, %v447, 0
    %v465 = vsel %vm353, %v448, 0
    %v468 = vsel %vm353, %v449, 0
    %v471 = vsel %vm353, %v450, 0
    %v474 = vsel %vm353, %v451, 0
    %v477 = vsel %vm353, %v452, 0
    %479 = vmatprep.subr.mxu0 0.0
    %480 = vmatpush1.msra.mxu0 %v453
    %481 = vmatprep.subr.mxu0 0.0
    %482 = vmatpush1.msra.mxu0 %v454
    %483 = vmatprep.subr.mxu0 0.0
    %484 = vmatpush1.msra.mxu0 %v455
    %485 = vmatprep.subr.mxu0 0.0
    %486 = vmatpush1.msra.mxu0 %v456
    %487 = vmatprep.subr.mxu0 0.0
    %488 = vmatpush1.msra.mxu0 0.0
    %489 = vmatprep.subr.mxu0 0.0
    %490 = vmatpush1.msra.mxu0 0.0
    %491 = vmatprep.subr.mxu0 0.0
    %492 = vmatpush1.msra.mxu0 0.0
    %493 = vmatprep.subr.mxu0 0.0
    %494 = vmatpush1.msra.mxu0 0.0
    %495 = vmatprep.subr.mxu0 0.0
    %496 = vmatpush1.msra.mxu0 0.0
    %497 = vmatprep.subr.mxu0 0.0
    %498 = vmatpush1.msra.mxu0 0.0
    %499 = vmatprep.subr.mxu0 0.0
    %500 = vmatpush1.msra.mxu0 0.0
    %501 = vmatprep.subr.mxu0 0.0
    %502 = vmatpush1.msra.mxu0 0.0
    %503 = vmatprep.subr.mxu0 0.0
    %504 = vmatpush1.msra.mxu0 0.0
    %505 = vmatprep.subr.mxu0 0.0
    %506 = vmatpush1.msra.mxu0 0.0
    %507 = vmatprep.subr.mxu0 0.0
    %508 = vmatpush1.msra.mxu0 0.0
    %509 = vmatprep.subr.mxu0 0.0
    %510 = vmatpush1.msra.mxu0 0.0
    %511 = vmatprep.subr.mxu0 0.0
    %512 = vmatpush1.msra.mxu0 0.0
    %513 = vmatprep.subr.mxu0 0.0
    %514 = vmatpush1.msra.mxu0 0.0
    %515 = vmatprep.subr.mxu0 0.0
    %516 = vmatpush1.msra.mxu0 0.0
    %517 = vmatprep.subr.mxu0 0.0
    %518 = vmatpush1.msra.mxu0 0.0
    %519 = vmatprep.subr.mxu0 0.0
    %520 = vmatpush1.msra.mxu0 0.0
    %521 = vmatprep.subr.mxu0 0.0
    %522 = vmatpush1.msra.mxu0 0.0
    %523 = vmatprep.subr.mxu0 0.0
    %524 = vmatpush1.msra.mxu0 0.0
    %525 = vmatprep.subr.mxu0 0.0
    %526 = vmatpush1.msra.mxu0 0.0
    %527 = vmatprep.subr.mxu0 0.0
    %528 = vmatpush1.msra.mxu0 0.0
    %529 = vmatprep.subr.mxu0 0.0
    %530 = vmatpush1.msra.mxu0 0.0
    %531 = vmatprep.subr.mxu0 0.0
    %532 = vmatpush1.msra.mxu0 0.0
    %533 = vmatprep.subr.mxu0 0.0
    %534 = vmatpush1.msra.mxu0 0.0
    %535 = vmatprep.subr.mxu0 0.0
    %536 = vmatpush1.msra.mxu0 0.0
    %537 = vmatprep.subr.mxu0 0.0
    %538 = vmatpush1.msra.mxu0 0.0
    %539 = vmatprep.subr.mxu0 0.0
    %540 = vmatpush1.msra.mxu0 0.0
    %541 = vmatprep.subr.mxu0 0.0
    %542 = vmatpush1.msra.mxu0 0.0
    %543 = vmatprep.mubr.f32.mxu0 0.0
    %544 = vmatmul.mubr.f32.gmra.mrb[0].mxu0 %v462
    %v545 = vpop.f32.mrb[0].mxu0
    %v546 = vadd.f32 %v460, %v545
    %v547 = vpop.f32.mrb[0].mxu0
    %548 = vmatprep.mubr.f32.mxu0 0.0
    %549 = vmatmul.mubr.f32.gmra.mrb[0].mxu0 %v465
    %v550 = vpop.f32.mrb[0].mxu0
    %v551 = vadd.f32 %v460, %v550
    %v552 = vpop.f32.mrb[0].mxu0
    %553 = vmatprep.mubr.f32.mxu0 0.0
    %554 = vmatmul.mubr.f32.gmra.mrb[0].mxu0 %v468
    %v555 = vpop.f32.mrb[0].mxu0
    %v556 = vadd.f32 %v460, %v555
    %v557 = vpop.f32.mrb[0].mxu0
    %558 = vmatprep.mubr.f32.mxu0 0.0
    %559 = vmatmul.mubr.f32.gmra.mrb[0].mxu0 %v471
    %v560 = vpop.f32.mrb[0].mxu0
    %v561 = vadd.f32 %v460, %v560
    %v562 = vpop.f32.mrb[0].mxu0
    %563 = vmatprep.mubr.f32.mxu0 0.0
    %564 = vmatmul.mubr.f32.gmra.mrb[0].mxu0 %v474
    %v565 = vpop.f32.mrb[0].mxu0
    %v566 = vadd.f32 %v460, %v565
    %v567 = vpop.f32.mrb[0].mxu0
    %568 = vmatprep.mubr.f32.mxu0 0.0
    %569 = vmatmul.mubr.f32.gmra.mrb[0].mxu0 %v477
    %v570 = vpop.f32.mrb[0].mxu0
    %v571 = vadd.f32 %v460, %v570
    %v572 = vpop.f32.mrb[0].mxu0
    %573 = vdwg.mxu0
    %580 = vrot.lane.b32.xlu0 %v546, 112
    %v581 = vpop.permute.xlu0 %580
    %582 = vrot.lane.b32.xlu0 %v551, 112
    %v583 = vpop.permute.xlu0 %582
    %584 = vrot.lane.b32.xlu0 %v556, 112
    %v585 = vpop.permute.xlu0 %584
    %586 = vrot.lane.b32.xlu0 %v561, 112
    %v587 = vpop.permute.xlu0 %586
    %588 = vrot.lane.b32.xlu0 %v566, 112
    %v589 = vpop.permute.xlu0 %588
    %590 = vrot.lane.b32.xlu0 %v571, 112
    %v591 = vpop.permute.xlu0 %590
    %592 = vrot.lane.b32.xlu0 %v546, 96
    %v593 = vpop.permute.xlu0 %592
    %594 = vrot.lane.b32.xlu0 %v551, 96
    %v595 = vpop.permute.xlu0 %594
    %596 = vrot.lane.b32.xlu0 %v556, 96
    %v597 = vpop.permute.xlu0 %596
    %598 = vrot.lane.b32.xlu0 %v561, 96
    %v599 = vpop.permute.xlu0 %598
    %600 = vrot.lane.b32.xlu0 %v566, 96
    %v601 = vpop.permute.xlu0 %600
    %602 = vrot.lane.b32.xlu0 %v571, 96
    %v603 = vpop.permute.xlu0 %602
    %604 = vrot.lane.b32.xlu0 %v581, 96
    %v605 = vpop.permute.xlu0 %604
    %606 = vrot.lane.b32.xlu0 %v583, 96
    %v607 = vpop.permute.xlu0 %606
    %608 = vrot.lane.b32.xlu0 %v585, 96
    %v609 = vpop.permute.xlu0 %608
    %610 = vrot.lane.b32.xlu0 %v587, 96
    %v611 = vpop.permute.xlu0 %610
    %612 = vrot.lane.b32.xlu0 %v589, 96
    %v613 = vpop.permute.xlu0 %612
    %614 = vrot.lane.b32.xlu0 %v591, 96
    %v615 = vpop.permute.xlu0 %614
    %v616 = vsel %vm79, %v546, 0
    %v618 = vsel %vm79, %v551, 0
    %v620 = vsel %vm79, %v556, 0
    %v622 = vsel %vm79, %v561, 0
    %v624 = vsel %vm79, %v566, 0
    %v626 = vsel %vm79, %v571, 0
    %v628 = vsel %vm79, %v581, 0
    %v630 = vsel %vm79, %v583, 0
    %v632 = vsel %vm79, %v585, 0
    %v634 = vsel %vm79, %v587, 0
    %v636 = vsel %vm79, %v589, 0
    %v638 = vsel %vm79, %v591, 0
    %v640 = vsel %vm79, %v593, 0
    %v642 = vsel %vm79, %v595, 0
    %v644 = vsel %vm79, %v597, 0
    %v646 = vsel %vm79, %v599, 0
    %v648 = vsel %vm79, %v601, 0
    %v650 = vsel %vm79, %v603, 0
    %v652 = vsel %vm79, %v605, 0
    %v654 = vsel %vm79, %v607, 0
    %v656 = vsel %vm79, %v609, 0
    %v658 = vsel %vm79, %v611, 0
    %v660 = vsel %vm79, %v613, 0
    %v662 = vsel %vm79, %v615, 0
    %664 = vmatprep.subr.mxu0 0.0
    %665 = vmatpush1.xpose.msra.mxu0 %v640
    %666 = vmatprep.subr.mxu0 0.0
    %667 = vmatpush1.xpose.msra.mxu0 %v642
    %668 = vmatprep.subr.mxu0 0.0
    %669 = vmatpush1.xpose.msra.mxu0 %v644
    %670 = vmatprep.subr.mxu0 0.0
    %671 = vmatpush1.xpose.msra.mxu0 %v646
    %672 = vmatprep.subr.mxu0 0.0
    %673 = vmatpush1.xpose.msra.mxu0 %v648
    %674 = vmatprep.subr.mxu0 0.0
    %675 = vmatpush1.xpose.msra.mxu0 %v650
    %676 = vmatprep.subr.mxu0 0.0
    %677 = vmatpush1.xpose.msra.mxu0 %v652
    %678 = vmatprep.subr.mxu0 0.0
    %679 = vmatpush1.xpose.msra.mxu0 %v654
    %680 = vmatprep.subr.mxu0 0.0
    %681 = vmatpush1.xpose.msra.mxu0 %v656
    %682 = vmatprep.subr.mxu0 0.0
    %683 = vmatpush1.xpose.msra.mxu0 %v658
    %684 = vmatprep.subr.mxu0 0.0
    %685 = vmatpush1.xpose.msra.mxu0 %v660
    %686 = vmatprep.subr.mxu0 0.0
    %687 = vmatpush1.xpose.msra.mxu0 %v662
    %688 = vmatprep.subr.mxu0 0.0
    %689 = vmatpush1.xpose.msra.mxu0 0.0
    %690 = vmatprep.subr.mxu0 0.0
    %691 = vmatpush1.xpose.msra.mxu0 0.0
    %692 = vmatprep.subr.mxu0 0.0
    %693 = vmatpush1.xpose.msra.mxu0 0.0
    %694 = vmatprep.subr.mxu0 0.0
    %695 = vmatpush1.xpose.msra.mxu0 0.0
    %696 = vmatprep.subr.mxu0 0.0
    %697 = vmatpush1.xpose.msra.mxu0 0.0
    %698 = vmatprep.subr.mxu0 0.0
    %699 = vmatpush1.xpose.msra.mxu0 0.0
    %700 = vmatprep.subr.mxu0 0.0
    %701 = vmatpush1.xpose.msra.mxu0 0.0
    %702 = vmatprep.subr.mxu0 0.0
    %703 = vmatpush1.xpose.msra.mxu0 0.0
    %704 = vmatprep.subr.mxu0 0.0
    %705 = vmatpush1.xpose.msra.mxu0 0.0
    %706 = vmatprep.subr.mxu0 0.0
    %707 = vmatpush1.xpose.msra.mxu0 0.0
    %708 = vmatprep.subr.mxu0 0.0
    %709 = vmatpush1.xpose.msra.mxu0 0.0
    %710 = vmatprep.subr.mxu0 0.0
    %711 = vmatpush1.xpose.msra.mxu0 0.0
    %712 = vmatprep.subr.mxu0 0.0
    %713 = vmatpush1.xpose.msra.mxu0 0.0
    %714 = vmatprep.subr.mxu0 0.0
    %715 = vmatpush1.xpose.msra.mxu0 0.0
    %716 = vmatprep.subr.mxu0 0.0
    %717 = vmatpush1.xpose.msra.mxu0 0.0
    %718 = vmatprep.subr.mxu0 0.0
    %719 = vmatpush1.xpose.msra.mxu0 0.0
    %720 = vmatprep.subr.mxu0 0.0
    %721 = vmatpush1.xpose.msra.mxu0 0.0
    %722 = vmatprep.subr.mxu0 0.0
    %723 = vmatpush1.xpose.msra.mxu0 0.0
    %724 = vmatprep.subr.mxu0 0.0
    %725 = vmatpush1.xpose.msra.mxu0 0.0
    %726 = vmatprep.subr.mxu0 0.0
    %727 = vmatpush1.xpose.msra.mxu0 0.0
    %728 = vmatprep.mubr.f32.mxu0 0.0
    %729 = vmatmul.mubr.f32.gmra.mrb[0].mxu0 %v616
    %v730 = vpop.f32.mrb[0].mxu0
    %v731 = vadd.f32 0.0, %v730
    %v732 = vpop.f32.mrb[0].mxu0
    %733 = vmatprep.mubr.f32.mxu0 0.0
    %734 = vmatmul.mubr.f32.gmra.mrb[0].mxu0 %v618
    %v735 = vpop.f32.mrb[0].mxu0
    %v736 = vadd.f32 0.0, %v735
    %v737 = vpop.f32.mrb[0].mxu0
    %738 = vmatprep.mubr.f32.mxu0 0.0
    %739 = vmatmul.mubr.f32.gmra.mrb[0].mxu0 %v620
    %v740 = vpop.f32.mrb[0].mxu0
    %v741 = vadd.f32 0.0, %v740
    %v742 = vpop.f32.mrb[0].mxu0
    %743 = vmatprep.mubr.f32.mxu0 0.0
    %744 = vmatmul.mubr.f32.gmra.mrb[0].mxu0 %v622
    %v745 = vpop.f32.mrb[0].mxu0
    %v746 = vadd.f32 0.0, %v745
    %v747 = vpop.f32.mrb[0].mxu0
    %748 = vmatprep.mubr.f32.mxu0 0.0
    %749 = vmatmul.mubr.f32.gmra.mrb[0].mxu0 %v624
    %v750 = vpop.f32.mrb[0].mxu0
    %v751 = vadd.f32 0.0, %v750
    %v752 = vpop.f32.mrb[0].mxu0
    %753 = vmatprep.mubr.f32.mxu0 0.0
    %754 = vmatmul.mubr.f32.gmra.mrb[0].mxu0 %v626
    %v755 = vpop.f32.mrb[0].mxu0
    %v756 = vadd.f32 0.0, %v755
    %v757 = vpop.f32.mrb[0].mxu0
    %758 = vmatprep.mubr.f32.mxu0 0.0
    %759 = vmatmul.mubr.f32.gmra.mrb[0].mxu0 %v628
    %v760 = vpop.f32.mrb[0].mxu0
    %v761 = vadd.f32 0.0, %v760
    %v762 = vpop.f32.mrb[0].mxu0
    %763 = vmatprep.mubr.f32.mxu0 0.0
    %764 = vmatmul.mubr.f32.gmra.mrb[0].mxu0 %v630
    %v765 = vpop.f32.mrb[0].mxu0
    %v766 = vadd.f32 0.0, %v765
    %v767 = vpop.f32.mrb[0].mxu0
    %768 = vmatprep.mubr.f32.mxu0 0.0
    %769 = vmatmul.mubr.f32.gmra.mrb[0].mxu0 %v632
    %v770 = vpop.f32.mrb[0].mxu0
    %v771 = vadd.f32 0.0, %v770
    %v772 = vpop.f32.mrb[0].mxu0
    %773 = vmatprep.mubr.f32.mxu0 0.0
    %774 = vmatmul.mubr.f32.gmra.mrb[0].mxu0 %v634
    %v775 = vpop.f32.mrb[0].mxu0
    %v776 = vadd.f32 0.0, %v775
    %v777 = vpop.f32.mrb[0].mxu0
    %778 = vmatprep.mubr.f32.mxu0 0.0
    %779 = vmatmul.mubr.f32.gmra.mrb[0].mxu0 %v636
    %v780 = vpop.f32.mrb[0].mxu0
    %v781 = vadd.f32 0.0, %v780
    %v782 = vpop.f32.mrb[0].mxu0
    %783 = vmatprep.mubr.f32.mxu0 0.0
    %784 = vmatmul.mubr.f32.gmra.mrb[0].mxu0 %v638
    %v785 = vpop.f32.mrb[0].mxu0
    %v786 = vadd.f32 0.0, %v785
    %v787 = vpop.f32.mrb[0].mxu0
    %788 = vdwg.mxu0
    %v789 = vmul.f32 %v731, 0.25
    %v790 = vmul.f32 %v736, 0.25
    %v791 = vmul.f32 %v741, 0.25
    %v792 = vmul.f32 %v746, 0.25
    %v793 = vmul.f32 %v751, 0.25
    %v794 = vmul.f32 %v756, 0.25
    %v795 = vmul.f32 %v761, 0.25
    %v796 = vmul.f32 %v766, 0.25
    %v797 = vmul.f32 %v771, 0.25
    %v798 = vmul.f32 %v776, 0.25
    %v799 = vmul.f32 %v781, 0.25
    %v800 = vmul.f32 %v786, 0.25
    %v801 = vadd.f32 %v789, %v339
    %v802 = vadd.f32 %v790, %v340
    %v803 = vadd.f32 %v791, %v341
    %v804 = vadd.f32 %v792, %v342
    %v805 = vadd.f32 %v793, %v343
    %v806 = vadd.f32 %v794, %v344
    %v807 = vadd.f32 %v795, %v345
    %v808 = vadd.f32 %v796, %v346
    %v809 = vadd.f32 %v797, %v347
    %v810 = vadd.f32 %v798, %v348
    %v811 = vadd.f32 %v799, %v349
    %v812 = vadd.f32 %v800, %v350
    %vm813 = vcmask 785408
    %v814 = vsel %vm813, %v801, -inf
    %815 = vmax.xlane.f32.xlu0 %v814
    %v816 = vpop.xlane.xlu0 %815
    %v817 = vsel %vm813, %v802, -inf
    %818 = vmax.xlane.f32.xlu0 %v817
    %v819 = vpop.xlane.xlu0 %818
    %v820 = vsel %vm813, %v803, -inf
    %821 = vmax.xlane.f32.xlu0 %v820
    %v822 = vpop.xlane.xlu0 %821
    %v823 = vsel %vm813, %v804, -inf
    %824 = vmax.xlane.f32.xlu0 %v823
    %v825 = vpop.xlane.xlu0 %824
    %v826 = vsel %vm813, %v805, -inf
    %827 = vmax.xlane.f32.xlu0 %v826
    %v828 = vpop.xlane.xlu0 %827
    %v829 = vsel %vm813, %v806, -inf
    %830 = vmax.xlane.f32.xlu0 %v829
    %v831 = vpop.xlane.xlu0 %830
    %v832 = vsel %vm813, %v807, -inf
    %833 = vmax.xlane.f32.xlu0 %v832
    %v834 = vpop.xlane.xlu0 %833
    %v835 = vsel %vm813, %v808, -inf
    %836 = vmax.xlane.f32.xlu0 %v835
    %v837 = vpop.xlane.xlu0 %836
    %v838 = vsel %vm813, %v809, -inf
    %839 = vmax.xlane.f32.xlu0 %v838
    %v840 = vpop.xlane.xlu0 %839
    %v841 = vsel %vm813, %v810, -inf
    %842 = vmax.xlane.f32.xlu0 %v841
    %v843 = vpop.xlane.xlu0 %842
    %v844 = vsel %vm813, %v811, -inf
    %845 = vmax.xlane.f32.xlu0 %v844
    %v846 = vpop.xlane.xlu0 %845
    %v847 = vsel %vm813, %v812, -inf
    %848 = vmax.xlane.f32.xlu0 %v847
    %v849 = vpop.xlane.xlu0 %848
    %v850 = vsub.f32 %v801, %v816
    %v851 = vsub.f32 %v802, %v819
    %v852 = vsub.f32 %v803, %v822
    %v853 = vsub.f32 %v804, %v825
    %v854 = vsub.f32 %v805, %v828
    %v855 = vsub.f32 %v806, %v831
    %v856 = vsub.f32 %v807, %v834
    %v857 = vsub.f32 %v808, %v837
    %v858 = vsub.f32 %v809, %v840
    %v859 = vsub.f32 %v810, %v843
    %v860 = vsub.f32 %v811, %v846
    %v861 = vsub.f32 %v812, %v849
    %v862 = vmul.f32 %v850, 1.442695
    %v863 = vpow.pop %v862
    %v864 = vmul.f32 %v851, 1.442695
    %v865 = vpow.pop %v864
    %v866 = vmul.f32 %v852, 1.442695
    %v867 = vpow.pop %v866
    %v868 = vmul.f32 %v853, 1.442695
    %v869 = vpow.pop %v868
    %v870 = vmul.f32 %v854, 1.442695
    %v871 = vpow.pop %v870
    %v872 = vmul.f32 %v855, 1.442695
    %v873 = vpow.pop %v872
    %v874 = vmul.f32 %v856, 1.442695
    %v875 = vpow.pop %v874
    %v876 = vmul.f32 %v857, 1.442695
    %v877 = vpow.pop %v876
    %v878 = vmul.f32 %v858, 1.442695
    %v879 = vpow.pop %v878
    %v880 = vmul.f32 %v859, 1.442695
    %v881 = vpow.pop %v880
    %v882 = vmul.f32 %v860, 1.442695
    %v883 = vpow.pop %v882
    %v884 = vmul.f32 %v861, 1.442695
    %v885 = vpow.pop %v884
    %v886 = vsel %vm813, %v863, 0.0
    %887 = vadd.xlane.f32.xlu0 %v886
    %v888 = vpop.xlane.xlu0 %887
    %v889 = vsel %vm813, %v865, 0.0
    %890 = vadd.xlane.f32.xlu0 %v889
    %v891 = vpop.xlane.xlu0 %890
    %v892 = vsel %vm813, %v867, 0.0
    %893 = vadd.xlane.f32.xlu0 %v892
    %v894 = vpop.xlane.xlu0 %893
    %v895 = vsel %vm813, %v869, 0.0
    %896 = vadd.xlane.f32.xlu0 %v895
    %v897 = vpop.xlane.xlu0 %896
    %v898 = vsel %vm813, %v871, 0.0
    %899 = vadd.xlane.f32.xlu0 %v898
    %v900 = vpop.xlane.xlu0 %899
    %v901 = vsel %vm813, %v873, 0.0
    %902 = vadd.xlane.f32.xlu0 %v901
    %v903 = vpop.xlane.xlu0 %902
    %v904 = vsel %vm813, %v875, 0.0
    %905 = vadd.xlane.f32.xlu0 %v904
    %v906 = vpop.xlane.xlu0 %905
    %v907 = vsel %vm813, %v877, 0.0
    %908 = vadd.xlane.f32.xlu0 %v907
    %v909 = vpop.xlane.xlu0 %908
    %v910 = vsel %vm813, %v879, 0.0
    %911 = vadd.xlane.f32.xlu0 %v910
    %v912 = vpop.xlane.xlu0 %911
    %v913 = vsel %vm813, %v881, 0.0
    %914 = vadd.xlane.f32.xlu0 %v913
    %v915 = vpop.xlane.xlu0 %914
    %v916 = vsel %vm813, %v883, 0.0
    %917 = vadd.xlane.f32.xlu0 %v916
    %v918 = vpop.xlane.xlu0 %917
    %v919 = vsel %vm813, %v885, 0.0
    %920 = vadd.xlane.f32.xlu0 %v919
    %v921 = vpop.xlane.xlu0 %920
    %v922 = vrcp.pop %v888
    %v923 = vrcp.pop %v891
    %v924 = vrcp.pop %v894
    %v925 = vrcp.pop %v897
    %v926 = vrcp.pop %v900
    %v927 = vrcp.pop %v903
    %v928 = vrcp.pop %v906
    %v929 = vrcp.pop %v909
    %v930 = vrcp.pop %v912
    %v931 = vrcp.pop %v915
    %v932 = vrcp.pop %v918
    %v933 = vrcp.pop %v921
    %v934 = vmul.f32 %v863, %v922
    %v935 = vmul.f32 %v865, %v923
    %v936 = vmul.f32 %v867, %v924
    %v937 = vmul.f32 %v869, %v925
    %v938 = vmul.f32 %v871, %v926
    %v939 = vmul.f32 %v873, %v927
    %v940 = vmul.f32 %v875, %v928
    %v941 = vmul.f32 %v877, %v929
    %v942 = vmul.f32 %v879, %v930
    %v943 = vmul.f32 %v881, %v931
    %v944 = vmul.f32 %v883, %v932
    %v945 = vmul.f32 %v885, %v933
    %946 = vrot.lane.b32.xlu0 %v546, 64
    %v947 = vpop.permute.xlu0 %946
    %948 = vrot.lane.b32.xlu0 %v551, 64
    %v949 = vpop.permute.xlu0 %948
    %950 = vrot.lane.b32.xlu0 %v556, 64
    %v951 = vpop.permute.xlu0 %950
    %952 = vrot.lane.b32.xlu0 %v561, 64
    %v953 = vpop.permute.xlu0 %952
    %954 = vrot.lane.b32.xlu0 %v566, 64
    %v955 = vpop.permute.xlu0 %954
    %956 = vrot.lane.b32.xlu0 %v571, 64
    %v957 = vpop.permute.xlu0 %956
    %958 = vrot.lane.b32.xlu0 %v581, 64
    %v959 = vpop.permute.xlu0 %958
    %960 = vrot.lane.b32.xlu0 %v583, 64
    %v961 = vpop.permute.xlu0 %960
    %962 = vrot.lane.b32.xlu0 %v585, 64
    %v963 = vpop.permute.xlu0 %962
    %964 = vrot.lane.b32.xlu0 %v587, 64
    %v965 = vpop.permute.xlu0 %964
    %966 = vrot.lane.b32.xlu0 %v589, 64
    %v967 = vpop.permute.xlu0 %966
    %968 = vrot.lane.b32.xlu0 %v591, 64
    %v969 = vpop.permute.xlu0 %968
    %v983 = vsel %vm813, %v934, 0
    %v986 = vsel %vm813, %v935, 0
    %v989 = vsel %vm813, %v936, 0
    %v992 = vsel %vm813, %v937, 0
    %v995 = vsel %vm813, %v938, 0
    %v998 = vsel %vm813, %v939, 0
    %v1001 = vsel %vm813, %v940, 0
    %v1004 = vsel %vm813, %v941, 0
    %v1007 = vsel %vm813, %v942, 0
    %v1010 = vsel %vm813, %v943, 0
    %v1013 = vsel %vm813, %v944, 0
    %v1016 = vsel %vm813, %v945, 0
    %1018 = vmatprep.subr.mxu0 0.0
    %1019 = vmatpush1.msra.mxu0 %v947
    %1020 = vmatprep.subr.mxu0 0.0
    %1021 = vmatpush1.msra.mxu0 %v949
    %1022 = vmatprep.subr.mxu0 0.0
    %1023 = vmatpush1.msra.mxu0 %v951
    %1024 = vmatprep.subr.mxu0 0.0
    %1025 = vmatpush1.msra.mxu0 %v953
    %1026 = vmatprep.subr.mxu0 0.0
    %1027 = vmatpush1.msra.mxu0 %v955
    %1028 = vmatprep.subr.mxu0 0.0
    %1029 = vmatpush1.msra.mxu0 %v957
    %1030 = vmatprep.subr.mxu0 0.0
    %1031 = vmatpush1.msra.mxu0 %v959
    %1032 = vmatprep.subr.mxu0 0.0
    %1033 = vmatpush1.msra.mxu0 %v961
    %1034 = vmatprep.subr.mxu0 0.0
    %1035 = vmatpush1.msra.mxu0 %v963
    %1036 = vmatprep.subr.mxu0 0.0
    %1037 = vmatpush1.msra.mxu0 %v965
    %1038 = vmatprep.subr.mxu0 0.0
    %1039 = vmatpush1.msra.mxu0 %v967
    %1040 = vmatprep.subr.mxu0 0.0
    %1041 = vmatpush1.msra.mxu0 %v969
    %1042 = vmatprep.subr.mxu0 0.0
    %1043 = vmatpush1.msra.mxu0 0.0
    %1044 = vmatprep.subr.mxu0 0.0
    %1045 = vmatpush1.msra.mxu0 0.0
    %1046 = vmatprep.subr.mxu0 0.0
    %1047 = vmatpush1.msra.mxu0 0.0
    %1048 = vmatprep.subr.mxu0 0.0
    %1049 = vmatpush1.msra.mxu0 0.0
    %1050 = vmatprep.subr.mxu0 0.0
    %1051 = vmatpush1.msra.mxu0 0.0
    %1052 = vmatprep.subr.mxu0 0.0
    %1053 = vmatpush1.msra.mxu0 0.0
    %1054 = vmatprep.subr.mxu0 0.0
    %1055 = vmatpush1.msra.mxu0 0.0
    %1056 = vmatprep.subr.mxu0 0.0
    %1057 = vmatpush1.msra.mxu0 0.0
    %1058 = vmatprep.subr.mxu0 0.0
    %1059 = vmatpush1.msra.mxu0 0.0
    %1060 = vmatprep.subr.mxu0 0.0
    %1061 = vmatpush1.msra.mxu0 0.0
    %1062 = vmatprep.subr.mxu0 0.0
    %1063 = vmatpush1.msra.mxu0 0.0
    %1064 = vmatprep.subr.mxu0 0.0
    %1065 = vmatpush1.msra.mxu0 0.0
    %1066 = vmatprep.subr.mxu0 0.0
    %1067 = vmatpush1.msra.mxu0 0.0
    %1068 = vmatprep.subr.mxu0 0.0
    %1069 = vmatpush1.msra.mxu0 0.0
    %1070 = vmatprep.subr.mxu0 0.0
    %1071 = vmatpush1.msra.mxu0 0.0
    %1072 = vmatprep.subr.mxu0 0.0
    %1073 = vmatpush1.msra.mxu0 0.0
    %1074 = vmatprep.subr.mxu0 0.0
    %1075 = vmatpush1.msra.mxu0 0.0
    %1076 = vmatprep.subr.mxu0 0.0
    %1077 = vmatpush1.msra.mxu0 0.0
    %1078 = vmatprep.subr.mxu0 0.0
    %1079 = vmatpush1.msra.mxu0 0.0
    %1080 = vmatprep.subr.mxu0 0.0
    %1081 = vmatpush1.msra.mxu0 0.0
    %1082 = vmatprep.mubr.f32.mxu0 0.0
    %1083 = vmatmul.mubr.f32.gmra.mrb[0].mxu0 %v983
    %v1084 = vpop.f32.mrb[0].mxu0
    %v1085 = vadd.f32 0.0, %v1084
    %v1086 = vpop.f32.mrb[0].mxu0
    %1087 = vmatprep.mubr.f32.mxu0 0.0
    %1088 = vmatmul.mubr.f32.gmra.mrb[0].mxu0 %v986
    %v1089 = vpop.f32.mrb[0].mxu0
    %v1090 = vadd.f32 0.0, %v1089
    %v1091 = vpop.f32.mrb[0].mxu0
    %1092 = vmatprep.mubr.f32.mxu0 0.0
    %1093 = vmatmul.mubr.f32.gmra.mrb[0].mxu0 %v989
    %v1094 = vpop.f32.mrb[0].mxu0
    %v1095 = vadd.f32 0.0, %v1094
    %v1096 = vpop.f32.mrb[0].mxu0
    %1097 = vmatprep.mubr.f32.mxu0 0.0
    %1098 = vmatmul.mubr.f32.gmra.mrb[0].mxu0 %v992
    %v1099 = vpop.f32.mrb[0].mxu0
    %v1100 = vadd.f32 0.0, %v1099
    %v1101 = vpop.f32.mrb[0].mxu0
    %1102 = vmatprep.mubr.f32.mxu0 0.0
    %1103 = vmatmul.mubr.f32.gmra.mrb[0].mxu0 %v995
    %v1104 = vpop.f32.mrb[0].mxu0
    %v1105 = vadd.f32 0.0, %v1104
    %v1106 = vpop.f32.mrb[0].mxu0
    %1107 = vmatprep.mubr.f32.mxu0 0.0
    %1108 = vmatmul.mubr.f32.gmra.mrb[0].mxu0 %v998
    %v1109 = vpop.f32.mrb[0].mxu0
    %v1110 = vadd.f32 0.0, %v1109
    %v1111 = vpop.f32.mrb[0].mxu0
    %1112 = vmatprep.mubr.f32.mxu0 0.0
    %1113 = vmatmul.mubr.f32.gmra.mrb[0].mxu0 %v1001
    %v1114 = vpop.f32.mrb[0].mxu0
    %v1115 = vadd.f32 0.0, %v1114
    %v1116 = vpop.f32.mrb[0].mxu0
    %1117 = vmatprep.mubr.f32.mxu0 0.0
    %1118 = vmatmul.mubr.f32.gmra.mrb[0].mxu0 %v1004
    %v1119 = vpop.f32.mrb[0].mxu0
    %v1120 = vadd.f32 0.0, %v1119
    %v1121 = vpop.f32.mrb[0].mxu0
    %1122 = vmatprep.mubr.f32.mxu0 0.0
    %1123 = vmatmul.mubr.f32.gmra.mrb[0].mxu0 %v1007
    %v1124 = vpop.f32.mrb[0].mxu0
    %v1125 = vadd.f32 0.0, %v1124
    %v1126 = vpop.f32.mrb[0].mxu0
    %1127 = vmatprep.mubr.f32.mxu0 0.0
    %1128 = vmatmul.mubr.f32.gmra.mrb[0].mxu0 %v1010
    %v1129 = vpop.f32.mrb[0].mxu0
    %v1130 = vadd.f32 0.0, %v1129
    %v1131 = vpop.f32.mrb[0].mxu0
    %1132 = vmatprep.mubr.f32.mxu0 0.0
    %1133 = vmatmul.mubr.f32.gmra.mrb[0].mxu0 %v1013
    %v1134 = vpop.f32.mrb[0].mxu0
    %v1135 = vadd.f32 0.0, %v1134
    %v1136 = vpop.f32.mrb[0].mxu0
    %1137 = vmatprep.mubr.f32.mxu0 0.0
    %1138 = vmatmul.mubr.f32.gmra.mrb[0].mxu0 %v1016
    %v1139 = vpop.f32.mrb[0].mxu0
    %v1140 = vadd.f32 0.0, %v1139
    %v1141 = vpop.f32.mrb[0].mxu0
    %1142 = vdwg.mxu0
    %1149 = vrot.lane.b32.xlu0 %v1115, 16
    %v1150 = vpop.permute.xlu0 %1149
    %1151 = vrot.lane.b32.xlu0 %v1120, 16
    %v1152 = vpop.permute.xlu0 %1151
    %1153 = vrot.lane.b32.xlu0 %v1125, 16
    %v1154 = vpop.permute.xlu0 %1153
    %1155 = vrot.lane.b32.xlu0 %v1130, 16
    %v1156 = vpop.permute.xlu0 %1155
    %1157 = vrot.lane.b32.xlu0 %v1135, 16
    %v1158 = vpop.permute.xlu0 %1157
    %1159 = vrot.lane.b32.xlu0 %v1140, 16
    %v1160 = vpop.permute.xlu0 %1159
    %v1167 = vsel %vm79, %v1085, %v1150
    %v1168 = vsel %vm79, %v1090, %v1152
    %v1169 = vsel %vm79, %v1095, %v1154
    %v1170 = vsel %vm79, %v1100, %v1156
    %v1171 = vsel %vm79, %v1105, %v1158
    %v1172 = vsel %vm79, %v1110, %v1160
    %v1173 = vld [vmem:[#allocation5] sm:$0xff]
    %v1174 = vld [vmem:[#allocation5 + $0x8] sm:$0xff]
    %v1175 = vld [vmem:[#allocation5 + $0x10] sm:$0xff]
    %v1176 = vld [vmem:[#allocation5 + $0x18] sm:$0xff]
    %v1178 = vsel %vm353, %v1167, 0
    %v1181 = vsel %vm353, %v1168, 0
    %v1184 = vsel %vm353, %v1169, 0
    %v1187 = vsel %vm353, %v1170, 0
    %v1190 = vsel %vm353, %v1171, 0
    %v1193 = vsel %vm353, %v1172, 0
    %1195 = vmatprep.subr.mxu0 0.0
    %1196 = vmatpush1.msra.mxu0 %v1173
    %1197 = vmatprep.subr.mxu0 0.0
    %1198 = vmatpush1.msra.mxu0 %v1174
    %1199 = vmatprep.subr.mxu0 0.0
    %1200 = vmatpush1.msra.mxu0 %v1175
    %1201 = vmatprep.subr.mxu0 0.0
    %1202 = vmatpush1.msra.mxu0 %v1176
    %1203 = vmatprep.subr.mxu0 0.0
    %1204 = vmatpush1.msra.mxu0 0.0
    %1205 = vmatprep.subr.mxu0 0.0
    %1206 = vmatpush1.msra.mxu0 0.0
    %1207 = vmatprep.subr.mxu0 0.0
    %1208 = vmatpush1.msra.mxu0 0.0
    %1209 = vmatprep.subr.mxu0 0.0
    %1210 = vmatpush1.msra.mxu0 0.0
    %1211 = vmatprep.subr.mxu0 0.0
    %1212 = vmatpush1.msra.mxu0 0.0
    %1213 = vmatprep.subr.mxu0 0.0
    %1214 = vmatpush1.msra.mxu0 0.0
    %1215 = vmatprep.subr.mxu0 0.0
    %1216 = vmatpush1.msra.mxu0 0.0
    %1217 = vmatprep.subr.mxu0 0.0
    %1218 = vmatpush1.msra.mxu0 0.0
    %1219 = vmatprep.subr.mxu0 0.0
    %1220 = vmatpush1.msra.mxu0 0.0
    %1221 = vmatprep.subr.mxu0 0.0
    %1222 = vmatpush1.msra.mxu0 0.0
    %1223 = vmatprep.subr.mxu0 0.0
    %1224 = vmatpush1.msra.mxu0 0.0
    %1225 = vmatprep.subr.mxu0 0.0
    %1226 = vmatpush1.msra.mxu0 0.0
    %1227 = vmatprep.subr.mxu0 0.0
    %1228 = vmatpush1.msra.mxu0 0.0
    %1229 = vmatprep.subr.mxu0 0.0
    %1230 = vmatpush1.msra.mxu0 0.0
    %1231 = vmatprep.subr.mxu0 0.0
    %1232 = vmatpush1.msra.mxu0 0.0
    %1233 = vmatprep.subr.mxu0 0.0
    %1234 = vmatpush1.msra.mxu0 0.0
    %1235 = vmatprep.subr.mxu0 0.0
    %1236 = vmatpush1.msra.mxu0 0.0
    %1237 = vmatprep.subr.mxu0 0.0
    %1238 = vmatpush1.msra.mxu0 0.0
    %1239 = vmatprep.subr.mxu0 0.0
    %1240 = vmatpush1.msra.mxu0 0.0
    %1241 = vmatprep.subr.mxu0 0.0
    %1242 = vmatpush1.msra.mxu0 0.0
    %1243 = vmatprep.subr.mxu0 0.0
    %1244 = vmatpush1.msra.mxu0 0.0
    %1245 = vmatprep.subr.mxu0 0.0
    %1246 = vmatpush1.msra.mxu0 0.0
    %1247 = vmatprep.subr.mxu0 0.0
    %1248 = vmatpush1.msra.mxu0 0.0
    %1249 = vmatprep.subr.mxu0 0.0
    %1250 = vmatpush1.msra.mxu0 0.0
    %1251 = vmatprep.subr.mxu0 0.0
    %1252 = vmatpush1.msra.mxu0 0.0
    %1253 = vmatprep.subr.mxu0 0.0
    %1254 = vmatpush1.msra.mxu0 0.0
    %1255 = vmatprep.subr.mxu0 0.0
    %1256 = vmatpush1.msra.mxu0 0.0
    %1257 = vmatprep.subr.mxu0 0.0
    %1258 = vmatpush1.msra.mxu0 0.0
    %1259 = vmatprep.mubr.f32.mxu0 0.0
    %1260 = vmatmul.mubr.f32.gmra.mrb[0].mxu0 %v1178
    %v1261 = vpop.f32.mrb[0].mxu0
    %v1262 = vadd.f32 0.0, %v1261
    %v1263 = vpop.f32.mrb[0].mxu0
    %1264 = vmatprep.mubr.f32.mxu0 0.0
    %1265 = vmatmul.mubr.f32.gmra.mrb[0].mxu0 %v1181
    %v1266 = vpop.f32.mrb[0].mxu0
    %v1267 = vadd.f32 0.0, %v1266
    %v1268 = vpop.f32.mrb[0].mxu0
    %1269 = vmatprep.mubr.f32.mxu0 0.0
    %1270 = vmatmul.mubr.f32.gmra.mrb[0].mxu0 %v1184
    %v1271 = vpop.f32.mrb[0].mxu0
    %v1272 = vadd.f32 0.0, %v1271
    %v1273 = vpop.f32.mrb[0].mxu0
    %1274 = vmatprep.mubr.f32.mxu0 0.0
    %1275 = vmatmul.mubr.f32.gmra.mrb[0].mxu0 %v1187
    %v1276 = vpop.f32.mrb[0].mxu0
    %v1277 = vadd.f32 0.0, %v1276
    %v1278 = vpop.f32.mrb[0].mxu0
    %1279 = vmatprep.mubr.f32.mxu0 0.0
    %1280 = vmatmul.mubr.f32.gmra.mrb[0].mxu0 %v1190
    %v1281 = vpop.f32.mrb[0].mxu0
    %v1282 = vadd.f32 0.0, %v1281
    %v1283 = vpop.f32.mrb[0].mxu0
    %1284 = vmatprep.mubr.f32.mxu0 0.0
    %1285 = vmatmul.mubr.f32.gmra.mrb[0].mxu0 %v1193
    %v1286 = vpop.f32.mrb[0].mxu0
    %v1287 = vadd.f32 0.0, %v1286
    %v1288 = vpop.f32.mrb[0].mxu0
    %1289 = vdwg.mxu0
    %v1290 = vadd.f32 %v165, %v1262
    %v1291 = vadd.f32 %v170, %v1267
    %v1292 = vadd.f32 %v175, %v1272
    %v1293 = vadd.f32 %v180, %v1277
    %v1294 = vadd.f32 %v185, %v1282
    %v1295 = vadd.f32 %v190, %v1287
    %v1296 = vlaneseq
    %v1297 = vshrl.u32 %v1296, 7
    %v1298 = vsub.s32 2, %v1297
    %v1299 = vrot.slane %v352, %v1298
    %v1300 = vadd.f32 %v1290, %v1299
    %v1301 = vadd.f32 %v1291, %v1299
    %v1302 = vadd.f32 %v1292, %v1299
    %v1303 = vadd.f32 %v1293, %v1299
    %v1304 = vadd.f32 %v1294, %v1299
    %v1305 = vadd.f32 %v1295, %v1299
    %v1306 = vsel %vm353, %v1300, 0.0
    %1307 = vadd.xlane.f32.xlu0 %v1306
    %v1308 = vpop.xlane.xlu0 %1307
    %v1309 = vsel %vm353, %v1301, 0.0
    %1310 = vadd.xlane.f32.xlu0 %v1309
    %v1311 = vpop.xlane.xlu0 %1310
    %v1312 = vsel %vm353, %v1302, 0.0
    %1313 = vadd.xlane.f32.xlu0 %v1312
    %v1314 = vpop.xlane.xlu0 %1313
    %v1315 = vsel %vm353, %v1303, 0.0
    %1316 = vadd.xlane.f32.xlu0 %v1315
    %v1317 = vpop.xlane.xlu0 %1316
    %v1318 = vsel %vm353, %v1304, 0.0
    %1319 = vadd.xlane.f32.xlu0 %v1318
    %v1320 = vpop.xlane.xlu0 %1319
    %v1321 = vsel %vm353, %v1305, 0.0
    %1322 = vadd.xlane.f32.xlu0 %v1321
    %v1323 = vpop.xlane.xlu0 %1322
    %v1324 = vmul.f32 %v1308, %v372
    %v1325 = vmul.f32 %v1311, %v372
    %v1326 = vmul.f32 %v1314, %v372
    %v1327 = vmul.f32 %v1317, %v372
    %v1328 = vmul.f32 %v1320, %v372
    %v1329 = vmul.f32 %v1323, %v372
    %v1330 = vsub.f32 %v1300, %v1324
    %v1331 = vsub.f32 %v1301, %v1325
    %v1332 = vsub.f32 %v1302, %v1326
    %v1333 = vsub.f32 %v1303, %v1327
    %v1334 = vsub.f32 %v1304, %v1328
    %v1335 = vsub.f32 %v1305, %v1329
    %v1336 = vmul.f32 %v1330, %v1330
    %v1337 = vmul.f32 %v1331, %v1331
    %v1338 = vmul.f32 %v1332, %v1332
    %v1339 = vmul.f32 %v1333, %v1333
    %v1340 = vmul.f32 %v1334, %v1334
    %v1341 = vmul.f32 %v1335, %v1335
    %v1342 = vsel %vm353, %v1336, 0.0
    %1343 = vadd.xlane.f32.xlu0 %v1342
    %v1344 = vpop.xlane.xlu0 %1343
    %v1345 = vsel %vm353, %v1337, 0.0
    %1346 = vadd.xlane.f32.xlu0 %v1345
    %v1347 = vpop.xlane.xlu0 %1346
    %v1348 = vsel %vm353, %v1338, 0.0
    %1349 = vadd.xlane.f32.xlu0 %v1348
    %v1350 = vpop.xlane.xlu0 %1349
    %v1351 = vsel %vm353, %v1339, 0.0
    %1352 = vadd.xlane.f32.xlu0 %v1351
    %v1353 = vpop.xlane.xlu0 %1352
    %v1354 = vsel %vm353, %v1340, 0.0
    %1355 = vadd.xlane.f32.xlu0 %v1354
    %v1356 = vpop.xlane.xlu0 %1355
    %v1357 = vsel %vm353, %v1341, 0.0
    %1358 = vadd.xlane.f32.xlu0 %v1357
    %v1359 = vpop.xlane.xlu0 %1358
    %v1360 = vmul.f32 %v1344, %v372
    %v1361 = vmul.f32 %v1347, %v372
    %v1362 = vmul.f32 %v1350, %v372
    %v1363 = vmul.f32 %v1353, %v372
    %v1364 = vmul.f32 %v1356, %v372
    %v1365 = vmul.f32 %v1359, %v372
    %v1366 = vadd.f32 %v1360, 1e-05
    %v1367 = vadd.f32 %v1361, 1e-05
    %v1368 = vadd.f32 %v1362, 1e-05
    %v1369 = vadd.f32 %v1363, 1e-05
    %v1370 = vadd.f32 %v1364, 1e-05
    %v1371 = vadd.f32 %v1365, 1e-05
    %v1372 = vrsqrt.pop %v1366
    %v1373 = vrsqrt.pop %v1367
    %v1374 = vrsqrt.pop %v1368
    %v1375 = vrsqrt.pop %v1369
    %v1376 = vrsqrt.pop %v1370
    %v1377 = vrsqrt.pop %v1371
    %v1378 = vmul.f32 %v1330, %v1372
    %v1379 = vmul.f32 %v1331, %v1373
    %v1380 = vmul.f32 %v1332, %v1374
    %v1381 = vmul.f32 %v1333, %v1375
    %v1382 = vmul.f32 %v1334, %v1376
    %v1383 = vmul.f32 %v1335, %v1377
    %v1384 = vlaneseq
    %v1385 = vshrl.u32 %v1384, 7
    %v1386 = vsub.s32 2, %v1385
    %v1387 = vrot.slane %v351, %v1386
    %v1388 = vmul.f32 %v1378, %v1387
    %v1389 = vmul.f32 %v1379, %v1387
    %v1390 = vmul.f32 %v1380, %v1387
    %v1391 = vmul.f32 %v1381, %v1387
    %v1392 = vmul.f32 %v1382, %v1387
    %v1393 = vmul.f32 %v1383, %v1387
    %v1394 = vlaneseq
    %v1395 = vshrl.u32 %v1394, 7
    %v1396 = vsub.s32 3, %v1395
    %v1397 = vrot.slane %v351, %v1396
    %v1398 = vadd.f32 %v1388, %v1397
    %v1399 = vadd.f32 %v1389, %v1397
    %v1400 = vadd.f32 %v1390, %v1397
    %v1401 = vadd.f32 %v1391, %v1397
    %v1402 = vadd.f32 %v1392, %v1397
    %v1403 = vadd.f32 %v1393, %v1397
    %v1404 = vld [vmem:[#allocation7] sm:$0xff]
    %v1405 = vld [vmem:[#allocation7 + $0x8] sm:$0xff]
    %v1406 = vld [vmem:[#allocation7 + $0x10] sm:$0xff]
    %v1407 = vld [vmem:[#allocation7 + $0x18] sm:$0xff]
    %v1408 = vlaneseq
    %v1409 = vshrl.u32 %v1408, 7
    %v1410 = vsub.s32 1, %v1409
    %v1411 = vrot.slane %v352, %v1410
    %v1413 = vsel %vm353, %v1398, 0
    %v1416 = vsel %vm353, %v1399, 0
    %v1419 = vsel %vm353, %v1400, 0
    %v1422 = vsel %vm353, %v1401, 0
    %v1425 = vsel %vm353, %v1402, 0
    %v1428 = vsel %vm353, %v1403, 0
    %1430 = vmatprep.subr.mxu0 0.0
    %1431 = vmatpush1.msra.mxu0 %v1404
    %1432 = vmatprep.subr.mxu0 0.0
    %1433 = vmatpush1.msra.mxu0 %v1405
    %1434 = vmatprep.subr.mxu0 0.0
    %1435 = vmatpush1.msra.mxu0 %v1406
    %1436 = vmatprep.subr.mxu0 0.0
    %1437 = vmatpush1.msra.mxu0 %v1407
    %1438 = vmatprep.subr.mxu0 0.0
    %1439 = vmatpush1.msra.mxu0 0.0
    %1440 = vmatprep.subr.mxu0 0.0
    %1441 = vmatpush1.msra.mxu0 0.0
    %1442 = vmatprep.subr.mxu0 0.0
    %1443 = vmatpush1.msra.mxu0 0.0
    %1444 = vmatprep.subr.mxu0 0.0
    %1445 = vmatpush1.msra.mxu0 0.0
    %1446 = vmatprep.subr.mxu0 0.0
    %1447 = vmatpush1.msra.mxu0 0.0
    %1448 = vmatprep.subr.mxu0 0.0
    %1449 = vmatpush1.msra.mxu0 0.0
    %1450 = vmatprep.subr.mxu0 0.0
    %1451 = vmatpush1.msra.mxu0 0.0
    %1452 = vmatprep.subr.mxu0 0.0
    %1453 = vmatpush1.msra.mxu0 0.0
    %1454 = vmatprep.subr.mxu0 0.0
    %1455 = vmatpush1.msra.mxu0 0.0
    %1456 = vmatprep.subr.mxu0 0.0
    %1457 = vmatpush1.msra.mxu0 0.0
    %1458 = vmatprep.subr.mxu0 0.0
    %1459 = vmatpush1.msra.mxu0 0.0
    %1460 = vmatprep.subr.mxu0 0.0
    %1461 = vmatpush1.msra.mxu0 0.0
    %1462 = vmatprep.subr.mxu0 0.0
    %1463 = vmatpush1.msra.mxu0 0.0
    %1464 = vmatprep.subr.mxu0 0.0
    %1465 = vmatpush1.msra.mxu0 0.0
    %1466 = vmatprep.subr.mxu0 0.0
    %1467 = vmatpush1.msra.mxu0 0.0
    %1468 = vmatprep.subr.mxu0 0.0
    %1469 = vmatpush1.msra.mxu0 0.0
    %1470 = vmatprep.subr.mxu0 0.0
    %1471 = vmatpush1.msra.mxu0 0.0
    %1472 = vmatprep.subr.mxu0 0.0
    %1473 = vmatpush1.msra.mxu0 0.0
    %1474 = vmatprep.subr.mxu0 0.0
    %1475 = vmatpush1.msra.mxu0 0.0
    %1476 = vmatprep.subr.mxu0 0.0
    %1477 = vmatpush1.msra.mxu0 0.0
    %1478 = vmatprep.subr.mxu0 0.0
    %1479 = vmatpush1.msra.mxu0 0.0
    %1480 = vmatprep.subr.mxu0 0.0
    %1481 = vmatpush1.msra.mxu0 0.0
    %1482 = vmatprep.subr.mxu0 0.0
    %1483 = vmatpush1.msra.mxu0 0.0
    %1484 = vmatprep.subr.mxu0 0.0
    %1485 = vmatpush1.msra.mxu0 0.0
    %1486 = vmatprep.subr.mxu0 0.0
    %1487 = vmatpush1.msra.mxu0 0.0
    %1488 = vmatprep.subr.mxu0 0.0
    %1489 = vmatpush1.msra.mxu0 0.0
    %1490 = vmatprep.subr.mxu0 0.0
    %1491 = vmatpush1.msra.mxu0 0.0
    %1492 = vmatprep.subr.mxu0 0.0
    %1493 = vmatpush1.msra.mxu0 0.0
    %1494 = vmatprep.mubr.f32.mxu0 0.0
    %1495 = vmatmul.mubr.f32.gmra.mrb[0].mxu0 %v1413
    %v1496 = vpop.f32.mrb[0].mxu0
    %v1497 = vadd.f32 %v1411, %v1496
    %v1498 = vpop.f32.mrb[0].mxu0
    %1499 = vmatprep.mubr.f32.mxu0 0.0
    %1500 = vmatmul.mubr.f32.gmra.mrb[0].mxu0 %v1416
    %v1501 = vpop.f32.mrb[0].mxu0
    %v1502 = vadd.f32 %v1411, %v1501
    %v1503 = vpop.f32.mrb[0].mxu0
    %1504 = vmatprep.mubr.f32.mxu0 0.0
    %1505 = vmatmul.mubr.f32.gmra.mrb[0].mxu0 %v1419
    %v1506 = vpop.f32.mrb[0].mxu0
    %v1507 = vadd.f32 %v1411, %v1506
    %v1508 = vpop.f32.mrb[0].mxu0
    %1509 = vmatprep.mubr.f32.mxu0 0.0
    %1510 = vmatmul.mubr.f32.gmra.mrb[0].mxu0 %v1422
    %v1511 = vpop.f32.mrb[0].mxu0
    %v1512 = vadd.f32 %v1411, %v1511
    %v1513 = vpop.f32.mrb[0].mxu0
    %1514 = vmatprep.mubr.f32.mxu0 0.0
    %1515 = vmatmul.mubr.f32.gmra.mrb[0].mxu0 %v1425
    %v1516 = vpop.f32.mrb[0].mxu0
    %v1517 = vadd.f32 %v1411, %v1516
    %v1518 = vpop.f32.mrb[0].mxu0
    %1519 = vmatprep.mubr.f32.mxu0 0.0
    %1520 = vmatmul.mubr.f32.gmra.mrb[0].mxu0 %v1428
    %v1521 = vpop.f32.mrb[0].mxu0
    %v1522 = vadd.f32 %v1411, %v1521
    %v1523 = vpop.f32.mrb[0].mxu0
    %1524 = vdwg.mxu0
    %v1525 = vmul.f32 %v1497, 0.5
    %v1526 = vmul.f32 %v1502, 0.5
    %v1527 = vmul.f32 %v1507, 0.5
    %v1528 = vmul.f32 %v1512, 0.5
    %v1529 = vmul.f32 %v1517, 0.5
    %v1530 = vmul.f32 %v1522, 0.5
    %v1531 = vmul.f32 %v1497, 0.044715
    %v1532 = vmul.f32 %v1502, 0.044715
    %v1533 = vmul.f32 %v1507, 0.044715
    %v1534 = vmul.f32 %v1512, 0.044715
    %v1535 = vmul.f32 %v1517, 0.044715
    %v1536 = vmul.f32 %v1522, 0.044715
    %v1537 = vmul.f32 %v1531, %v1497
    %v1538 = vmul.f32 %v1532, %v1502
    %v1539 = vmul.f32 %v1533, %v1507
    %v1540 = vmul.f32 %v1534, %v1512
    %v1541 = vmul.f32 %v1535, %v1517
    %v1542 = vmul.f32 %v1536, %v1522
    %v1543 = vmul.f32 %v1537, %v1497
    %v1544 = vmul.f32 %v1538, %v1502
    %v1545 = vmul.f32 %v1539, %v1507
    %v1546 = vmul.f32 %v1540, %v1512
    %v1547 = vmul.f32 %v1541, %v1517
    %v1548 = vmul.f32 %v1542, %v1522
    %v1549 = vadd.f32 %v1497, %v1543
    %v1550 = vadd.f32 %v1502, %v1544
    %v1551 = vadd.f32 %v1507, %v1545
    %v1552 = vadd.f32 %v1512, %v1546
    %v1553 = vadd.f32 %v1517, %v1547
    %v1554 = vadd.f32 %v1522, %v1548
    %v1555 = vmul.f32 %v1549, 0.7978846
    %v1556 = vmul.f32 %v1550, 0.7978846
    %v1557 = vmul.f32 %v1551, 0.7978846
    %v1558 = vmul.f32 %v1552, 0.7978846
    %v1559 = vmul.f32 %v1553, 0.7978846
    %v1560 = vmul.f32 %v1554, 0.7978846
    %v1561 = vtanh.pop %v1555
    %v1562 = vtanh.pop %v1556
    %v1563 = vtanh.pop %v1557
    %v1564 = vtanh.pop %v1558
    %v1565 = vtanh.pop %v1559
    %v1566 = vtanh.pop %v1560
    %v1567 = vadd.f32 %v1561, 1.0
    %v1568 = vadd.f32 %v1562, 1.0
    %v1569 = vadd.f32 %v1563, 1.0
    %v1570 = vadd.f32 %v1564, 1.0
    %v1571 = vadd.f32 %v1565, 1.0
    %v1572 = vadd.f32 %v1566, 1.0
    %v1573 = vmul.f32 %v1525, %v1567
    %v1574 = vmul.f32 %v1526, %v1568
    %v1575 = vmul.f32 %v1527, %v1569
    %v1576 = vmul.f32 %v1528, %v1570
    %v1577 = vmul.f32 %v1529, %v1571
    %v1578 = vmul.f32 %v1530, %v1572
    %v1579 = vld [vmem:[%s4] sm:$0xff]
    %v1580 = vld [vmem:[%s4 + $0x8] sm:$0xff]
    %v1581 = vld [vmem:[%s4 + $0x10] sm:$0xff]
    %v1582 = vld [vmem:[%s4 + $0x18] sm:$0xff]
    %v1583 = vld [vmem:[%s4 + $0x20] sm:$0xff]
    %v1584 = vld [vmem:[%s4 + $0x28] sm:$0xff]
    %v1585 = vld [vmem:[%s4 + $0x30] sm:$0xff]
    %v1586 = vld [vmem:[%s4 + $0x38] sm:$0xff]
    %vm1587 = vcmask 523264
    %v1589 = vsel %vm1587, %v1573, 0
    %v1592 = vsel %vm1587, %v1574, 0
    %v1595 = vsel %vm1587, %v1575, 0
    %v1598 = vsel %vm1587, %v1576, 0
    %v1601 = vsel %vm1587, %v1577, 0
    %v1604 = vsel %vm1587, %v1578, 0
    %1606 = vmatprep.subr.mxu0 0.0
    %1607 = vmatpush1.msra.mxu0 %v1579
    %1608 = vmatprep.subr.mxu0 0.0
    %1609 = vmatpush1.msra.mxu0 %v1580
    %1610 = vmatprep.subr.mxu0 0.0
    %1611 = vmatpush1.msra.mxu0 %v1581
    %1612 = vmatprep.subr.mxu0 0.0
    %1613 = vmatpush1.msra.mxu0 %v1582
    %1614 = vmatprep.subr.mxu0 0.0
    %1615 = vmatpush1.msra.mxu0 %v1583
    %1616 = vmatprep.subr.mxu0 0.0
    %1617 = vmatpush1.msra.mxu0 %v1584
    %1618 = vmatprep.subr.mxu0 0.0
    %1619 = vmatpush1.msra.mxu0 %v1585
    %1620 = vmatprep.subr.mxu0 0.0
    %1621 = vmatpush1.msra.mxu0 %v1586
    %1622 = vmatprep.subr.mxu0 0.0
    %1623 = vmatpush1.msra.mxu0 0.0
    %1624 = vmatprep.subr.mxu0 0.0
    %1625 = vmatpush1.msra.mxu0 0.0
    %1626 = vmatprep.subr.mxu0 0.0
    %1627 = vmatpush1.msra.mxu0 0.0
    %1628 = vmatprep.subr.mxu0 0.0
    %1629 = vmatpush1.msra.mxu0 0.0
    %1630 = vmatprep.subr.mxu0 0.0
    %1631 = vmatpush1.msra.mxu0 0.0
    %1632 = vmatprep.subr.mxu0 0.0
    %1633 = vmatpush1.msra.mxu0 0.0
    %1634 = vmatprep.subr.mxu0 0.0
    %1635 = vmatpush1.msra.mxu0 0.0
    %1636 = vmatprep.subr.mxu0 0.0
    %1637 = vmatpush1.msra.mxu0 0.0
    %1638 = vmatprep.subr.mxu0 0.0
    %1639 = vmatpush1.msra.mxu0 0.0
    %1640 = vmatprep.subr.mxu0 0.0
    %1641 = vmatpush1.msra.mxu0 0.0
    %1642 = vmatprep.subr.mxu0 0.0
    %1643 = vmatpush1.msra.mxu0 0.0
    %1644 = vmatprep.subr.mxu0 0.0
    %1645 = vmatpush1.msra.mxu0 0.0
    %1646 = vmatprep.subr.mxu0 0.0
    %1647 = vmatpush1.msra.mxu0 0.0
    %1648 = vmatprep.subr.mxu0 0.0
    %1649 = vmatpush1.msra.mxu0 0.0
    %1650 = vmatprep.subr.mxu0 0.0
    %1651 = vmatpush1.msra.mxu0 0.0
    %1652 = vmatprep.subr.mxu0 0.0
    %1653 = vmatpush1.msra.mxu0 0.0
    %1654 = vmatprep.subr.mxu0 0.0
    %1655 = vmatpush1.msra.mxu0 0.0
    %1656 = vmatprep.subr.mxu0 0.0
    %1657 = vmatpush1.msra.mxu0 0.0
    %1658 = vmatprep.subr.mxu0 0.0
    %1659 = vmatpush1.msra.mxu0 0.0
    %1660 = vmatprep.subr.mxu0 0.0
    %1661 = vmatpush1.msra.mxu0 0.0
    %1662 = vmatprep.subr.mxu0 0.0
    %1663 = vmatpush1.msra.mxu0 0.0
    %1664 = vmatprep.subr.mxu0 0.0
    %1665 = vmatpush1.msra.mxu0 0.0
    %1666 = vmatprep.subr.mxu0 0.0
    %1667 = vmatpush1.msra.mxu0 0.0
    %1668 = vmatprep.subr.mxu0 0.0
    %1669 = vmatpush1.msra.mxu0 0.0
    %1670 = vmatprep.mubr.f32.mxu0 0.0
    %1671 = vmatmul.mubr.f32.gmra.mrb[0].mxu0 %v1589
    %v1672 = vpop.f32.mrb[0].mxu0
    %v1673 = vadd.f32 0.0, %v1672
    %v1674 = vpop.f32.mrb[0].mxu0
    %1675 = vmatprep.mubr.f32.mxu0 0.0
    %1676 = vmatmul.mubr.f32.gmra.mrb[0].mxu0 %v1592
    %v1677 = vpop.f32.mrb[0].mxu0
    %v1678 = vadd.f32 0.0, %v1677
    %v1679 = vpop.f32.mrb[0].mxu0
    %1680 = vmatprep.mubr.f32.mxu0 0.0
    %1681 = vmatmul.mubr.f32.gmra.mrb[0].mxu0 %v1595
    %v1682 = vpop.f32.mrb[0].mxu0
    %v1683 = vadd.f32 0.0, %v1682
    %v1684 = vpop.f32.mrb[0].mxu0
    %1685 = vmatprep.mubr.f32.mxu0 0.0
    %1686 = vmatmul.mubr.f32.gmra.mrb[0].mxu0 %v1598
    %v1687 = vpop.f32.mrb[0].mxu0
    %v1688 = vadd.f32 0.0, %v1687
    %v1689 = vpop.f32.mrb[0].mxu0
    %1690 = vmatprep.mubr.f32.mxu0 0.0
    %1691 = vmatmul.mubr.f32.gmra.mrb[0].mxu0 %v1601
    %v1692 = vpop.f32.mrb[0].mxu0
    %v1693 = vadd.f32 0.0, %v1692
    %v1694 = vpop.f32.mrb[0].mxu0
    %1695 = vmatprep.mubr.f32.mxu0 0.0
    %1696 = vmatmul.mubr.f32.gmra.mrb[0].mxu0 %v1604
    %v1697 = vpop.f32.mrb[0].mxu0
    %v1698 = vadd.f32 0.0, %v1697
    %v1699 = vpop.f32.mrb[0].mxu0
    %1700 = vdwg.mxu0
    %v1701 = vadd.f32 %v1300, %v1673
    %v1702 = vadd.f32 %v1301, %v1678
    %v1703 = vadd.f32 %v1302, %v1683
    %v1704 = vadd.f32 %v1303, %v1688
    %v1705 = vadd.f32 %v1304, %v1693
    %v1706 = vadd.f32 %v1305, %v1698
    %v1707 = vlaneseq
    %v1708 = vshrl.u32 %v1707, 7
    %v1709 = vsub.s32 3, %v1708
    %v1710 = vrot.slane %v352, %v1709
    %v1711 = vadd.f32 %v1701, %v1710
    %v1712 = vadd.f32 %v1702, %v1710
    %v1713 = vadd.f32 %v1703, %v1710
    %v1714 = vadd.f32 %v1704, %v1710
    %v1715 = vadd.f32 %v1705, %v1710
    %v1716 = vadd.f32 %v1706, %v1710
    %v1717 = vld [vmem:[%s5 + $0xe0] sm:$0xf0]
    %v1718 = vld [vmem:[%s5 + $0xf0] sm:$0xf0]
    %v1719 = vsel %vm353, %v1711, 0.0
    %1720 = vadd.xlane.f32.xlu0 %v1719
    %v1721 = vpop.xlane.xlu0 %1720
    %v1722 = vsel %vm353, %v1712, 0.0
    %1723 = vadd.xlane.f32.xlu0 %v1722
    %v1724 = vpop.xlane.xlu0 %1723
    %v1725 = vsel %vm353, %v1713, 0.0
    %1726 = vadd.xlane.f32.xlu0 %v1725
    %v1727 = vpop.xlane.xlu0 %1726
    %v1728 = vsel %vm353, %v1714, 0.0
    %1729 = vadd.xlane.f32.xlu0 %v1728
    %v1730 = vpop.xlane.xlu0 %1729
    %v1731 = vsel %vm353, %v1715, 0.0
    %1732 = vadd.xlane.f32.xlu0 %v1731
    %v1733 = vpop.xlane.xlu0 %1732
    %v1734 = vsel %vm353, %v1716, 0.0
    %1735 = vadd.xlane.f32.xlu0 %v1734
    %v1736 = vpop.xlane.xlu0 %1735
    %v1737 = vmul.f32 %v1721, %v372
    %v1738 = vmul.f32 %v1724, %v372
    %v1739 = vmul.f32 %v1727, %v372
    %v1740 = vmul.f32 %v1730, %v372
    %v1741 = vmul.f32 %v1733, %v372
    %v1742 = vmul.f32 %v1736, %v372
    %v1743 = vsub.f32 %v1711, %v1737
    %v1744 = vsub.f32 %v1712, %v1738
    %v1745 = vsub.f32 %v1713, %v1739
    %v1746 = vsub.f32 %v1714, %v1740
    %v1747 = vsub.f32 %v1715, %v1741
    %v1748 = vsub.f32 %v1716, %v1742
    %v1749 = vmul.f32 %v1743, %v1743
    %v1750 = vmul.f32 %v1744, %v1744
    %v1751 = vmul.f32 %v1745, %v1745
    %v1752 = vmul.f32 %v1746, %v1746
    %v1753 = vmul.f32 %v1747, %v1747
    %v1754 = vmul.f32 %v1748, %v1748
    %v1755 = vsel %vm353, %v1749, 0.0
    %1756 = vadd.xlane.f32.xlu0 %v1755
    %v1757 = vpop.xlane.xlu0 %1756
    %v1758 = vsel %vm353, %v1750, 0.0
    %1759 = vadd.xlane.f32.xlu0 %v1758
    %v1760 = vpop.xlane.xlu0 %1759
    %v1761 = vsel %vm353, %v1751, 0.0
    %1762 = vadd.xlane.f32.xlu0 %v1761
    %v1763 = vpop.xlane.xlu0 %1762
    %v1764 = vsel %vm353, %v1752, 0.0
    %1765 = vadd.xlane.f32.xlu0 %v1764
    %v1766 = vpop.xlane.xlu0 %1765
    %v1767 = vsel %vm353, %v1753, 0.0
    %1768 = vadd.xlane.f32.xlu0 %v1767
    %v1769 = vpop.xlane.xlu0 %1768
    %v1770 = vsel %vm353, %v1754, 0.0
    %1771 = vadd.xlane.f32.xlu0 %v1770
    %v1772 = vpop.xlane.xlu0 %1771
    %v1773 = vmul.f32 %v1757, %v372
    %v1774 = vmul.f32 %v1760, %v372
    %v1775 = vmul.f32 %v1763, %v372
    %v1776 = vmul.f32 %v1766, %v372
    %v1777 = vmul.f32 %v1769, %v372
    %v1778 = vmul.f32 %v1772, %v372
    %v1779 = vadd.f32 %v1773, 1e-05
    %v1780 = vadd.f32 %v1774, 1e-05
    %v1781 = vadd.f32 %v1775, 1e-05
    %v1782 = vadd.f32 %v1776, 1e-05
    %v1783 = vadd.f32 %v1777, 1e-05
    %v1784 = vadd.f32 %v1778, 1e-05
    %v1785 = vrsqrt.pop %v1779
    %v1786 = vrsqrt.pop %v1780
    %v1787 = vrsqrt.pop %v1781
    %v1788 = vrsqrt.pop %v1782
    %v1789 = vrsqrt.pop %v1783
    %v1790 = vrsqrt.pop %v1784
    %v1791 = vmul.f32 %v1743, %v1785
    %v1792 = vmul.f32 %v1744, %v1786
    %v1793 = vmul.f32 %v1745, %v1787
    %v1794 = vmul.f32 %v1746, %v1788
    %v1795 = vmul.f32 %v1747, %v1789
    %v1796 = vmul.f32 %v1748, %v1790
    %v1797 = vlaneseq
    %v1798 = vshrl.u32 %v1797, 7
    %v1799 = vsub.s32 4, %v1798
    %v1800 = vrot.slane %v1717, %v1799
    %v1801 = vmul.f32 %v1791, %v1800
    %v1802 = vmul.f32 %v1792, %v1800
    %v1803 = vmul.f32 %v1793, %v1800
    %v1804 = vmul.f32 %v1794, %v1800
    %v1805 = vmul.f32 %v1795, %v1800
    %v1806 = vmul.f32 %v1796, %v1800
    %v1807 = vlaneseq
    %v1808 = vshrl.u32 %v1807, 7
    %v1809 = vsub.s32 5, %v1808
    %v1810 = vrot.slane %v1717, %v1809
    %v1811 = vadd.f32 %v1801, %v1810
    %v1812 = vadd.f32 %v1802, %v1810
    %v1813 = vadd.f32 %v1803, %v1810
    %v1814 = vadd.f32 %v1804, %v1810
    %v1815 = vadd.f32 %v1805, %v1810
    %v1816 = vadd.f32 %v1806, %v1810
    %s1817 = scalar_lea.vmem [#allocation2], 32
    %v1818 = vld [vmem:[%s1817] sm:$0xff]
    %v1819 = vld [vmem:[%s1817 + $0x8] sm:$0xff]
    %v1820 = vld [vmem:[%s1817 + $0x10] sm:$0xff]
    %v1821 = vld [vmem:[%s1817 + $0x18] sm:$0xff]
    %v1822 = vlaneseq
    %v1823 = vshrl.u32 %v1822, 7
    %v1824 = vsub.s32 4, %v1823
    %v1825 = vrot.slane %v1718, %v1824
    %v1827 = vsel %vm353, %v1811, 0
    %v1830 = vsel %vm353, %v1812, 0
    %v1833 = vsel %vm353, %v1813, 0
    %v1836 = vsel %vm353, %v1814, 0
    %v1839 = vsel %vm353, %v1815, 0
    %v1842 = vsel %vm353, %v1816, 0
    %1844 = vmatprep.subr.mxu0 0.0
    %1845 = vmatpush1.msra.mxu0 %v1818
    %1846 = vmatprep.subr.mxu0 0.0
    %1847 = vmatpush1.msra.mxu0 %v1819
    %1848 = vmatprep.subr.mxu0 0.0
    %1849 = vmatpush1.msra.mxu0 %v1820
    %1850 = vmatprep.subr.mxu0 0.0
    %1851 = vmatpush1.msra.mxu0 %v1821
    %1852 = vmatprep.subr.mxu0 0.0
    %1853 = vmatpush1.msra.mxu0 0.0
    %1854 = vmatprep.subr.mxu0 0.0
    %1855 = vmatpush1.msra.mxu0 0.0
    %1856 = vmatprep.subr.mxu0 0.0
    %1857 = vmatpush1.msra.mxu0 0.0
    %1858 = vmatprep.subr.mxu0 0.0
    %1859 = vmatpush1.msra.mxu0 0.0
    %1860 = vmatprep.subr.mxu0 0.0
    %1861 = vmatpush1.msra.mxu0 0.0
    %1862 = vmatprep.subr.mxu0 0.0
    %1863 = vmatpush1.msra.mxu0 0.0
    %1864 = vmatprep.subr.mxu0 0.0
    %1865 = vmatpush1.msra.mxu0 0.0
    %1866 = vmatprep.subr.mxu0 0.0
    %1867 = vmatpush1.msra.mxu0 0.0
    %1868 = vmatprep.subr.mxu0 0.0
    %1869 = vmatpush1.msra.mxu0 0.0
    %1870 = vmatprep.subr.mxu0 0.0
    %1871 = vmatpush1.msra.mxu0 0.0
    %1872 = vmatprep.subr.mxu0 0.0
    %1873 = vmatpush1.msra.mxu0 0.0
    %1874 = vmatprep.subr.mxu0 0.0
    %1875 = vmatpush1.msra.mxu0 0.0
    %1876 = vmatprep.subr.mxu0 0.0
    %1877 = vmatpush1.msra.mxu0 0.0
    %1878 = vmatprep.subr.mxu0 0.0
    %1879 = vmatpush1.msra.mxu0 0.0
    %1880 = vmatprep.subr.mxu0 0.0
    %1881 = vmatpush1.msra.mxu0 0.0
    %1882 = vmatprep.subr.mxu0 0.0
    %1883 = vmatpush1.msra.mxu0 0.0
    %1884 = vmatprep.subr.mxu0 0.0
    %1885 = vmatpush1.msra.mxu0 0.0
    %1886 = vmatprep.subr.mxu0 0.0
    %1887 = vmatpush1.msra.mxu0 0.0
    %1888 = vmatprep.subr.mxu0 0.0
    %1889 = vmatpush1.msra.mxu0 0.0
    %1890 = vmatprep.subr.mxu0 0.0
    %1891 = vmatpush1.msra.mxu0 0.0
    %1892 = vmatprep.subr.mxu0 0.0
    %1893 = vmatpush1.msra.mxu0 0.0
    %1894 = vmatprep.subr.mxu0 0.0
    %1895 = vmatpush1.msra.mxu0 0.0
    %1896 = vmatprep.subr.mxu0 0.0
    %1897 = vmatpush1.msra.mxu0 0.0
    %1898 = vmatprep.subr.mxu0 0.0
    %1899 = vmatpush1.msra.mxu0 0.0
    %1900 = vmatprep.subr.mxu0 0.0
    %1901 = vmatpush1.msra.mxu0 0.0
    %1902 = vmatprep.subr.mxu0 0.0
    %1903 = vmatpush1.msra.mxu0 0.0
    %1904 = vmatprep.subr.mxu0 0.0
    %1905 = vmatpush1.msra.mxu0 0.0
    %1906 = vmatprep.subr.mxu0 0.0
    %1907 = vmatpush1.msra.mxu0 0.0
    %1908 = vmatprep.mubr.f32.mxu0 0.0
    %1909 = vmatmul.mubr.f32.gmra.mrb[0].mxu0 %v1827
    %v1910 = vpop.f32.mrb[0].mxu0
    %v1911 = vadd.f32 %v1825, %v1910
    %v1912 = vpop.f32.mrb[0].mxu0
    %1913 = vmatprep.mubr.f32.mxu0 0.0
    %1914 = vmatmul.mubr.f32.gmra.mrb[0].mxu0 %v1830
    %v1915 = vpop.f32.mrb[0].mxu0
    %v1916 = vadd.f32 %v1825, %v1915
    %v1917 = vpop.f32.mrb[0].mxu0
    %1918 = vmatprep.mubr.f32.mxu0 0.0
    %1919 = vmatmul.mubr.f32.gmra.mrb[0].mxu0 %v1833
    %v1920 = vpop.f32.mrb[0].mxu0
    %v1921 = vadd.f32 %v1825, %v1920
    %v1922 = vpop.f32.mrb[0].mxu0
    %1923 = vmatprep.mubr.f32.mxu0 0.0
    %1924 = vmatmul.mubr.f32.gmra.mrb[0].mxu0 %v1836
    %v1925 = vpop.f32.mrb[0].mxu0
    %v1926 = vadd.f32 %v1825, %v1925
    %v1927 = vpop.f32.mrb[0].mxu0
    %1928 = vmatprep.mubr.f32.mxu0 0.0
    %1929 = vmatmul.mubr.f32.gmra.mrb[0].mxu0 %v1839
    %v1930 = vpop.f32.mrb[0].mxu0
    %v1931 = vadd.f32 %v1825, %v1930
    %v1932 = vpop.f32.mrb[0].mxu0
    %1933 = vmatprep.mubr.f32.mxu0 0.0
    %1934 = vmatmul.mubr.f32.gmra.mrb[0].mxu0 %v1842
    %v1935 = vpop.f32.mrb[0].mxu0
    %v1936 = vadd.f32 %v1825, %v1935
    %v1937 = vpop.f32.mrb[0].mxu0
    %1938 = vdwg.mxu0
    %1945 = vrot.lane.b32.xlu0 %v1911, 112
    %v1946 = vpop.permute.xlu0 %1945
    %1947 = vrot.lane.b32.xlu0 %v1916, 112
    %v1948 = vpop.permute.xlu0 %1947
    %1949 = vrot.lane.b32.xlu0 %v1921, 112
    %v1950 = vpop.permute.xlu0 %1949
    %1951 = vrot.lane.b32.xlu0 %v1926, 112
    %v1952 = vpop.permute.xlu0 %1951
    %1953 = vrot.lane.b32.xlu0 %v1931, 112
    %v1954 = vpop.permute.xlu0 %1953
    %1955 = vrot.lane.b32.xlu0 %v1936, 112
    %v1956 = vpop.permute.xlu0 %1955
    %1957 = vrot.lane.b32.xlu0 %v1911, 96
    %v1958 = vpop.permute.xlu0 %1957
    %1959 = vrot.lane.b32.xlu0 %v1916, 96
    %v1960 = vpop.permute.xlu0 %1959
    %1961 = vrot.lane.b32.xlu0 %v1921, 96
    %v1962 = vpop.permute.xlu0 %1961
    %1963 = vrot.lane.b32.xlu0 %v1926, 96
    %v1964 = vpop.permute.xlu0 %1963
    %1965 = vrot.lane.b32.xlu0 %v1931, 96
    %v1966 = vpop.permute.xlu0 %1965
    %1967 = vrot.lane.b32.xlu0 %v1936, 96
    %v1968 = vpop.permute.xlu0 %1967
    %1969 = vrot.lane.b32.xlu0 %v1946, 96
    %v1970 = vpop.permute.xlu0 %1969
    %1971 = vrot.lane.b32.xlu0 %v1948, 96
    %v1972 = vpop.permute.xlu0 %1971
    %1973 = vrot.lane.b32.xlu0 %v1950, 96
    %v1974 = vpop.permute.xlu0 %1973
    %1975 = vrot.lane.b32.xlu0 %v1952, 96
    %v1976 = vpop.permute.xlu0 %1975
    %1977 = vrot.lane.b32.xlu0 %v1954, 96
    %v1978 = vpop.permute.xlu0 %1977
    %1979 = vrot.lane.b32.xlu0 %v1956, 96
    %v1980 = vpop.permute.xlu0 %1979
    %v1981 = vsel %vm79, %v1911, 0
    %v1983 = vsel %vm79, %v1916, 0
    %v1985 = vsel %vm79, %v1921, 0
    %v1987 = vsel %vm79, %v1926, 0
    %v1989 = vsel %vm79, %v1931, 0
    %v1991 = vsel %vm79, %v1936, 0
    %v1993 = vsel %vm79, %v1946, 0
    %v1995 = vsel %vm79, %v1948, 0
    %v1997 = vsel %vm79, %v1950, 0
    %v1999 = vsel %vm79, %v1952, 0
    %v2001 = vsel %vm79, %v1954, 0
    %v2003 = vsel %vm79, %v1956, 0
    %v2005 = vsel %vm79, %v1958, 0
    %v2007 = vsel %vm79, %v1960, 0
    %v2009 = vsel %vm79, %v1962, 0
    %v2011 = vsel %vm79, %v1964, 0
    %v2013 = vsel %vm79, %v1966, 0
    %v2015 = vsel %vm79, %v1968, 0
    %v2017 = vsel %vm79, %v1970, 0
    %v2019 = vsel %vm79, %v1972, 0
    %v2021 = vsel %vm79, %v1974, 0
    %v2023 = vsel %vm79, %v1976, 0
    %v2025 = vsel %vm79, %v1978, 0
    %v2027 = vsel %vm79, %v1980, 0
    %2029 = vmatprep.subr.mxu0 0.0
    %2030 = vmatpush1.xpose.msra.mxu0 %v2005
    %2031 = vmatprep.subr.mxu0 0.0
    %2032 = vmatpush1.xpose.msra.mxu0 %v2007
    %2033 = vmatprep.subr.mxu0 0.0
    %2034 = vmatpush1.xpose.msra.mxu0 %v2009
    %2035 = vmatprep.subr.mxu0 0.0
    %2036 = vmatpush1.xpose.msra.mxu0 %v2011
    %2037 = vmatprep.subr.mxu0 0.0
    %2038 = vmatpush1.xpose.msra.mxu0 %v2013
    %2039 = vmatprep.subr.mxu0 0.0
    %2040 = vmatpush1.xpose.msra.mxu0 %v2015
    %2041 = vmatprep.subr.mxu0 0.0
    %2042 = vmatpush1.xpose.msra.mxu0 %v2017
    %2043 = vmatprep.subr.mxu0 0.0
    %2044 = vmatpush1.xpose.msra.mxu0 %v2019
    %2045 = vmatprep.subr.mxu0 0.0
    %2046 = vmatpush1.xpose.msra.mxu0 %v2021
    %2047 = vmatprep.subr.mxu0 0.0
    %2048 = vmatpush1.xpose.msra.mxu0 %v2023
    %2049 = vmatprep.subr.mxu0 0.0
    %2050 = vmatpush1.xpose.msra.mxu0 %v2025
    %2051 = vmatprep.subr.mxu0 0.0
    %2052 = vmatpush1.xpose.msra.mxu0 %v2027
    %2053 = vmatprep.subr.mxu0 0.0
    %2054 = vmatpush1.xpose.msra.mxu0 0.0
    %2055 = vmatprep.subr.mxu0 0.0
    %2056 = vmatpush1.xpose.msra.mxu0 0.0
    %2057 = vmatprep.subr.mxu0 0.0
    %2058 = vmatpush1.xpose.msra.mxu0 0.0
    %2059 = vmatprep.subr.mxu0 0.0
    %2060 = vmatpush1.xpose.msra.mxu0 0.0
    %2061 = vmatprep.subr.mxu0 0.0
    %2062 = vmatpush1.xpose.msra.mxu0 0.0
    %2063 = vmatprep.subr.mxu0 0.0
    %2064 = vmatpush1.xpose.msra.mxu0 0.0
    %2065 = vmatprep.subr.mxu0 0.0
    %2066 = vmatpush1.xpose.msra.mxu0 0.0
    %2067 = vmatprep.subr.mxu0 0.0
    %2068 = vmatpush1.xpose.msra.mxu0 0.0
    %2069 = vmatprep.subr.mxu0 0.0
    %2070 = vmatpush1.xpose.msra.mxu0 0.0
    %2071 = vmatprep.subr.mxu0 0.0
    %2072 = vmatpush1.xpose.msra.mxu0 0.0
    %2073 = vmatprep.subr.mxu0 0.0
    %2074 = vmatpush1.xpose.msra.mxu0 0.0
    %2075 = vmatprep.subr.mxu0 0.0
    %2076 = vmatpush1.xpose.msra.mxu0 0.0
    %2077 = vmatprep.subr.mxu0 0.0
    %2078 = vmatpush1.xpose.msra.mxu0 0.0
    %2079 = vmatprep.subr.mxu0 0.0
    %2080 = vmatpush1.xpose.msra.mxu0 0.0
    %2081 = vmatprep.subr.mxu0 0.0
    %2082 = vmatpush1.xpose.msra.mxu0 0.0
    %2083 = vmatprep.subr.mxu0 0.0
    %2084 = vmatpush1.xpose.msra.mxu0 0.0
    %2085 = vmatprep.subr.mxu0 0.0
    %2086 = vmatpush1.xpose.msra.mxu0 0.0
    %2087 = vmatprep.subr.mxu0 0.0
    %2088 = vmatpush1.xpose.msra.mxu0 0.0
    %2089 = vmatprep.subr.mxu0 0.0
    %2090 = vmatpush1.xpose.msra.mxu0 0.0
    %2091 = vmatprep.subr.mxu0 0.0
    %2092 = vmatpush1.xpose.msra.mxu0 0.0
    %2093 = vmatprep.mubr.f32.mxu0 0.0
    %2094 = vmatmul.mubr.f32.gmra.mrb[0].mxu0 %v1981
    %v2095 = vpop.f32.mrb[0].mxu0
    %v2096 = vadd.f32 0.0, %v2095
    %v2097 = vpop.f32.mrb[0].mxu0
    %2098 = vmatprep.mubr.f32.mxu0 0.0
    %2099 = vmatmul.mubr.f32.gmra.mrb[0].mxu0 %v1983
    %v2100 = vpop.f32.mrb[0].mxu0
    %v2101 = vadd.f32 0.0, %v2100
    %v2102 = vpop.f32.mrb[0].mxu0
    %2103 = vmatprep.mubr.f32.mxu0 0.0
    %2104 = vmatmul.mubr.f32.gmra.mrb[0].mxu0 %v1985
    %v2105 = vpop.f32.mrb[0].mxu0
    %v2106 = vadd.f32 0.0, %v2105
    %v2107 = vpop.f32.mrb[0].mxu0
    %2108 = vmatprep.mubr.f32.mxu0 0.0
    %2109 = vmatmul.mubr.f32.gmra.mrb[0].mxu0 %v1987
    %v2110 = vpop.f32.mrb[0].mxu0
    %v2111 = vadd.f32 0.0, %v2110
    %v2112 = vpop.f32.mrb[0].mxu0
    %2113 = vmatprep.mubr.f32.mxu0 0.0
    %2114 = vmatmul.mubr.f32.gmra.mrb[0].mxu0 %v1989
    %v2115 = vpop.f32.mrb[0].mxu0
    %v2116 = vadd.f32 0.0, %v2115
    %v2117 = vpop.f32.mrb[0].mxu0
    %2118 = vmatprep.mubr.f32.mxu0 0.0
    %2119 = vmatmul.mubr.f32.gmra.mrb[0].mxu0 %v1991
    %v2120 = vpop.f32.mrb[0].mxu0
    %v2121 = vadd.f32 0.0, %v2120
    %v2122 = vpop.f32.mrb[0].mxu0
    %2123 = vmatprep.mubr.f32.mxu0 0.0
    %2124 = vmatmul.mubr.f32.gmra.mrb[0].mxu0 %v1993
    %v2125 = vpop.f32.mrb[0].mxu0
    %v2126 = vadd.f32 0.0, %v2125
    %v2127 = vpop.f32.mrb[0].mxu0
    %2128 = vmatprep.mubr.f32.mxu0 0.0
    %2129 = vmatmul.mubr.f32.gmra.mrb[0].mxu0 %v1995
    %v2130 = vpop.f32.mrb[0].mxu0
    %v2131 = vadd.f32 0.0, %v2130
    %v2132 = vpop.f32.mrb[0].mxu0
    %2133 = vmatprep.mubr.f32.mxu0 0.0
    %2134 = vmatmul.mubr.f32.gmra.mrb[0].mxu0 %v1997
    %v2135 = vpop.f32.mrb[0].mxu0
    %v2136 = vadd.f32 0.0, %v2135
    %v2137 = vpop.f32.mrb[0].mxu0
    %2138 = vmatprep.mubr.f32.mxu0 0.0
    %2139 = vmatmul.mubr.f32.gmra.mrb[0].mxu0 %v1999
    %v2140 = vpop.f32.mrb[0].mxu0
    %v2141 = vadd.f32 0.0, %v2140
    %v2142 = vpop.f32.mrb[0].mxu0
    %2143 = vmatprep.mubr.f32.mxu0 0.0
    %2144 = vmatmul.mubr.f32.gmra.mrb[0].mxu0 %v2001
    %v2145 = vpop.f32.mrb[0].mxu0
    %v2146 = vadd.f32 0.0, %v2145
    %v2147 = vpop.f32.mrb[0].mxu0
    %2148 = vmatprep.mubr.f32.mxu0 0.0
    %2149 = vmatmul.mubr.f32.gmra.mrb[0].mxu0 %v2003
    %v2150 = vpop.f32.mrb[0].mxu0
    %v2151 = vadd.f32 0.0, %v2150
    %v2152 = vpop.f32.mrb[0].mxu0
    %2153 = vdwg.mxu0
    %v2154 = vmul.f32 %v2096, 0.25
    %v2155 = vmul.f32 %v2101, 0.25
    %v2156 = vmul.f32 %v2106, 0.25
    %v2157 = vmul.f32 %v2111, 0.25
    %v2158 = vmul.f32 %v2116, 0.25
    %v2159 = vmul.f32 %v2121, 0.25
    %v2160 = vmul.f32 %v2126, 0.25
    %v2161 = vmul.f32 %v2131, 0.25
    %v2162 = vmul.f32 %v2136, 0.25
    %v2163 = vmul.f32 %v2141, 0.25
    %v2164 = vmul.f32 %v2146, 0.25
    %v2165 = vmul.f32 %v2151, 0.25
    %v2166 = vadd.f32 %v2154, %v339
    %v2167 = vadd.f32 %v2155, %v340
    %v2168 = vadd.f32 %v2156, %v341
    %v2169 = vadd.f32 %v2157, %v342
    %v2170 = vadd.f32 %v2158, %v343
    %v2171 = vadd.f32 %v2159, %v344
    %v2172 = vadd.f32 %v2160, %v345
    %v2173 = vadd.f32 %v2161, %v346
    %v2174 = vadd.f32 %v2162, %v347
    %v2175 = vadd.f32 %v2163, %v348
    %v2176 = vadd.f32 %v2164, %v349
    %v2177 = vadd.f32 %v2165, %v350
    %v2178 = vsel %vm813, %v2166, -inf
    %2179 = vmax.xlane.f32.xlu0 %v2178
    %v2180 = vpop.xlane.xlu0 %2179
    %v2181 = vsel %vm813, %v2167, -inf
    %2182 = vmax.xlane.f32.xlu0 %v2181
    %v2183 = vpop.xlane.xlu0 %2182
    %v2184 = vsel %vm813, %v2168, -inf
    %2185 = vmax.xlane.f32.xlu0 %v2184
    %v2186 = vpop.xlane.xlu0 %2185
    %v2187 = vsel %vm813, %v2169, -inf
    %2188 = vmax.xlane.f32.xlu0 %v2187
    %v2189 = vpop.xlane.xlu0 %2188
    %v2190 = vsel %vm813, %v2170, -inf
    %2191 = vmax.xlane.f32.xlu0 %v2190
    %v2192 = vpop.xlane.xlu0 %2191
    %v2193 = vsel %vm813, %v2171, -inf
    %2194 = vmax.xlane.f32.xlu0 %v2193
    %v2195 = vpop.xlane.xlu0 %2194
    %v2196 = vsel %vm813, %v2172, -inf
    %2197 = vmax.xlane.f32.xlu0 %v2196
    %v2198 = vpop.xlane.xlu0 %2197
    %v2199 = vsel %vm813, %v2173, -inf
    %2200 = vmax.xlane.f32.xlu0 %v2199
    %v2201 = vpop.xlane.xlu0 %2200
    %v2202 = vsel %vm813, %v2174, -inf
    %2203 = vmax.xlane.f32.xlu0 %v2202
    %v2204 = vpop.xlane.xlu0 %2203
    %v2205 = vsel %vm813, %v2175, -inf
    %2206 = vmax.xlane.f32.xlu0 %v2205
    %v2207 = vpop.xlane.xlu0 %2206
    %v2208 = vsel %vm813, %v2176, -inf
    %2209 = vmax.xlane.f32.xlu0 %v2208
    %v2210 = vpop.xlane.xlu0 %2209
    %v2211 = vsel %vm813, %v2177, -inf
    %2212 = vmax.xlane.f32.xlu0 %v2211
    %v2213 = vpop.xlane.xlu0 %2212
    %v2214 = vsub.f32 %v2166, %v2180
    %v2215 = vsub.f32 %v2167, %v2183
    %v2216 = vsub.f32 %v2168, %v2186
    %v2217 = vsub.f32 %v2169, %v2189
    %v2218 = vsub.f32 %v2170, %v2192
    %v2219 = vsub.f32 %v2171, %v2195
    %v2220 = vsub.f32 %v2172, %v2198
    %v2221 = vsub.f32 %v2173, %v2201
    %v2222 = vsub.f32 %v2174, %v2204
    %v2223 = vsub.f32 %v2175, %v2207
    %v2224 = vsub.f32 %v2176, %v2210
    %v2225 = vsub.f32 %v2177, %v2213
    %v2226 = vmul.f32 %v2214, 1.442695
    %v2227 = vpow.pop %v2226
    %v2228 = vmul.f32 %v2215, 1.442695
    %v2229 = vpow.pop %v2228
    %v2230 = vmul.f32 %v2216, 1.442695
    %v2231 = vpow.pop %v2230
    %v2232 = vmul.f32 %v2217, 1.442695
    %v2233 = vpow.pop %v2232
    %v2234 = vmul.f32 %v2218, 1.442695
    %v2235 = vpow.pop %v2234
    %v2236 = vmul.f32 %v2219, 1.442695
    %v2237 = vpow.pop %v2236
    %v2238 = vmul.f32 %v2220, 1.442695
    %v2239 = vpow.pop %v2238
    %v2240 = vmul.f32 %v2221, 1.442695
    %v2241 = vpow.pop %v2240
    %v2242 = vmul.f32 %v2222, 1.442695
    %v2243 = vpow.pop %v2242
    %v2244 = vmul.f32 %v2223, 1.442695
    %v2245 = vpow.pop %v2244
    %v2246 = vmul.f32 %v2224, 1.442695
    %v2247 = vpow.pop %v2246
    %v2248 = vmul.f32 %v2225, 1.442695
    %v2249 = vpow.pop %v2248
    %v2250 = vsel %vm813, %v2227, 0.0
    %2251 = vadd.xlane.f32.xlu0 %v2250
    %v2252 = vpop.xlane.xlu0 %2251
    %v2253 = vsel %vm813, %v2229, 0.0
    %2254 = vadd.xlane.f32.xlu0 %v2253
    %v2255 = vpop.xlane.xlu0 %2254
    %v2256 = vsel %vm813, %v2231, 0.0
    %2257 = vadd.xlane.f32.xlu0 %v2256
    %v2258 = vpop.xlane.xlu0 %2257
    %v2259 = vsel %vm813, %v2233, 0.0
    %2260 = vadd.xlane.f32.xlu0 %v2259
    %v2261 = vpop.xlane.xlu0 %2260
    %v2262 = vsel %vm813, %v2235, 0.0
    %2263 = vadd.xlane.f32.xlu0 %v2262
    %v2264 = vpop.xlane.xlu0 %2263
    %v2265 = vsel %vm813, %v2237, 0.0
    %2266 = vadd.xlane.f32.xlu0 %v2265
    %v2267 = vpop.xlane.xlu0 %2266
    %v2268 = vsel %vm813, %v2239, 0.0
    %2269 = vadd.xlane.f32.xlu0 %v2268
    %v2270 = vpop.xlane.xlu0 %2269
    %v2271 = vsel %vm813, %v2241, 0.0
    %2272 = vadd.xlane.f32.xlu0 %v2271
    %v2273 = vpop.xlane.xlu0 %2272
    %v2274 = vsel %vm813, %v2243, 0.0
    %2275 = vadd.xlane.f32.xlu0 %v2274
    %v2276 = vpop.xlane.xlu0 %2275
    %v2277 = vsel %vm813, %v2245, 0.0
    %2278 = vadd.xlane.f32.xlu0 %v2277
    %v2279 = vpop.xlane.xlu0 %2278
    %v2280 = vsel %vm813, %v2247, 0.0
    %2281 = vadd.xlane.f32.xlu0 %v2280
    %v2282 = vpop.xlane.xlu0 %2281
    %v2283 = vsel %vm813, %v2249, 0.0
    %2284 = vadd.xlane.f32.xlu0 %v2283
    %v2285 = vpop.xlane.xlu0 %2284
    %v2286 = vrcp.pop %v2252
    %v2287 = vrcp.pop %v2255
    %v2288 = vrcp.pop %v2258
    %v2289 = vrcp.pop %v2261
    %v2290 = vrcp.pop %v2264
    %v2291 = vrcp.pop %v2267
    %v2292 = vrcp.pop %v2270
    %v2293 = vrcp.pop %v2273
    %v2294 = vrcp.pop %v2276
    %v2295 = vrcp.pop %v2279
    %v2296 = vrcp.pop %v2282
    %v2297 = vrcp.pop %v2285
    %v2298 = vmul.f32 %v2227, %v2286
    %v2299 = vmul.f32 %v2229, %v2287
    %v2300 = vmul.f32 %v2231, %v2288
    %v2301 = vmul.f32 %v2233, %v2289
    %v2302 = vmul.f32 %v2235, %v2290
    %v2303 = vmul.f32 %v2237, %v2291
    %v2304 = vmul.f32 %v2239, %v2292
    %v2305 = vmul.f32 %v2241, %v2293
    %v2306 = vmul.f32 %v2243, %v2294
    %v2307 = vmul.f32 %v2245, %v2295
    %v2308 = vmul.f32 %v2247, %v2296
    %v2309 = vmul.f32 %v2249, %v2297
    %2310 = vrot.lane.b32.xlu0 %v1911, 64
    %v2311 = vpop.permute.xlu0 %2310
    %2312 = vrot.lane.b32.xlu0 %v1916, 64
    %v2313 = vpop.permute.xlu0 %2312
    %2314 = vrot.lane.b32.xlu0 %v1921, 64
    %v2315 = vpop.permute.xlu0 %2314
    %2316 = vrot.lane.b32.xlu0 %v1926, 64
    %v2317 = vpop.permute.xlu0 %2316
    %2318 = vrot.lane.b32.xlu0 %v1931, 64
    %v2319 = vpop.permute.xlu0 %2318
    %2320 = vrot.lane.b32.xlu0 %v1936, 64
    %v2321 = vpop.permute.xlu0 %2320
    %2322 = vrot.lane.b32.xlu0 %v1946, 64
    %v2323 = vpop.permute.xlu0 %2322
    %2324 = vrot.lane.b32.xlu0 %v1948, 64
    %v2325 = vpop.permute.xlu0 %2324
    %2326 = vrot.lane.b32.xlu0 %v1950, 64
    %v2327 = vpop.permute.xlu0 %2326
    %2328 = vrot.lane.b32.xlu0 %v1952, 64
    %v2329 = vpop.permute.xlu0 %2328
    %2330 = vrot.lane.b32.xlu0 %v1954, 64
    %v2331 = vpop.permute.xlu0 %2330
    %2332 = vrot.lane.b32.xlu0 %v1956, 64
    %v2333 = vpop.permute.xlu0 %2332
    %v2347 = vsel %vm813, %v2298, 0
    %v2350 = vsel %vm813, %v2299, 0
    %v2353 = vsel %vm813, %v2300, 0
    %v2356 = vsel %vm813, %v2301, 0
    %v2359 = vsel %vm813, %v2302, 0
    %v2362 = vsel %vm813, %v2303, 0
    %v2365 = vsel %vm813, %v2304, 0
    %v2368 = vsel %vm813, %v2305, 0
    %v2371 = vsel %vm813, %v2306, 0
    %v2374 = vsel %vm813, %v2307, 0
    %v2377 = vsel %vm813, %v2308, 0
    %v2380 = vsel %vm813, %v2309, 0
    %2382 = vmatprep.subr.mxu0 0.0
    %2383 = vmatpush1.msra.mxu0 %v2311
    %2384 = vmatprep.subr.mxu0 0.0
    %2385 = vmatpush1.msra.mxu0 %v2313
    %2386 = vmatprep.subr.mxu0 0.0
    %2387 = vmatpush1.msra.mxu0 %v2315
    %2388 = vmatprep.subr.mxu0 0.0
    %2389 = vmatpush1.msra.mxu0 %v2317
    %2390 = vmatprep.subr.mxu0 0.0
    %2391 = vmatpush1.msra.mxu0 %v2319
    %2392 = vmatprep.subr.mxu0 0.0
    %2393 = vmatpush1.msra.mxu0 %v2321
    %2394 = vmatprep.subr.mxu0 0.0
    %2395 = vmatpush1.msra.mxu0 %v2323
    %2396 = vmatprep.subr.mxu0 0.0
    %2397 = vmatpush1.msra.mxu0 %v2325
    %2398 = vmatprep.subr.mxu0 0.0
    %2399 = vmatpush1.msra.mxu0 %v2327
    %2400 = vmatprep.subr.mxu0 0.0
    %2401 = vmatpush1.msra.mxu0 %v2329
    %2402 = vmatprep.subr.mxu0 0.0
    %2403 = vmatpush1.msra.mxu0 %v2331
    %2404 = vmatprep.subr.mxu0 0.0
    %2405 = vmatpush1.msra.mxu0 %v2333
    %2406 = vmatprep.subr.mxu0 0.0
    %2407 = vmatpush1.msra.mxu0 0.0
    %2408 = vmatprep.subr.mxu0 0.0
    %2409 = vmatpush1.msra.mxu0 0.0
    %2410 = vmatprep.subr.mxu0 0.0
    %2411 = vmatpush1.msra.mxu0 0.0
    %2412 = vmatprep.subr.mxu0 0.0
    %2413 = vmatpush1.msra.mxu0 0.0
    %2414 = vmatprep.subr.mxu0 0.0
    %2415 = vmatpush1.msra.mxu0 0.0
    %2416 = vmatprep.subr.mxu0 0.0
    %2417 = vmatpush1.msra.mxu0 0.0
    %2418 = vmatprep.subr.mxu0 0.0
    %2419 = vmatpush1.msra.mxu0 0.0
    %2420 = vmatprep.subr.mxu0 0.0
    %2421 = vmatpush1.msra.mxu0 0.0
    %2422 = vmatprep.subr.mxu0 0.0
    %2423 = vmatpush1.msra.mxu0 0.0
    %2424 = vmatprep.subr.mxu0 0.0
    %2425 = vmatpush1.msra.mxu0 0.0
    %2426 = vmatprep.subr.mxu0 0.0
    %2427 = vmatpush1.msra.mxu0 0.0
    %2428 = vmatprep.subr.mxu0 0.0
    %2429 = vmatpush1.msra.mxu0 0.0
    %2430 = vmatprep.subr.mxu0 0.0
    %2431 = vmatpush1.msra.mxu0 0.0
    %2432 = vmatprep.subr.mxu0 0.0
    %2433 = vmatpush1.msra.mxu0 0.0
    %2434 = vmatprep.subr.mxu0 0.0
    %2435 = vmatpush1.msra.mxu0 0.0
    %2436 = vmatprep.subr.mxu0 0.0
    %2437 = vmatpush1.msra.mxu0 0.0
    %2438 = vmatprep.subr.mxu0 0.0
    %2439 = vmatpush1.msra.mxu0 0.0
    %2440 = vmatprep.subr.mxu0 0.0
    %2441 = vmatpush1.msra.mxu0 0.0
    %2442 = vmatprep.subr.mxu0 0.0
    %2443 = vmatpush1.msra.mxu0 0.0
    %2444 = vmatprep.subr.mxu0 0.0
    %2445 = vmatpush1.msra.mxu0 0.0
    %2446 = vmatprep.mubr.f32.mxu0 0.0
    %2447 = vmatmul.mubr.f32.gmra.mrb[0].mxu0 %v2347
    %v2448 = vpop.f32.mrb[0].mxu0
    %v2449 = vadd.f32 0.0, %v2448
    %v2450 = vpop.f32.mrb[0].mxu0
    %2451 = vmatprep.mubr.f32.mxu0 0.0
    %2452 = vmatmul.mubr.f32.gmra.mrb[0].mxu0 %v2350
    %v2453 = vpop.f32.mrb[0].mxu0
    %v2454 = vadd.f32 0.0, %v2453
    %v2455 = vpop.f32.mrb[0].mxu0
    %2456 = vmatprep.mubr.f32.mxu0 0.0
    %2457 = vmatmul.mubr.f32.gmra.mrb[0].mxu0 %v2353
    %v2458 = vpop.f32.mrb[0].mxu0
    %v2459 = vadd.f32 0.0, %v2458
    %v2460 = vpop.f32.mrb[0].mxu0
    %2461 = vmatprep.mubr.f32.mxu0 0.0
    %2462 = vmatmul.mubr.f32.gmra.mrb[0].mxu0 %v2356
    %v2463 = vpop.f32.mrb[0].mxu0
    %v2464 = vadd.f32 0.0, %v2463
    %v2465 = vpop.f32.mrb[0].mxu0
    %2466 = vmatprep.mubr.f32.mxu0 0.0
    %2467 = vmatmul.mubr.f32.gmra.mrb[0].mxu0 %v2359
    %v2468 = vpop.f32.mrb[0].mxu0
    %v2469 = vadd.f32 0.0, %v2468
    %v2470 = vpop.f32.mrb[0].mxu0
    %2471 = vmatprep.mubr.f32.mxu0 0.0
    %2472 = vmatmul.mubr.f32.gmra.mrb[0].mxu0 %v2362
    %v2473 = vpop.f32.mrb[0].mxu0
    %v2474 = vadd.f32 0.0, %v2473
    %v2475 = vpop.f32.mrb[0].mxu0
    %2476 = vmatprep.mubr.f32.mxu0 0.0
    %2477 = vmatmul.mubr.f32.gmra.mrb[0].mxu0 %v2365
    %v2478 = vpop.f32.mrb[0].mxu0
    %v2479 = vadd.f32 0.0, %v2478
    %v2480 = vpop.f32.mrb[0].mxu0
    %2481 = vmatprep.mubr.f32.mxu0 0.0
    %2482 = vmatmul.mubr.f32.gmra.mrb[0].mxu0 %v2368
    %v2483 = vpop.f32.mrb[0].mxu0
    %v2484 = vadd.f32 0.0, %v2483
    %v2485 = vpop.f32.mrb[0].mxu0
    %2486 = vmatprep.mubr.f32.mxu0 0.0
    %2487 = vmatmul.mubr.f32.gmra.mrb[0].mxu0 %v2371
    %v2488 = vpop.f32.mrb[0].mxu0
    %v2489 = vadd.f32 0.0, %v2488
    %v2490 = vpop.f32.mrb[0].mxu0
    %2491 = vmatprep.mubr.f32.mxu0 0.0
    %2492 = vmatmul.mubr.f32.gmra.mrb[0].mxu0 %v2374
    %v2493 = vpop.f32.mrb[0].mxu0
    %v2494 = vadd.f32 0.0, %v2493
    %v2495 = vpop.f32.mrb[0].mxu0
    %2496 = vmatprep.mubr.f32.mxu0 0.0
    %2497 = vmatmul.mubr.f32.gmra.mrb[0].mxu0 %v2377
    %v2498 = vpop.f32.mrb[0].mxu0
    %v2499 = vadd.f32 0.0, %v2498
    %v2500 = vpop.f32.mrb[0].mxu0
    %2501 = vmatprep.mubr.f32.mxu0 0.0
    %2502 = vmatmul.mubr.f32.gmra.mrb[0].mxu0 %v2380
    %v2503 = vpop.f32.mrb[0].mxu0
    %v2504 = vadd.f32 0.0, %v2503
    %v2505 = vpop.f32.mrb[0].mxu0
    %2506 = vdwg.mxu0
    %2513 = vrot.lane.b32.xlu0 %v2479, 16
    %v2514 = vpop.permute.xlu0 %2513
    %2515 = vrot.lane.b32.xlu0 %v2484, 16
    %v2516 = vpop.permute.xlu0 %2515
    %2517 = vrot.lane.b32.xlu0 %v2489, 16
    %v2518 = vpop.permute.xlu0 %2517
    %2519 = vrot.lane.b32.xlu0 %v2494, 16
    %v2520 = vpop.permute.xlu0 %2519
    %2521 = vrot.lane.b32.xlu0 %v2499, 16
    %v2522 = vpop.permute.xlu0 %2521
    %2523 = vrot.lane.b32.xlu0 %v2504, 16
    %v2524 = vpop.permute.xlu0 %2523
    %v2531 = vsel %vm79, %v2449, %v2514
    %v2532 = vsel %vm79, %v2454, %v2516
    %v2533 = vsel %vm79, %v2459, %v2518
    %v2534 = vsel %vm79, %v2464, %v2520
    %v2535 = vsel %vm79, %v2469, %v2522
    %v2536 = vsel %vm79, %v2474, %v2524
    %s2537 = scalar_lea.vmem [#allocation5], 32
    %v2538 = vld [vmem:[%s2537] sm:$0xff]
    %v2539 = vld [vmem:[%s2537 + $0x8] sm:$0xff]
    %v2540 = vld [vmem:[%s2537 + $0x10] sm:$0xff]
    %v2541 = vld [vmem:[%s2537 + $0x18] sm:$0xff]
    %v2543 = vsel %vm353, %v2531, 0
    %v2546 = vsel %vm353, %v2532, 0
    %v2549 = vsel %vm353, %v2533, 0
    %v2552 = vsel %vm353, %v2534, 0
    %v2555 = vsel %vm353, %v2535, 0
    %v2558 = vsel %vm353, %v2536, 0
    %2560 = vmatprep.subr.mxu0 0.0
    %2561 = vmatpush1.msra.mxu0 %v2538
    %2562 = vmatprep.subr.mxu0 0.0
    %2563 = vmatpush1.msra.mxu0 %v2539
    %2564 = vmatprep.subr.mxu0 0.0
    %2565 = vmatpush1.msra.mxu0 %v2540
    %2566 = vmatprep.subr.mxu0 0.0
    %2567 = vmatpush1.msra.mxu0 %v2541
    %2568 = vmatprep.subr.mxu0 0.0
    %2569 = vmatpush1.msra.mxu0 0.0
    %2570 = vmatprep.subr.mxu0 0.0
    %2571 = vmatpush1.msra.mxu0 0.0
    %2572 = vmatprep.subr.mxu0 0.0
    %2573 = vmatpush1.msra.mxu0 0.0
    %2574 = vmatprep.subr.mxu0 0.0
    %2575 = vmatpush1.msra.mxu0 0.0
    %2576 = vmatprep.subr.mxu0 0.0
    %2577 = vmatpush1.msra.mxu0 0.0
    %2578 = vmatprep.subr.mxu0 0.0
    %2579 = vmatpush1.msra.mxu0 0.0
    %2580 = vmatprep.subr.mxu0 0.0
    %2581 = vmatpush1.msra.mxu0 0.0
    %2582 = vmatprep.subr.mxu0 0.0
    %2583 = vmatpush1.msra.mxu0 0.0
    %2584 = vmatprep.subr.mxu0 0.0
    %2585 = vmatpush1.msra.mxu0 0.0
    %2586 = vmatprep.subr.mxu0 0.0
    %2587 = vmatpush1.msra.mxu0 0.0
    %2588 = vmatprep.subr.mxu0 0.0
    %2589 = vmatpush1.msra.mxu0 0.0
    %2590 = vmatprep.subr.mxu0 0.0
    %2591 = vmatpush1.msra.mxu0 0.0
    %2592 = vmatprep.subr.mxu0 0.0
    %2593 = vmatpush1.msra.mxu0 0.0
    %2594 = vmatprep.subr.mxu0 0.0
    %2595 = vmatpush1.msra.mxu0 0.0
    %2596 = vmatprep.subr.mxu0 0.0
    %2597 = vmatpush1.msra.mxu0 0.0
    %2598 = vmatprep.subr.mxu0 0.0
    %2599 = vmatpush1.msra.mxu0 0.0
    %2600 = vmatprep.subr.mxu0 0.0
    %2601 = vmatpush1.msra.mxu0 0.0
    %2602 = vmatprep.subr.mxu0 0.0
    %2603 = vmatpush1.msra.mxu0 0.0
    %2604 = vmatprep.subr.mxu0 0.0
    %2605 = vmatpush1.msra.mxu0 0.0
    %2606 = vmatprep.subr.mxu0 0.0
    %2607 = vmatpush1.msra.mxu0 0.0
    %2608 = vmatprep.subr.mxu0 0.0
    %2609 = vmatpush1.msra.mxu0 0.0
    %2610 = vmatprep.subr.mxu0 0.0
    %2611 = vmatpush1.msra.mxu0 0.0
    %2612 = vmatprep.subr.mxu0 0.0
    %2613 = vmatpush1.msra.mxu0 0.0
    %2614 = vmatprep.subr.mxu0 0.0
    %2615 = vmatpush1.msra.mxu0 0.0
    %2616 = vmatprep.subr.mxu0 0.0
    %2617 = vmatpush1.msra.mxu0 0.0
    %2618 = vmatprep.subr.mxu0 0.0
    %2619 = vmatpush1.msra.mxu0 0.0
    %2620 = vmatprep.subr.mxu0 0.0
    %2621 = vmatpush1.msra.mxu0 0.0
    %2622 = vmatprep.subr.mxu0 0.0
    %2623 = vmatpush1.msra.mxu0 0.0
    %2624 = vmatprep.mubr.f32.mxu0 0.0
    %2625 = vmatmul.mubr.f32.gmra.mrb[0].mxu0 %v2543
    %v2626 = vpop.f32.mrb[0].mxu0
    %v2627 = vadd.f32 0.0, %v2626
    %v2628 = vpop.f32.mrb[0].mxu0
    %2629 = vmatprep.mubr.f32.mxu0 0.0
    %2630 = vmatmul.mubr.f32.gmra.mrb[0].mxu0 %v2546
    %v2631 = vpop.f32.mrb[0].mxu0
    %v2632 = vadd.f32 0.0, %v2631
    %v2633 = vpop.f32.mrb[0].mxu0
    %2634 = vmatprep.mubr.f32.mxu0 0.0
    %2635 = vmatmul.mubr.f32.gmra.mrb[0].mxu0 %v2549
    %v2636 = vpop.f32.mrb[0].mxu0
    %v2637 = vadd.f32 0.0, %v2636
    %v2638 = vpop.f32.mrb[0].mxu0
    %2639 = vmatprep.mubr.f32.mxu0 0.0
    %2640 = vmatmul.mubr.f32.gmra.mrb[0].mxu0 %v2552
    %v2641 = vpop.f32.mrb[0].mxu0
    %v2642 = vadd.f32 0.0, %v2641
    %v2643 = vpop.f32.mrb[0].mxu0
    %2644 = vmatprep.mubr.f32.mxu0 0.0
    %2645 = vmatmul.mubr.f32.gmra.mrb[0].mxu0 %v2555
    %v2646 = vpop.f32.mrb[0].mxu0
    %v2647 = vadd.f32 0.0, %v2646
    %v2648 = vpop.f32.mrb[0].mxu0
    %2649 = vmatprep.mubr.f32.mxu0 0.0
    %2650 = vmatmul.mubr.f32.gmra.mrb[0].mxu0 %v2558
    %v2651 = vpop.f32.mrb[0].mxu0
    %v2652 = vadd.f32 0.0, %v2651
    %v2653 = vpop.f32.mrb[0].mxu0
    %2654 = vdwg.mxu0
    %v2655 = vadd.f32 %v1711, %v2627
    %v2656 = vadd.f32 %v1712, %v2632
    %v2657 = vadd.f32 %v1713, %v2637
    %v2658 = vadd.f32 %v1714, %v2642
    %v2659 = vadd.f32 %v1715, %v2647
    %v2660 = vadd.f32 %v1716, %v2652
    %v2661 = vlaneseq
    %v2662 = vshrl.u32 %v2661, 7
    %v2663 = vsub.s32 6, %v2662
    %v2664 = vrot.slane %v1718, %v2663
    %v2665 = vadd.f32 %v2655, %v2664
    %v2666 = vadd.f32 %v2656, %v2664
    %v2667 = vadd.f32 %v2657, %v2664
    %v2668 = vadd.f32 %v2658, %v2664
    %v2669 = vadd.f32 %v2659, %v2664
    %v2670 = vadd.f32 %v2660, %v2664
    %v2671 = vsel %vm353, %v2665, 0.0
    %2672 = vadd.xlane.f32.xlu0 %v2671
    %v2673 = vpop.xlane.xlu0 %2672
    %v2674 = vsel %vm353, %v2666, 0.0
    %2675 = vadd.xlane.f32.xlu0 %v2674
    %v2676 = vpop.xlane.xlu0 %2675
    %v2677 = vsel %vm353, %v2667, 0.0
    %2678 = vadd.xlane.f32.xlu0 %v2677
    %v2679 = vpop.xlane.xlu0 %2678
    %v2680 = vsel %vm353, %v2668, 0.0
    %2681 = vadd.xlane.f32.xlu0 %v2680
    %v2682 = vpop.xlane.xlu0 %2681
    %v2683 = vsel %vm353, %v2669, 0.0
    %2684 = vadd.xlane.f32.xlu0 %v2683
    %v2685 = vpop.xlane.xlu0 %2684
    %v2686 = vsel %vm353, %v2670, 0.0
    %2687 = vadd.xlane.f32.xlu0 %v2686
    %v2688 = vpop.xlane.xlu0 %2687
    %v2689 = vmul.f32 %v2673, %v372
    %v2690 = vmul.f32 %v2676, %v372
    %v2691 = vmul.f32 %v2679, %v372
    %v2692 = vmul.f32 %v2682, %v372
    %v2693 = vmul.f32 %v2685, %v372
    %v2694 = vmul.f32 %v2688, %v372
    %v2695 = vsub.f32 %v2665, %v2689
    %v2696 = vsub.f32 %v2666, %v2690
    %v2697 = vsub.f32 %v2667, %v2691
    %v2698 = vsub.f32 %v2668, %v2692
    %v2699 = vsub.f32 %v2669, %v2693
    %v2700 = vsub.f32 %v2670, %v2694
    %v2701 = vmul.f32 %v2695, %v2695
    %v2702 = vmul.f32 %v2696, %v2696
    %v2703 = vmul.f32 %v2697, %v2697
    %v2704 = vmul.f32 %v2698, %v2698
    %v2705 = vmul.f32 %v2699, %v2699
    %v2706 = vmul.f32 %v2700, %v2700
    %v2707 = vsel %vm353, %v2701, 0.0
    %2708 = vadd.xlane.f32.xlu0 %v2707
    %v2709 = vpop.xlane.xlu0 %2708
    %v2710 = vsel %vm353, %v2702, 0.0
    %2711 = vadd.xlane.f32.xlu0 %v2710
    %v2712 = vpop.xlane.xlu0 %2711
    %v2713 = vsel %vm353, %v2703, 0.0
    %2714 = vadd.xlane.f32.xlu0 %v2713
    %v2715 = vpop.xlane.xlu0 %2714
    %v2716 = vsel %vm353, %v2704, 0.0
    %2717 = vadd.xlane.f32.xlu0 %v2716
    %v2718 = vpop.xlane.xlu0 %2717
    %v2719 = vsel %vm353, %v2705, 0.0
    %2720 = vadd.xlane.f32.xlu0 %v2719
    %v2721 = vpop.xlane.xlu0 %2720
    %v2722 = vsel %vm353, %v2706, 0.0
    %2723 = vadd.xlane.f32.xlu0 %v2722
    %v2724 = vpop.xlane.xlu0 %2723
    %v2725 = vmul.f32 %v2709, %v372
    %v2726 = vmul.f32 %v2712, %v372
    %v2727 = vmul.f32 %v2715, %v372
    %v2728 = vmul.f32 %v2718, %v372
    %v2729 = vmul.f32 %v2721, %v372
    %v2730 = vmul.f32 %v2724, %v372
    %v2731 = vadd.f32 %v2725, 1e-05
    %v2732 = vadd.f32 %v2726, 1e-05
    %v2733 = vadd.f32 %v2727, 1e-05
    %v2734 = vadd.f32 %v2728, 1e-05
    %v2735 = vadd.f32 %v2729, 1e-05
    %v2736 = vadd.f32 %v2730, 1e-05
    %v2737 = vrsqrt.pop %v2731
    %v2738 = vrsqrt.pop %v2732
    %v2739 = vrsqrt.pop %v2733
    %v2740 = vrsqrt.pop %v2734
    %v2741 = vrsqrt.pop %v2735
    %v2742 = vrsqrt.pop %v2736
    %v2743 = vmul.f32 %v2695, %v2737
    %v2744 = vmul.f32 %v2696, %v2738
    %v2745 = vmul.f32 %v2697, %v2739
    %v2746 = vmul.f32 %v2698, %v2740
    %v2747 = vmul.f32 %v2699, %v2741
    %v2748 = vmul.f32 %v2700, %v2742
    %v2749 = vlaneseq
    %v2750 = vshrl.u32 %v2749, 7
    %v2751 = vsub.s32 6, %v2750
    %v2752 = vrot.slane %v1717, %v2751
    %v2753 = vmul.f32 %v2743, %v2752
    %v2754 = vmul.f32 %v2744, %v2752
    %v2755 = vmul.f32 %v2745, %v2752
    %v2756 = vmul.f32 %v2746, %v2752
    %v2757 = vmul.f32 %v2747, %v2752
    %v2758 = vmul.f32 %v2748, %v2752
    %v2759 = vlaneseq
    %v2760 = vshrl.u32 %v2759, 7
    %v2761 = vsub.s32 7, %v2760
    %v2762 = vrot.slane %v1717, %v2761
    %v2763 = vadd.f32 %v2753, %v2762
    %v2764 = vadd.f32 %v2754, %v2762
    %v2765 = vadd.f32 %v2755, %v2762
    %v2766 = vadd.f32 %v2756, %v2762
    %v2767 = vadd.f32 %v2757, %v2762
    %v2768 = vadd.f32 %v2758, %v2762
    %s2769 = scalar_lea.vmem [#allocation7], 32
    %v2770 = vld [vmem:[%s2769] sm:$0xff]
    %v2771 = vld [vmem:[%s2769 + $0x8] sm:$0xff]
    %v2772 = vld [vmem:[%s2769 + $0x10] sm:$0xff]
    %v2773 = vld [vmem:[%s2769 + $0x18] sm:$0xff]
    %v2774 = vlaneseq
    %v2775 = vshrl.u32 %v2774, 7
    %v2776 = vsub.s32 5, %v2775
    %v2777 = vrot.slane %v1718, %v2776
    %v2779 = vsel %vm353, %v2763, 0
    %v2782 = vsel %vm353, %v2764, 0
    %v2785 = vsel %vm353, %v2765, 0
    %v2788 = vsel %vm353, %v2766, 0
    %v2791 = vsel %vm353, %v2767, 0
    %v2794 = vsel %vm353, %v2768, 0
    %2796 = vmatprep.subr.mxu0 0.0
    %2797 = vmatpush1.msra.mxu0 %v2770
    %2798 = vmatprep.subr.mxu0 0.0
    %2799 = vmatpush1.msra.mxu0 %v2771
    %2800 = vmatprep.subr.mxu0 0.0
    %2801 = vmatpush1.msra.mxu0 %v2772
    %2802 = vmatprep.subr.mxu0 0.0
    %2803 = vmatpush1.msra.mxu0 %v2773
    %2804 = vmatprep.subr.mxu0 0.0
    %2805 = vmatpush1.msra.mxu0 0.0
    %2806 = vmatprep.subr.mxu0 0.0
    %2807 = vmatpush1.msra.mxu0 0.0
    %2808 = vmatprep.subr.mxu0 0.0
    %2809 = vmatpush1.msra.mxu0 0.0
    %2810 = vmatprep.subr.mxu0 0.0
    %2811 = vmatpush1.msra.mxu0 0.0
    %2812 = vmatprep.subr.mxu0 0.0
    %2813 = vmatpush1.msra.mxu0 0.0
    %2814 = vmatprep.subr.mxu0 0.0
    %2815 = vmatpush1.msra.mxu0 0.0
    %2816 = vmatprep.subr.mxu0 0.0
    %2817 = vmatpush1.msra.mxu0 0.0
    %2818 = vmatprep.subr.mxu0 0.0
    %2819 = vmatpush1.msra.mxu0 0.0
    %2820 = vmatprep.subr.mxu0 0.0
    %2821 = vmatpush1.msra.mxu0 0.0
    %2822 = vmatprep.subr.mxu0 0.0
    %2823 = vmatpush1.msra.mxu0 0.0
    %2824 = vmatprep.subr.mxu0 0.0
    %2825 = vmatpush1.msra.mxu0 0.0
    %2826 = vmatprep.subr.mxu0 0.0
    %2827 = vmatpush1.msra.mxu0 0.0
    %2828 = vmatprep.subr.mxu0 0.0
    %2829 = vmatpush1.msra.mxu0 0.0
    %2830 = vmatprep.subr.mxu0 0.0
    %2831 = vmatpush1.msra.mxu0 0.0
    %2832 = vmatprep.subr.mxu0 0.0
    %2833 = vmatpush1.msra.mxu0 0.0
    %2834 = vmatprep.subr.mxu0 0.0
    %2835 = vmatpush1.msra.mxu0 0.0
    %2836 = vmatprep.subr.mxu0 0.0
    %2837 = vmatpush1.msra.mxu0 0.0
    %2838 = vmatprep.subr.mxu0 0.0
    %2839 = vmatpush1.msra.mxu0 0.0
    %2840 = vmatprep.subr.mxu0 0.0
    %2841 = vmatpush1.msra.mxu0 0.0
    %2842 = vmatprep.subr.mxu0 0.0
    %2843 = vmatpush1.msra.mxu0 0.0
    %2844 = vmatprep.subr.mxu0 0.0
    %2845 = vmatpush1.msra.mxu0 0.0
    %2846 = vmatprep.subr.mxu0 0.0
    %2847 = vmatpush1.msra.mxu0 0.0
    %2848 = vmatprep.subr.mxu0 0.0
    %2849 = vmatpush1.msra.mxu0 0.0
    %2850 = vmatprep.subr.mxu0 0.0
    %2851 = vmatpush1.msra.mxu0 0.0
    %2852 = vmatprep.subr.mxu0 0.0
    %2853 = vmatpush1.msra.mxu0 0.0
    %2854 = vmatprep.subr.mxu0 0.0
    %2855 = vmatpush1.msra.mxu0 0.0
    %2856 = vmatprep.subr.mxu0 0.0
    %2857 = vmatpush1.msra.mxu0 0.0
    %2858 = vmatprep.subr.mxu0 0.0
    %2859 = vmatpush1.msra.mxu0 0.0
    %2860 = vmatprep.mubr.f32.mxu0 0.0
    %2861 = vmatmul.mubr.f32.gmra.mrb[0].mxu0 %v2779
    %v2862 = vpop.f32.mrb[0].mxu0
    %v2863 = vadd.f32 %v2777, %v2862
    %v2864 = vpop.f32.mrb[0].mxu0
    %2865 = vmatprep.mubr.f32.mxu0 0.0
    %2866 = vmatmul.mubr.f32.gmra.mrb[0].mxu0 %v2782
    %v2867 = vpop.f32.mrb[0].mxu0
    %v2868 = vadd.f32 %v2777, %v2867
    %v2869 = vpop.f32.mrb[0].mxu0
    %2870 = vmatprep.mubr.f32.mxu0 0.0
    %2871 = vmatmul.mubr.f32.gmra.mrb[0].mxu0 %v2785
    %v2872 = vpop.f32.mrb[0].mxu0
    %v2873 = vadd.f32 %v2777, %v2872
    %v2874 = vpop.f32.mrb[0].mxu0
    %2875 = vmatprep.mubr.f32.mxu0 0.0
    %2876 = vmatmul.mubr.f32.gmra.mrb[0].mxu0 %v2788
    %v2877 = vpop.f32.mrb[0].mxu0
    %v2878 = vadd.f32 %v2777, %v2877
    %v2879 = vpop.f32.mrb[0].mxu0
    %2880 = vmatprep.mubr.f32.mxu0 0.0
    %2881 = vmatmul.mubr.f32.gmra.mrb[0].mxu0 %v2791
    %v2882 = vpop.f32.mrb[0].mxu0
    %v2883 = vadd.f32 %v2777, %v2882
    %v2884 = vpop.f32.mrb[0].mxu0
    %2885 = vmatprep.mubr.f32.mxu0 0.0
    %2886 = vmatmul.mubr.f32.gmra.mrb[0].mxu0 %v2794
    %v2887 = vpop.f32.mrb[0].mxu0
    %v2888 = vadd.f32 %v2777, %v2887
    %v2889 = vpop.f32.mrb[0].mxu0
    %2890 = vdwg.mxu0
    %v2891 = vmul.f32 %v2863, 0.5
    %v2892 = vmul.f32 %v2868, 0.5
    %v2893 = vmul.f32 %v2873, 0.5
    %v2894 = vmul.f32 %v2878, 0.5
    %v2895 = vmul.f32 %v2883, 0.5
    %v2896 = vmul.f32 %v2888, 0.5
    %v2897 = vmul.f32 %v2863, 0.044715
    %v2898 = vmul.f32 %v2868, 0.044715
    %v2899 = vmul.f32 %v2873, 0.044715
    %v2900 = vmul.f32 %v2878, 0.044715
    %v2901 = vmul.f32 %v2883, 0.044715
    %v2902 = vmul.f32 %v2888, 0.044715
    %v2903 = vmul.f32 %v2897, %v2863
    %v2904 = vmul.f32 %v2898, %v2868
    %v2905 = vmul.f32 %v2899, %v2873
    %v2906 = vmul.f32 %v2900, %v2878
    %v2907 = vmul.f32 %v2901, %v2883
    %v2908 = vmul.f32 %v2902, %v2888
    %v2909 = vmul.f32 %v2903, %v2863
    %v2910 = vmul.f32 %v2904, %v2868
    %v2911 = vmul.f32 %v2905, %v2873
    %v2912 = vmul.f32 %v2906, %v2878
    %v2913 = vmul.f32 %v2907, %v2883
    %v2914 = vmul.f32 %v2908, %v2888
    %v2915 = vadd.f32 %v2863, %v2909
    %v2916 = vadd.f32 %v2868, %v2910
    %v2917 = vadd.f32 %v2873, %v2911
    %v2918 = vadd.f32 %v2878, %v2912
    %v2919 = vadd.f32 %v2883, %v2913
    %v2920 = vadd.f32 %v2888, %v2914
    %v2921 = vmul.f32 %v2915, 0.7978846
    %v2922 = vmul.f32 %v2916, 0.7978846
    %v2923 = vmul.f32 %v2917, 0.7978846
    %v2924 = vmul.f32 %v2918, 0.7978846
    %v2925 = vmul.f32 %v2919, 0.7978846
    %v2926 = vmul.f32 %v2920, 0.7978846
    %v2927 = vtanh.pop %v2921
    %v2928 = vtanh.pop %v2922
    %v2929 = vtanh.pop %v2923
    %v2930 = vtanh.pop %v2924
    %v2931 = vtanh.pop %v2925
    %v2932 = vtanh.pop %v2926
    %v2933 = vadd.f32 %v2927, 1.0
    %v2934 = vadd.f32 %v2928, 1.0
    %v2935 = vadd.f32 %v2929, 1.0
    %v2936 = vadd.f32 %v2930, 1.0
    %v2937 = vadd.f32 %v2931, 1.0
    %v2938 = vadd.f32 %v2932, 1.0
    %v2939 = vmul.f32 %v2891, %v2933
    %v2940 = vmul.f32 %v2892, %v2934
    %v2941 = vmul.f32 %v2893, %v2935
    %v2942 = vmul.f32 %v2894, %v2936
    %v2943 = vmul.f32 %v2895, %v2937
    %v2944 = vmul.f32 %v2896, %v2938
    %s2945 = scalar_lea.vmem %s4, 64
    %v2946 = vld [vmem:[%s2945] sm:$0xff]
    %v2947 = vld [vmem:[%s2945 + $0x8] sm:$0xff]
    %v2948 = vld [vmem:[%s2945 + $0x10] sm:$0xff]
    %v2949 = vld [vmem:[%s2945 + $0x18] sm:$0xff]
    %v2950 = vld [vmem:[%s2945 + $0x20] sm:$0xff]
    %v2951 = vld [vmem:[%s2945 + $0x28] sm:$0xff]
    %v2952 = vld [vmem:[%s2945 + $0x30] sm:$0xff]
    %v2953 = vld [vmem:[%s2945 + $0x38] sm:$0xff]
    %v2955 = vsel %vm1587, %v2939, 0
    %v2958 = vsel %vm1587, %v2940, 0
    %v2961 = vsel %vm1587, %v2941, 0
    %v2964 = vsel %vm1587, %v2942, 0
    %v2967 = vsel %vm1587, %v2943, 0
    %v2970 = vsel %vm1587, %v2944, 0
    %2972 = vmatprep.subr.mxu0 0.0
    %2973 = vmatpush1.msra.mxu0 %v2946
    %2974 = vmatprep.subr.mxu0 0.0
    %2975 = vmatpush1.msra.mxu0 %v2947
    %2976 = vmatprep.subr.mxu0 0.0
    %2977 = vmatpush1.msra.mxu0 %v2948
    %2978 = vmatprep.subr.mxu0 0.0
    %2979 = vmatpush1.msra.mxu0 %v2949
    %2980 = vmatprep.subr.mxu0 0.0
    %2981 = vmatpush1.msra.mxu0 %v2950
    %2982 = vmatprep.subr.mxu0 0.0
    %2983 = vmatpush1.msra.mxu0 %v2951
    %2984 = vmatprep.subr.mxu0 0.0
    %2985 = vmatpush1.msra.mxu0 %v2952
    %2986 = vmatprep.subr.mxu0 0.0
    %2987 = vmatpush1.msra.mxu0 %v2953
    %2988 = vmatprep.subr.mxu0 0.0
    %2989 = vmatpush1.msra.mxu0 0.0
    %2990 = vmatprep.subr.mxu0 0.0
    %2991 = vmatpush1.msra.mxu0 0.0
    %2992 = vmatprep.subr.mxu0 0.0
    %2993 = vmatpush1.msra.mxu0 0.0
    %2994 = vmatprep.subr.mxu0 0.0
    %2995 = vmatpush1.msra.mxu0 0.0
    %2996 = vmatprep.subr.mxu0 0.0
    %2997 = vmatpush1.msra.mxu0 0.0
    %2998 = vmatprep.subr.mxu0 0.0
    %2999 = vmatpush1.msra.mxu0 0.0
    %3000 = vmatprep.subr.mxu0 0.0
    %3001 = vmatpush1.msra.mxu0 0.0
    %3002 = vmatprep.subr.mxu0 0.0
    %3003 = vmatpush1.msra.mxu0 0.0
    %3004 = vmatprep.subr.mxu0 0.0
    %3005 = vmatpush1.msra.mxu0 0.0
    %3006 = vmatprep.subr.mxu0 0.0
    %3007 = vmatpush1.msra.mxu0 0.0
    %3008 = vmatprep.subr.mxu0 0.0
    %3009 = vmatpush1.msra.mxu0 0.0
    %3010 = vmatprep.subr.mxu0 0.0
    %3011 = vmatpush1.msra.mxu0 0.0
    %3012 = vmatprep.subr.mxu0 0.0
    %3013 = vmatpush1.msra.mxu0 0.0
    %3014 = vmatprep.subr.mxu0 0.0
    %3015 = vmatpush1.msra.mxu0 0.0
    %3016 = vmatprep.subr.mxu0 0.0
    %3017 = vmatpush1.msra.mxu0 0.0
    %3018 = vmatprep.subr.mxu0 0.0
    %3019 = vmatpush1.msra.mxu0 0.0
    %3020 = vmatprep.subr.mxu0 0.0
    %3021 = vmatpush1.msra.mxu0 0.0
    %3022 = vmatprep.subr.mxu0 0.0
    %3023 = vmatpush1.msra.mxu0 0.0
    %3024 = vmatprep.subr.mxu0 0.0
    %3025 = vmatpush1.msra.mxu0 0.0
    %3026 = vmatprep.subr.mxu0 0.0
    %3027 = vmatpush1.msra.mxu0 0.0
    %3028 = vmatprep.subr.mxu0 0.0
    %3029 = vmatpush1.msra.mxu0 0.0
    %3030 = vmatprep.subr.mxu0 0.0
    %3031 = vmatpush1.msra.mxu0 0.0
    %3032 = vmatprep.subr.mxu0 0.0
    %3033 = vmatpush1.msra.mxu0 0.0
    %3034 = vmatprep.subr.mxu0 0.0
    %3035 = vmatpush1.msra.mxu0 0.0
    %3036 = vmatprep.mubr.f32.mxu0 0.0
    %3037 = vmatmul.mubr.f32.gmra.mrb[0].mxu0 %v2955
    %v3038 = vpop.f32.mrb[0].mxu0
    %v3039 = vadd.f32 0.0, %v3038
    %v3040 = vpop.f32.mrb[0].mxu0
    %3041 = vmatprep.mubr.f32.mxu0 0.0
    %3042 = vmatmul.mubr.f32.gmra.mrb[0].mxu0 %v2958
    %v3043 = vpop.f32.mrb[0].mxu0
    %v3044 = vadd.f32 0.0, %v3043
    %v3045 = vpop.f32.mrb[0].mxu0
    %3046 = vmatprep.mubr.f32.mxu0 0.0
    %3047 = vmatmul.mubr.f32.gmra.mrb[0].mxu0 %v2961
    %v3048 = vpop.f32.mrb[0].mxu0
    %v3049 = vadd.f32 0.0, %v3048
    %v3050 = vpop.f32.mrb[0].mxu0
    %3051 = vmatprep.mubr.f32.mxu0 0.0
    %3052 = vmatmul.mubr.f32.gmra.mrb[0].mxu0 %v2964
    %v3053 = vpop.f32.mrb[0].mxu0
    %v3054 = vadd.f32 0.0, %v3053
    %v3055 = vpop.f32.mrb[0].mxu0
    %3056 = vmatprep.mubr.f32.mxu0 0.0
    %3057 = vmatmul.mubr.f32.gmra.mrb[0].mxu0 %v2967
    %v3058 = vpop.f32.mrb[0].mxu0
    %v3059 = vadd.f32 0.0, %v3058
    %v3060 = vpop.f32.mrb[0].mxu0
    %3061 = vmatprep.mubr.f32.mxu0 0.0
    %3062 = vmatmul.mubr.f32.gmra.mrb[0].mxu0 %v2970
    %v3063 = vpop.f32.mrb[0].mxu0
    %v3064 = vadd.f32 0.0, %v3063
    %v3065 = vpop.f32.mrb[0].mxu0
    %3066 = vdwg.mxu0
    %v3067 = vadd.f32 %v2665, %v3039
    %v3068 = vadd.f32 %v2666, %v3044
    %v3069 = vadd.f32 %v2667, %v3049
    %v3070 = vadd.f32 %v2668, %v3054
    %v3071 = vadd.f32 %v2669, %v3059
    %v3072 = vadd.f32 %v2670, %v3064
    %v3073 = vlaneseq
    %v3074 = vshrl.u32 %v3073, 7
    %v3075 = vsub.s32 7, %v3074
    %v3076 = vrot.slane %v1718, %v3075
    %v3077 = vadd.f32 %v3067, %v3076
    %v3078 = vadd.f32 %v3068, %v3076
    %v3079 = vadd.f32 %v3069, %v3076
    %v3080 = vadd.f32 %v3070, %v3076
    %v3081 = vadd.f32 %v3071, %v3076
    %v3082 = vadd.f32 %v3072, %v3076
    %v3083 = vld [vmem:[%s5 + $0x100] sm:$0x3]
    %v3084 = vsel %vm353, %v3077, 0.0
    %3085 = vadd.xlane.f32.xlu0 %v3084
    %v3086 = vpop.xlane.xlu0 %3085
    %v3087 = vsel %vm353, %v3078, 0.0
    %3088 = vadd.xlane.f32.xlu0 %v3087
    %v3089 = vpop.xlane.xlu0 %3088
    %v3090 = vsel %vm353, %v3079, 0.0
    %3091 = vadd.xlane.f32.xlu0 %v3090
    %v3092 = vpop.xlane.xlu0 %3091
    %v3093 = vsel %vm353, %v3080, 0.0
    %3094 = vadd.xlane.f32.xlu0 %v3093
    %v3095 = vpop.xlane.xlu0 %3094
    %v3096 = vsel %vm353, %v3081, 0.0
    %3097 = vadd.xlane.f32.xlu0 %v3096
    %v3098 = vpop.xlane.xlu0 %3097
    %v3099 = vsel %vm353, %v3082, 0.0
    %3100 = vadd.xlane.f32.xlu0 %v3099
    %v3101 = vpop.xlane.xlu0 %3100
    %v3102 = vmul.f32 %v3086, %v372
    %v3103 = vmul.f32 %v3089, %v372
    %v3104 = vmul.f32 %v3092, %v372
    %v3105 = vmul.f32 %v3095, %v372
    %v3106 = vmul.f32 %v3098, %v372
    %v3107 = vmul.f32 %v3101, %v372
    %v3108 = vsub.f32 %v3077, %v3102
    %v3109 = vsub.f32 %v3078, %v3103
    %v3110 = vsub.f32 %v3079, %v3104
    %v3111 = vsub.f32 %v3080, %v3105
    %v3112 = vsub.f32 %v3081, %v3106
    %v3113 = vsub.f32 %v3082, %v3107
    %v3114 = vmul.f32 %v3108, %v3108
    %v3115 = vmul.f32 %v3109, %v3109
    %v3116 = vmul.f32 %v3110, %v3110
    %v3117 = vmul.f32 %v3111, %v3111
    %v3118 = vmul.f32 %v3112, %v3112
    %v3119 = vmul.f32 %v3113, %v3113
    %v3120 = vsel %vm353, %v3114, 0.0
    %3121 = vadd.xlane.f32.xlu0 %v3120
    %v3122 = vpop.xlane.xlu0 %3121
    %v3123 = vsel %vm353, %v3115, 0.0
    %3124 = vadd.xlane.f32.xlu0 %v3123
    %v3125 = vpop.xlane.xlu0 %3124
    %v3126 = vsel %vm353, %v3116, 0.0
    %3127 = vadd.xlane.f32.xlu0 %v3126
    %v3128 = vpop.xlane.xlu0 %3127
    %v3129 = vsel %vm353, %v3117, 0.0
    %3130 = vadd.xlane.f32.xlu0 %v3129
    %v3131 = vpop.xlane.xlu0 %3130
    %v3132 = vsel %vm353, %v3118, 0.0
    %3133 = vadd.xlane.f32.xlu0 %v3132
    %v3134 = vpop.xlane.xlu0 %3133
    %v3135 = vsel %vm353, %v3119, 0.0
    %3136 = vadd.xlane.f32.xlu0 %v3135
    %v3137 = vpop.xlane.xlu0 %3136
    %v3138 = vmul.f32 %v3122, %v372
    %v3139 = vmul.f32 %v3125, %v372
    %v3140 = vmul.f32 %v3128, %v372
    %v3141 = vmul.f32 %v3131, %v372
    %v3142 = vmul.f32 %v3134, %v372
    %v3143 = vmul.f32 %v3137, %v372
    %v3144 = vadd.f32 %v3138, 1e-05
    %v3145 = vadd.f32 %v3139, 1e-05
    %v3146 = vadd.f32 %v3140, 1e-05
    %v3147 = vadd.f32 %v3141, 1e-05
    %v3148 = vadd.f32 %v3142, 1e-05
    %v3149 = vadd.f32 %v3143, 1e-05
    %v3150 = vrsqrt.pop %v3144
    %v3151 = vrsqrt.pop %v3145
    %v3152 = vrsqrt.pop %v3146
    %v3153 = vrsqrt.pop %v3147
    %v3154 = vrsqrt.pop %v3148
    %v3155 = vrsqrt.pop %v3149
    %v3156 = vmul.f32 %v3108, %v3150
    %v3157 = vmul.f32 %v3109, %v3151
    %v3158 = vmul.f32 %v3110, %v3152
    %v3159 = vmul.f32 %v3111, %v3153
    %v3160 = vmul.f32 %v3112, %v3154
    %v3161 = vmul.f32 %v3113, %v3155
    %v3162 = vlaneseq
    %v3163 = vshrl.u32 %v3162, 7
    %v3164 = vsub.s32 0, %v3163
    %v3165 = vrot.slane %v3083, %v3164
    %v3166 = vmul.f32 %v3156, %v3165
    %v3167 = vmul.f32 %v3157, %v3165
    %v3168 = vmul.f32 %v3158, %v3165
    %v3169 = vmul.f32 %v3159, %v3165
    %v3170 = vmul.f32 %v3160, %v3165
    %v3171 = vmul.f32 %v3161, %v3165
    %v3172 = vlaneseq
    %v3173 = vshrl.u32 %v3172, 7
    %v3174 = vsub.s32 1, %v3173
    %v3175 = vrot.slane %v3083, %v3174
    %v3176 = vadd.f32 %v3166, %v3175
    %v3177 = vadd.f32 %v3167, %v3175
    %v3178 = vadd.f32 %v3168, %v3175
    %v3179 = vadd.f32 %v3169, %v3175
    %v3180 = vadd.f32 %v3170, %v3175
    %v3181 = vadd.f32 %v3171, %v3175
    %v3182 = vld [vmem:[%s5 + $0x40] sm:$0xff]
    %v3183 = vld [vmem:[%s5 + $0x50] sm:$0xff]
    %v3184 = vld [vmem:[%s5 + $0x60] sm:$0xff]
    %v3185 = vld [vmem:[%s5 + $0x70] sm:$0xff]
    %v3187 = vsel %vm353, %v3176, 0
    %v3190 = vsel %vm353, %v3177, 0
    %v3193 = vsel %vm353, %v3178, 0
    %v3196 = vsel %vm353, %v3179, 0
    %v3199 = vsel %vm353, %v3180, 0
    %v3202 = vsel %vm353, %v3181, 0
    %3204 = vmatprep.subr.mxu0 0.0
    %3205 = vmatpush1.msra.mxu0 %v3182
    %3206 = vmatprep.subr.mxu0 0.0
    %3207 = vmatpush1.msra.mxu0 %v3183
    %3208 = vmatprep.subr.mxu0 0.0
    %3209 = vmatpush1.msra.mxu0 %v3184
    %3210 = vmatprep.subr.mxu0 0.0
    %3211 = vmatpush1.msra.mxu0 %v3185
    %3212 = vmatprep.subr.mxu0 0.0
    %3213 = vmatpush1.msra.mxu0 0.0
    %3214 = vmatprep.subr.mxu0 0.0
    %3215 = vmatpush1.msra.mxu0 0.0
    %3216 = vmatprep.subr.mxu0 0.0
    %3217 = vmatpush1.msra.mxu0 0.0
    %3218 = vmatprep.subr.mxu0 0.0
    %3219 = vmatpush1.msra.mxu0 0.0
    %3220 = vmatprep.subr.mxu0 0.0
    %3221 = vmatpush1.msra.mxu0 0.0
    %3222 = vmatprep.subr.mxu0 0.0
    %3223 = vmatpush1.msra.mxu0 0.0
    %3224 = vmatprep.subr.mxu0 0.0
    %3225 = vmatpush1.msra.mxu0 0.0
    %3226 = vmatprep.subr.mxu0 0.0
    %3227 = vmatpush1.msra.mxu0 0.0
    %3228 = vmatprep.subr.mxu0 0.0
    %3229 = vmatpush1.msra.mxu0 0.0
    %3230 = vmatprep.subr.mxu0 0.0
    %3231 = vmatpush1.msra.mxu0 0.0
    %3232 = vmatprep.subr.mxu0 0.0
    %3233 = vmatpush1.msra.mxu0 0.0
    %3234 = vmatprep.subr.mxu0 0.0
    %3235 = vmatpush1.msra.mxu0 0.0
    %3236 = vmatprep.subr.mxu0 0.0
    %3237 = vmatpush1.msra.mxu0 0.0
    %3238 = vmatprep.subr.mxu0 0.0
    %3239 = vmatpush1.msra.mxu0 0.0
    %3240 = vmatprep.subr.mxu0 0.0
    %3241 = vmatpush1.msra.mxu0 0.0
    %3242 = vmatprep.subr.mxu0 0.0
    %3243 = vmatpush1.msra.mxu0 0.0
    %3244 = vmatprep.subr.mxu0 0.0
    %3245 = vmatpush1.msra.mxu0 0.0
    %3246 = vmatprep.subr.mxu0 0.0
    %3247 = vmatpush1.msra.mxu0 0.0
    %3248 = vmatprep.subr.mxu0 0.0
    %3249 = vmatpush1.msra.mxu0 0.0
    %3250 = vmatprep.subr.mxu0 0.0
    %3251 = vmatpush1.msra.mxu0 0.0
    %3252 = vmatprep.subr.mxu0 0.0
    %3253 = vmatpush1.msra.mxu0 0.0
    %3254 = vmatprep.subr.mxu0 0.0
    %3255 = vmatpush1.msra.mxu0 0.0
    %3256 = vmatprep.subr.mxu0 0.0
    %3257 = vmatpush1.msra.mxu0 0.0
    %3258 = vmatprep.subr.mxu0 0.0
    %3259 = vmatpush1.msra.mxu0 0.0
    %3260 = vmatprep.subr.mxu0 0.0
    %3261 = vmatpush1.msra.mxu0 0.0
    %3262 = vmatprep.subr.mxu0 0.0
    %3263 = vmatpush1.msra.mxu0 0.0
    %3264 = vmatprep.subr.mxu0 0.0
    %3265 = vmatpush1.msra.mxu0 0.0
    %3266 = vmatprep.subr.mxu0 0.0
    %3267 = vmatpush1.msra.mxu0 0.0
    %3268 = vmatprep.mubr.f32.mxu0 0.0
    %3269 = vmatmul.mubr.f32.gmra.mrb[0].mxu0 %v3187
    %v3270 = vpop.f32.mrb[0].mxu0
    %v3271 = vadd.f32 0.0, %v3270
    %v3272 = vpop.f32.mrb[0].mxu0
    %3273 = vmatprep.mubr.f32.mxu0 0.0
    %3274 = vmatmul.mubr.f32.gmra.mrb[0].mxu0 %v3190
    %v3275 = vpop.f32.mrb[0].mxu0
    %v3276 = vadd.f32 0.0, %v3275
    %v3277 = vpop.f32.mrb[0].mxu0
    %3278 = vmatprep.mubr.f32.mxu0 0.0
    %3279 = vmatmul.mubr.f32.gmra.mrb[0].mxu0 %v3193
    %v3280 = vpop.f32.mrb[0].mxu0
    %v3281 = vadd.f32 0.0, %v3280
    %v3282 = vpop.f32.mrb[0].mxu0
    %3283 = vmatprep.mubr.f32.mxu0 0.0
    %3284 = vmatmul.mubr.f32.gmra.mrb[0].mxu0 %v3196
    %v3285 = vpop.f32.mrb[0].mxu0
    %v3286 = vadd.f32 0.0, %v3285
    %v3287 = vpop.f32.mrb[0].mxu0
    %3288 = vmatprep.mubr.f32.mxu0 0.0
    %3289 = vmatmul.mubr.f32.gmra.mrb[0].mxu0 %v3199
    %v3290 = vpop.f32.mrb[0].mxu0
    %v3291 = vadd.f32 0.0, %v3290
    %v3292 = vpop.f32.mrb[0].mxu0
    %3293 = vmatprep.mubr.f32.mxu0 0.0
    %3294 = vmatmul.mubr.f32.gmra.mrb[0].mxu0 %v3202
    %v3295 = vpop.f32.mrb[0].mxu0
    %v3296 = vadd.f32 0.0, %v3295
    %v3297 = vpop.f32.mrb[0].mxu0
    %3298 = vdwg.mxu0
    %v3299 = vld [vmem:[%s5 + $0x100] sm:$0x7c]
    %v3300 = vld [vmem:[%s5] sm:$0xff]
    %v3301 = vld [vmem:[%s5 + $0x8] sm:$0xff]
    %v3302 = vld [vmem:[%s5 + $0x10] sm:$0xff]
    %v3303 = vld [vmem:[%s5 + $0x18] sm:$0xff]
    %v3304 = vmul.f32 %v3271, %v3271
    %v3305 = vmul.f32 %v3276, %v3276
    %v3306 = vsel %vm353, %v3304, 0.0
    %3307 = vadd.xlane.f32.xlu0 %v3306
    %v3308 = vpop.xlane.xlu0 %3307
    %v3309 = vsel %vm353, %v3305, 0.0
    %3310 = vadd.xlane.f32.xlu0 %v3309
    %v3311 = vpop.xlane.xlu0 %3310
    %v3312 = vrsqrt.pop %v3308
    %v3313 = vrsqrt.pop %v3311
    %v3314 = vmul.f32 %v3271, %v3312
    %v3315 = vmul.f32 %v3276, %v3313
    %v3316 = vmul.f32 %v3281, %v3281
    %3318 = vrot.lane.b32.xlu0 %v3316, 96
    %v3319 = vpop.permute.xlu0 %3318
    %vm3321 = vcmask 258048
    %v3322 = vsel %vm3321, %v3319, 0.0
    %3323 = vadd.xlane.f32.xlu0 %v3322
    %v3324 = vpop.xlane.xlu0 %3323
    %v3325 = vrsqrt.pop %v3324
    %v3326 = vmul.f32 %v3281, %v3325
    %3328 = vrot.lane.b32.xlu0 %v3326, 96
    %v3329 = vpop.permute.xlu0 %3328
    %v3330 = vsel %vm353, %v3329, 0
    %v3333 = vsel %vm353, %v3314, 0
    %v3336 = vsel %vm353, %v3315, 0
    %3338 = vmatprep.subr.mxu0 0.0
    %3339 = vmatpush1.xpose.msra.mxu0 %v3333
    %3340 = vmatprep.subr.mxu0 0.0
    %3341 = vmatpush1.xpose.msra.mxu0 %v3336
    %3342 = vmatprep.subr.mxu0 0.0
    %3343 = vmatpush1.xpose.msra.mxu0 0.0
    %3344 = vmatprep.subr.mxu0 0.0
    %3345 = vmatpush1.xpose.msra.mxu0 0.0
    %3346 = vmatprep.subr.mxu0 0.0
    %3347 = vmatpush1.xpose.msra.mxu0 0.0
    %3348 = vmatprep.subr.mxu0 0.0
    %3349 = vmatpush1.xpose.msra.mxu0 0.0
    %3350 = vmatprep.subr.mxu0 0.0
    %3351 = vmatpush1.xpose.msra.mxu0 0.0
    %3352 = vmatprep.subr.mxu0 0.0
    %3353 = vmatpush1.xpose.msra.mxu0 0.0
    %3354 = vmatprep.subr.mxu0 0.0
    %3355 = vmatpush1.xpose.msra.mxu0 0.0
    %3356 = vmatprep.subr.mxu0 0.0
    %3357 = vmatpush1.xpose.msra.mxu0 0.0
    %3358 = vmatprep.subr.mxu0 0.0
    %3359 = vmatpush1.xpose.msra.mxu0 0.0
    %3360 = vmatprep.subr.mxu0 0.0
    %3361 = vmatpush1.xpose.msra.mxu0 0.0
    %3362 = vmatprep.subr.mxu0 0.0
    %3363 = vmatpush1.xpose.msra.mxu0 0.0
    %3364 = vmatprep.subr.mxu0 0.0
    %3365 = vmatpush1.xpose.msra.mxu0 0.0
    %3366 = vmatprep.subr.mxu0 0.0
    %3367 = vmatpush1.xpose.msra.mxu0 0.0
    %3368 = vmatprep.subr.mxu0 0.0
    %3369 = vmatpush1.xpose.msra.mxu0 0.0
    %3370 = vmatprep.subr.mxu0 0.0
    %3371 = vmatpush1.xpose.msra.mxu0 0.0
    %3372 = vmatprep.subr.mxu0 0.0
    %3373 = vmatpush1.xpose.msra.mxu0 0.0
    %3374 = vmatprep.subr.mxu0 0.0
    %3375 = vmatpush1.xpose.msra.mxu0 0.0
    %3376 = vmatprep.subr.mxu0 0.0
    %3377 = vmatpush1.xpose.msra.mxu0 0.0
    %3378 = vmatprep.subr.mxu0 0.0
    %3379 = vmatpush1.xpose.msra.mxu0 0.0
    %3380 = vmatprep.subr.mxu0 0.0
    %3381 = vmatpush1.xpose.msra.mxu0 0.0
    %3382 = vmatprep.subr.mxu0 0.0
    %3383 = vmatpush1.xpose.msra.mxu0 0.0
    %3384 = vmatprep.subr.mxu0 0.0
    %3385 = vmatpush1.xpose.msra.mxu0 0.0
    %3386 = vmatprep.subr.mxu0 0.0
    %3387 = vmatpush1.xpose.msra.mxu0 0.0
    %3388 = vmatprep.subr.mxu0 0.0
    %3389 = vmatpush1.xpose.msra.mxu0 0.0
    %3390 = vmatprep.subr.mxu0 0.0
    %3391 = vmatpush1.xpose.msra.mxu0 0.0
    %3392 = vmatprep.subr.mxu0 0.0
    %3393 = vmatpush1.xpose.msra.mxu0 0.0
    %3394 = vmatprep.subr.mxu0 0.0
    %3395 = vmatpush1.xpose.msra.mxu0 0.0
    %3396 = vmatprep.subr.mxu0 0.0
    %3397 = vmatpush1.xpose.msra.mxu0 0.0
    %3398 = vmatprep.subr.mxu0 0.0
    %3399 = vmatpush1.xpose.msra.mxu0 0.0
    %3400 = vmatprep.subr.mxu0 0.0
    %3401 = vmatpush1.xpose.msra.mxu0 0.0
    %3402 = vmatprep.mubr.f32.mxu0 0.0
    %3403 = vmatmul.mubr.f32.gmra.mrb[0].mxu0 %v3330
    %v3404 = vpop.f32.mrb[0].mxu0
    %v3405 = vadd.f32 0.0, %v3404
    %v3406 = vpop.f32.mrb[0].mxu0
    %3407 = vdwg.mxu0
    %vm3408 = vcmask 126976
    %v3409 = vsel %vm3408, %v3405, 0.0
    %v3410 = vrot.slane %v3409, 4
    %v3411 = vadd.f32 %v3409, %v3410
    %v3412 = vrot.slane %v3411, 2
    %v3413 = vadd.f32 %v3411, %v3412
    %v3414 = vrot.slane %v3413, 1
    %v3415 = vadd.f32 %v3413, %v3414
    %v3416 = vrcp.pop 5.0
    %v3417 = vmul.f32 %v3415, %v3416
    %v3418 = vsub.f32 %v3405, %v3417
    %v3419 = vmul.f32 %v3418, %v3418
    %v3420 = vsel %vm3408, %v3419, 0.0
    %v3421 = vrot.slane %v3420, 4
    %v3422 = vadd.f32 %v3420, %v3421
    %v3423 = vrot.slane %v3422, 2
    %v3424 = vadd.f32 %v3422, %v3423
    %v3425 = vrot.slane %v3424, 1
    %v3426 = vadd.f32 %v3424, %v3425
    %v3427 = vmul.f32 %v3426, %v3416
    %v3428 = vadd.f32 %v3427, 1e-05
    %v3429 = vrsqrt.pop %v3428
    %v3430 = vmul.f32 %v3418, %v3429
    %3432 = vset.pattern.permute.xlu0 0
    %3433 = vperm.xlu0 %3432, %v3299
    %v3434 = vpop.permute.xlu0 %3433
    %v3435 = vrot.slane %v3434, 2
    %v3437 = vmul.f32 %v3430, %v3435
    %3438 = vset.pattern.permute.xlu0 1
    %3439 = vperm.xlu0 %3438, %v3299
    %v3440 = vpop.permute.xlu0 %3439
    %v3441 = vrot.slane %v3440, 2
    %v3443 = vadd.f32 %v3437, %v3441
    %v3444 = vmul.f32 %v3286, %v3286
    %v3445 = vmul.f32 %v3291, %v3291
    %v3446 = vsel %vm353, %v3444, 0.0
    %3447 = vadd.xlane.f32.xlu0 %v3446
    %v3448 = vpop.xlane.xlu0 %3447
    %v3449 = vsel %vm353, %v3445, 0.0
    %3450 = vadd.xlane.f32.xlu0 %v3449
    %v3451 = vpop.xlane.xlu0 %3450
    %v3452 = vrsqrt.pop %v3448
    %v3453 = vrsqrt.pop %v3451
    %v3454 = vmul.f32 %v3286, %v3452
    %v3455 = vmul.f32 %v3291, %v3453
    %v3456 = vmul.f32 %v3296, %v3296
    %3458 = vrot.lane.b32.xlu0 %v3456, 96
    %v3459 = vpop.permute.xlu0 %3458
    %v3461 = vsel %vm3321, %v3459, 0.0
    %3462 = vadd.xlane.f32.xlu0 %v3461
    %v3463 = vpop.xlane.xlu0 %3462
    %v3464 = vrsqrt.pop %v3463
    %v3465 = vmul.f32 %v3296, %v3464
    %3467 = vrot.lane.b32.xlu0 %v3465, 96
    %v3468 = vpop.permute.xlu0 %3467
    %v3469 = vsel %vm353, %v3468, 0
    %v3472 = vsel %vm353, %v3454, 0
    %v3475 = vsel %vm353, %v3455, 0
    %3477 = vmatprep.subr.mxu0 0.0
    %3478 = vmatpush1.xpose.msra.mxu0 %v3472
    %3479 = vmatprep.subr.mxu0 0.0
    %3480 = vmatpush1.xpose.msra.mxu0 %v3475
    %3481 = vmatprep.subr.mxu0 0.0
    %3482 = vmatpush1.xpose.msra.mxu0 0.0
    %3483 = vmatprep.subr.mxu0 0.0
    %3484 = vmatpush1.xpose.msra.mxu0 0.0
    %3485 = vmatprep.subr.mxu0 0.0
    %3486 = vmatpush1.xpose.msra.mxu0 0.0
    %3487 = vmatprep.subr.mxu0 0.0
    %3488 = vmatpush1.xpose.msra.mxu0 0.0
    %3489 = vmatprep.subr.mxu0 0.0
    %3490 = vmatpush1.xpose.msra.mxu0 0.0
    %3491 = vmatprep.subr.mxu0 0.0
    %3492 = vmatpush1.xpose.msra.mxu0 0.0
    %3493 = vmatprep.subr.mxu0 0.0
    %3494 = vmatpush1.xpose.msra.mxu0 0.0
    %3495 = vmatprep.subr.mxu0 0.0
    %3496 = vmatpush1.xpose.msra.mxu0 0.0
    %3497 = vmatprep.subr.mxu0 0.0
    %3498 = vmatpush1.xpose.msra.mxu0 0.0
    %3499 = vmatprep.subr.mxu0 0.0
    %3500 = vmatpush1.xpose.msra.mxu0 0.0
    %3501 = vmatprep.subr.mxu0 0.0
    %3502 = vmatpush1.xpose.msra.mxu0 0.0
    %3503 = vmatprep.subr.mxu0 0.0
    %3504 = vmatpush1.xpose.msra.mxu0 0.0
    %3505 = vmatprep.subr.mxu0 0.0
    %3506 = vmatpush1.xpose.msra.mxu0 0.0
    %3507 = vmatprep.subr.mxu0 0.0
    %3508 = vmatpush1.xpose.msra.mxu0 0.0
    %3509 = vmatprep.subr.mxu0 0.0
    %3510 = vmatpush1.xpose.msra.mxu0 0.0
    %3511 = vmatprep.subr.mxu0 0.0
    %3512 = vmatpush1.xpose.msra.mxu0 0.0
    %3513 = vmatprep.subr.mxu0 0.0
    %3514 = vmatpush1.xpose.msra.mxu0 0.0
    %3515 = vmatprep.subr.mxu0 0.0
    %3516 = vmatpush1.xpose.msra.mxu0 0.0
    %3517 = vmatprep.subr.mxu0 0.0
    %3518 = vmatpush1.xpose.msra.mxu0 0.0
    %3519 = vmatprep.subr.mxu0 0.0
    %3520 = vmatpush1.xpose.msra.mxu0 0.0
    %3521 = vmatprep.subr.mxu0 0.0
    %3522 = vmatpush1.xpose.msra.mxu0 0.0
    %3523 = vmatprep.subr.mxu0 0.0
    %3524 = vmatpush1.xpose.msra.mxu0 0.0
    %3525 = vmatprep.subr.mxu0 0.0
    %3526 = vmatpush1.xpose.msra.mxu0 0.0
    %3527 = vmatprep.subr.mxu0 0.0
    %3528 = vmatpush1.xpose.msra.mxu0 0.0
    %3529 = vmatprep.subr.mxu0 0.0
    %3530 = vmatpush1.xpose.msra.mxu0 0.0
    %3531 = vmatprep.subr.mxu0 0.0
    %3532 = vmatpush1.xpose.msra.mxu0 0.0
    %3533 = vmatprep.subr.mxu0 0.0
    %3534 = vmatpush1.xpose.msra.mxu0 0.0
    %3535 = vmatprep.subr.mxu0 0.0
    %3536 = vmatpush1.xpose.msra.mxu0 0.0
    %3537 = vmatprep.subr.mxu0 0.0
    %3538 = vmatpush1.xpose.msra.mxu0 0.0
    %3539 = vmatprep.subr.mxu0 0.0
    %3540 = vmatpush1.xpose.msra.mxu0 0.0
    %3541 = vmatprep.mubr.f32.mxu0 0.0
    %3542 = vmatmul.mubr.f32.gmra.mrb[0].mxu0 %v3469
    %v3543 = vpop.f32.mrb[0].mxu0
    %v3544 = vadd.f32 0.0, %v3543
    %v3545 = vpop.f32.mrb[0].mxu0
    %3546 = vdwg.mxu0
    %v3547 = vsel %vm3408, %v3544, 0.0
    %v3548 = vrot.slane %v3547, 4
    %v3549 = vadd.f32 %v3547, %v3548
    %v3550 = vrot.slane %v3549, 2
    %v3551 = vadd.f32 %v3549, %v3550
    %v3552 = vrot.slane %v3551, 1
    %v3553 = vadd.f32 %v3551, %v3552
    %v3554 = vmul.f32 %v3553, %v3416
    %v3555 = vsub.f32 %v3544, %v3554
    %v3556 = vmul.f32 %v3555, %v3555
    %v3557 = vsel %vm3408, %v3556, 0.0
    %v3558 = vrot.slane %v3557, 4
    %v3559 = vadd.f32 %v3557, %v3558
    %v3560 = vrot.slane %v3559, 2
    %v3561 = vadd.f32 %v3559, %v3560
    %v3562 = vrot.slane %v3561, 1
    %v3563 = vadd.f32 %v3561, %v3562
    %v3564 = vmul.f32 %v3563, %v3416
    %v3565 = vadd.f32 %v3564, 1e-05
    %v3566 = vrsqrt.pop %v3565
    %v3567 = vmul.f32 %v3555, %v3566
    %v3568 = vmul.f32 %v3567, %v3435
    %v3569 = vadd.f32 %v3568, %v3441
    %v3571 = vrot.slane %v3569, 3
    %vm3573 = vcmask 1044480
    %v3574 = vsel %vm3573, %v3443, %v3571
    %v3576 = vsel %vm79, %v3574, 0
    %v3578 = vsel %vm79, %v3571, 0
    %3580 = vmatprep.subr.mxu0 %v3301
    %3581 = vmatpush1.msra.mxu0 %v3300
    %3582 = vmatprep.subr.mxu0 %v3303
    %3583 = vmatpush1.msra.mxu0 %v3302
    %3584 = vmatprep.subr.mxu0 0.0
    %3585 = vmatpush1.msra.mxu0 0.0
    %3586 = vmatprep.subr.mxu0 0.0
    %3587 = vmatpush1.msra.mxu0 0.0
    %3588 = vmatprep.subr.mxu0 0.0
    %3589 = vmatpush1.msra.mxu0 0.0
    %3590 = vmatprep.subr.mxu0 0.0
    %3591 = vmatpush1.msra.mxu0 0.0
    %3592 = vmatprep.subr.mxu0 0.0
    %3593 = vmatpush1.msra.mxu0 0.0
    %3594 = vmatprep.subr.mxu0 0.0
    %3595 = vmatpush1.msra.mxu0 0.0
    %3596 = vmatprep.subr.mxu0 0.0
    %3597 = vmatpush1.msra.mxu0 0.0
    %3598 = vmatprep.subr.mxu0 0.0
    %3599 = vmatpush1.msra.mxu0 0.0
    %3600 = vmatprep.subr.mxu0 0.0
    %3601 = vmatpush1.msra.mxu0 0.0
    %3602 = vmatprep.subr.mxu0 0.0
    %3603 = vmatpush1.msra.mxu0 0.0
    %3604 = vmatprep.subr.mxu0 0.0
    %3605 = vmatpush1.msra.mxu0 0.0
    %3606 = vmatprep.subr.mxu0 0.0
    %3607 = vmatpush1.msra.mxu0 0.0
    %3608 = vmatprep.subr.mxu0 0.0
    %3609 = vmatpush1.msra.mxu0 0.0
    %3610 = vmatprep.subr.mxu0 0.0
    %3611 = vmatpush1.msra.mxu0 0.0
    %3612 = vmatprep.subr.mxu0 0.0
    %3613 = vmatpush1.msra.mxu0 0.0
    %3614 = vmatprep.subr.mxu0 0.0
    %3615 = vmatpush1.msra.mxu0 0.0
    %3616 = vmatprep.subr.mxu0 0.0
    %3617 = vmatpush1.msra.mxu0 0.0
    %3618 = vmatprep.subr.mxu0 0.0
    %3619 = vmatpush1.msra.mxu0 0.0
    %3620 = vmatprep.subr.mxu0 0.0
    %3621 = vmatpush1.msra.mxu0 0.0
    %3622 = vmatprep.subr.mxu0 0.0
    %3623 = vmatpush1.msra.mxu0 0.0
    %3624 = vmatprep.subr.mxu0 0.0
    %3625 = vmatpush1.msra.mxu0 0.0
    %3626 = vmatprep.subr.mxu0 0.0
    %3627 = vmatpush1.msra.mxu0 0.0
    %3628 = vmatprep.subr.mxu0 0.0
    %3629 = vmatpush1.msra.mxu0 0.0
    %3630 = vmatprep.subr.mxu0 0.0
    %3631 = vmatpush1.msra.mxu0 0.0
    %3632 = vmatprep.subr.mxu0 0.0
    %3633 = vmatpush1.msra.mxu0 0.0
    %3634 = vmatprep.subr.mxu0 0.0
    %3635 = vmatpush1.msra.mxu0 0.0
    %3636 = vmatprep.subr.mxu0 0.0
    %3637 = vmatpush1.msra.mxu0 0.0
    %3638 = vmatprep.subr.mxu0 0.0
    %3639 = vmatpush1.msra.mxu0 0.0
    %3640 = vmatprep.subr.mxu0 0.0
    %3641 = vmatpush1.msra.mxu0 0.0
    %3642 = vmatprep.subr.mxu0 0.0
    %3643 = vmatpush1.msra.mxu0 0.0
    %3644 = vmatprep.mubr.f32.mxu0 0.0
    %3645 = vmatmul.mubr.f32.gmra.mrb[0].mxu0 %v3576
    %v3646 = vpop.f32.mrb[0].mxu0
    %v3647 = vadd.f32 0.0, %v3646
    %v3648 = vpop.f32.mrb[0].mxu0
    %v3649 = vadd.f32 0.0, %v3648
    %3650 = vmatprep.mubr.f32.mxu0 0.0
    %3651 = vmatmul.mubr.f32.gmra.mrb[0].mxu0 %v3578
    %v3652 = vpop.f32.mrb[0].mxu0
    %v3653 = vadd.f32 0.0, %v3652
    %v3654 = vpop.f32.mrb[0].mxu0
    %v3655 = vadd.f32 0.0, %v3654
    %3656 = vdwg.mxu0
    %3657 = vst [vmem:[#allocation8] sm:$0xff] %v3647
    %3658 = vst [vmem:[#allocation8 + $0x8] sm:$0xff] %v3649
    %3659 = vst [vmem:[#allocation8 + $0x10] sm:$0x3] %v3653
    %3660 = vst [vmem:[#allocation8 + $0x18] sm:$0x3] %v3655
    // Predicated region
    $region38: #{tpu_custom_call.1} parent=1 // pred_check
      _
    $region39: #{tpu_custom_call.1} parent=1 // pred_check_branch
      %3662 = sbr.rel (0) target = $region41
    $region40: #{tpu_custom_call.1} parent=1 // pred_region
      %s3664 = ssub.s32 512, 512
      %3665 = vsyncadd [#allocation4], %s3664
      %s3666 = sshll.u32 [#allocation8], 4
      %s3667 = int_to_ptr.vmem [resolvable:$true] %s3666
      %3672 = dma.vmem_to_hbm [thread:$0]  %s3667, 512, %s6, [#allocation4], 256, 256, 16
    $region41: #{tpu_custom_call.1} parent=1 // pred_fallthru
      _
    // Predicated region
    $region42: #{tpu_custom_call.1} parent=1 // pred_check
      _
    $region43: #{tpu_custom_call.1} parent=1 // pred_check_branch
      %3674 = sbr.rel (0) target = $region45
    $region44: #{tpu_custom_call.1} parent=1 // pred_region
      %3675 = dma.done [#allocation4], 512
    $region45: #{tpu_custom_call.1} parent=1 // pred_fallthru
      _
    %3676 = vsyncpa [#allocation3], 1
    %3677 = vsyncpa [#allocation6], 1
    %3678 = vsyncpa [#allocation4], 1

</llo_original>
